<compile_context>
chip_gen: v5e
topology: v5e:2x2
jax: 0.10.0
libtpu: 0.0.40
codegen_flags: <defaults>
</compile_context>

<pallas_src>
import functools

import jax
import jax.numpy as jnp
from jax.experimental import pallas as pl
from jax.experimental.pallas import tpu as pltpu

# MXU operand dtype.  Accumulation stays f32 (preferred_element_type) and all
# VPU/EUP elementwise gate math stays f32 (v5e has no bf16 VPU/EUP).
MATMUL_DTYPE = jnp.bfloat16


def _pick_tile(n, max_tile):
    """Largest tile <= max_tile that divides n and is a multiple of 8 (else full n)."""
    if n <= max_tile:
        return n
    t = (max_tile // 8) * 8
    while t >= 8:
        if n % t == 0:
            return t
        t -= 8
    return n


# ----------------------------------------------------------------------------
# Row-tiled dense: y = x @ w + b.  Gridded over rows ("parallel" -> megacore),
# weights resident per tile; operands cast to bf16 for the MXU, f32 accumulate.
# ----------------------------------------------------------------------------
def _dense_kernel(x_ref, w_ref, b_ref, o_ref):
    w = w_ref[...]
    y = jnp.dot(x_ref[...].astype(w.dtype), w, preferred_element_type=jnp.float32)
    y = y + b_ref[...].astype(jnp.float32)
    o_ref[...] = y.astype(o_ref.dtype)


def dense(x, w, b, out_dtype=jnp.float32, tm_max=512):
    m, f = x.shape
    n = w.shape[1]
    tm = _pick_tile(m, tm_max)
    return pl.pallas_call(
        _dense_kernel,
        out_shape=jax.ShapeDtypeStruct((m, n), out_dtype),
        grid_spec=pltpu.PrefetchScalarGridSpec(
            num_scalar_prefetch=0,
            grid=(m // tm,),
            in_specs=[
                pl.BlockSpec((tm, f), lambda i: (i, 0)),
                pl.BlockSpec((f, n), lambda i: (0, 0)),
                pl.BlockSpec((1, n), lambda i: (0, 0)),
            ],
            out_specs=pl.BlockSpec((tm, n), lambda i: (i, 0)),
        ),
        compiler_params=pltpu.CompilerParams(dimension_semantics=("parallel",)),
    )(x, w, b)


# ----------------------------------------------------------------------------
# Fused bidirectional GRU.  xp holds the hoisted input projections for both
# directions ([fwd r|z|n | bwd r|z|n] on the lane axis).  The recurrence is an
# in-kernel fori_loop: one block-diagonal (B,2H)@(2H,6H) matmul per step, both
# direction outputs written into one (T, B, 2H) buffer.
# ----------------------------------------------------------------------------
def _bigru_kernel(xp_ref, whh_ref, bhh_ref, out_ref):
    T, Bt, H6 = xp_ref.shape
    H = H6 // 6
    H3 = 3 * H
    whh = whh_ref[...]                                   # (2H, 6H) bf16, block-diagonal
    bhh = bhh_ref[...].astype(jnp.float32)               # (1, 6H)

    def cell(gx, gh, h_prev):
        # PyTorch nn.GRU cell, gate order (r, z, n); b_hh stays inside r*(...) term.
        r = jax.nn.sigmoid(gx[:, 0:H] + gh[:, 0:H])
        z = jax.nn.sigmoid(gx[:, H:2 * H] + gh[:, H:2 * H])
        n = jnp.tanh(gx[:, 2 * H:H3] + r * gh[:, 2 * H:H3])
        return (1.0 - z) * n + z * h_prev

    def step(t, h_cat):
        rev = T - 1 - t
        # ONE MXU matmul per timestep covers both directions (block-diagonal weight).
        gh = jnp.dot(h_cat.astype(whh.dtype), whh,
                     preferred_element_type=jnp.float32) + bhh          # (Bt, 6H)
        gx_f = xp_ref[t][:, 0:H3].astype(jnp.float32)                   # fwd gates of x[t]
        gx_b = xp_ref[rev][:, H3:H6].astype(jnp.float32)                # bwd gates of x[rev]
        h_f = cell(gx_f, gh[:, 0:H3], h_cat[:, 0:H])
        h_b = cell(gx_b, gh[:, H3:H6], h_cat[:, H:2 * H])
        out_ref[t, :, 0:H] = h_f            # forward state at time t
        out_ref[rev, :, H:2 * H] = h_b      # backward state at time rev (consumed x[T-1..rev])
        return jnp.concatenate([h_f, h_b], axis=-1)

    jax.lax.fori_loop(0, T, step, jnp.zeros((Bt, 2 * H), jnp.float32))


def bigru(x, p, bt_max=256):
    """x: (T, B, F) time-major.  Returns (T, B, 2H) = [h_fwd(t) | h_bwd(t)]."""
    T, B, F = x.shape
    H6 = p["whh_cat"].shape[1]
    H = H6 // 6
    # Hoisted input projection for all gates / both directions: one row-tiled matmul.
    xproj = dense(x.reshape(T * B, F), p["wih_cat"], p["bih_cat"],
                  out_dtype=MATMUL_DTYPE).reshape(T, B, H6)
    bt = _pick_tile(B, bt_max)
    return pl.pallas_call(
        _bigru_kernel,
        out_shape=jax.ShapeDtypeStruct((T, B, 2 * H), jnp.float32),
        grid_spec=pltpu.PrefetchScalarGridSpec(
            num_scalar_prefetch=0,
            grid=(B // bt,),
            in_specs=[
                pl.BlockSpec((T, bt, H6), lambda b: (0, b, 0)),
                # Weight/bias block indices never change; on v7x one could add
                # pipeline_mode=pl.Buffered(1) to drop their second buffer.
                pl.BlockSpec((2 * H, H6), lambda b: (0, 0)),
                pl.BlockSpec((1, H6), lambda b: (0, 0)),
            ],
            out_specs=pl.BlockSpec((T, bt, 2 * H), lambda b: (0, b, 0)),
        ),
        compiler_params=pltpu.CompilerParams(dimension_semantics=("parallel",)),
    )(xproj, p["whh_cat"], p["bhh_cat"])


# ----------------------------------------------------------------------------
# HAN attention pooling, fused projection + softmax pool in ONE kernel:
#   u_t = tanh(W h_t + b);  alpha = softmax_t(<u_t, ctx>);  enc = sum_t alpha_t h_t
# Time index is static (Python unroll), batch is the grid axis; outputs are 2-D
# lane-last: enc (B, F), alpha (B, T).
# ----------------------------------------------------------------------------
def _attn_pool_kernel(h_ref, w_ref, b_ref, ctx_ref, enc_ref, alpha_ref):
    T = h_ref.shape[0]
    w = w_ref[...]                                      # (F, F) bf16
    b = b_ref[...].astype(jnp.float32)                  # (1, F)
    ctx = ctx_ref[...]                                  # (1, F)

    cols = []
    for t in range(T):                                  # static unroll over time
        u_t = jnp.tanh(jnp.dot(h_ref[t].astype(w.dtype), w,
                               preferred_element_type=jnp.float32) + b)   # (Bt, F)
        cols.append(jnp.sum(u_t * ctx, axis=-1, keepdims=True))           # (Bt, 1)
    s = jnp.concatenate(cols, axis=1)                                     # (Bt, T)

    m = jnp.max(s, axis=1, keepdims=True)
    e = jnp.exp(s - m)
    alpha = e / jnp.sum(e, axis=1, keepdims=True)                         # (Bt, T)
    alpha_ref[...] = alpha

    enc = alpha[:, 0:1] * h_ref[0]
    for t in range(1, T):
        enc = enc + alpha[:, t:t + 1] * h_ref[t]
    enc_ref[...] = enc                                                    # (Bt, F)


def attention_pool(h, p, bt_max=256):
    """h: (T, B, F) time-major.  Returns enc (B, F), alpha (B, T)."""
    T, B, F = h.shape
    bt = _pick_tile(B, bt_max)
    return pl.pallas_call(
        _attn_pool_kernel,
        out_shape=(
            jax.ShapeDtypeStruct((B, F), jnp.float32),
            jax.ShapeDtypeStruct((B, T), jnp.float32),
        ),
        grid_spec=pltpu.PrefetchScalarGridSpec(
            num_scalar_prefetch=0,
            grid=(B // bt,),
            in_specs=[
                pl.BlockSpec((T, bt, F), lambda b: (0, b, 0)),
                pl.BlockSpec((F, F), lambda b: (0, 0)),
                pl.BlockSpec((1, F), lambda b: (0, 0)),
                pl.BlockSpec((1, F), lambda b: (0, 0)),
            ],
            out_specs=[
                pl.BlockSpec((bt, F), lambda b: (b, 0)),
                pl.BlockSpec((bt, T), lambda b: (b, 0)),
            ],
        ),
        compiler_params=pltpu.CompilerParams(dimension_semantics=("parallel",)),
    )(h, p["w"], p["b"], p["ctx"])


# ----------------------------------------------------------------------------
# Capsule head: squash primary caps -> capsule compression -> per-class capsules
# via 3-iteration dynamic routing.  One grid-less kernel; docs iterated with a
# lax.fori_loop.  The class-pose axis stays flattened on the lane axis (C*E) and
# per-class reductions use the constant 0/1 expansion matrices Re / ReT.
# ----------------------------------------------------------------------------
def _squash(x, eps=1e-8):
    n2 = jnp.sum(x * x, axis=-1, keepdims=True)
    return x * (n2 / (1.0 + n2)) * jax.lax.rsqrt(n2 + eps)


def _caps_kernel(prim_ref, wcomp_ref, wfc_ref, re_ref, ret_ref, act_ref):
    wcomp = wcomp_ref[...]                                    # (K, J)
    wfc = wfc_ref[...]                                        # (K, D, C*E)
    Re = re_ref[...]                                          # (C, C*E)
    ReT = ret_ref[...]                                        # (C*E, C)
    B = prim_ref.shape[0]
    K, C = wcomp.shape[0], Re.shape[0]

    def body(b, carry):
        prim = _squash(prim_ref[b])                                                  # (J, D)
        comp = _squash(jnp.dot(wcomp, prim, preferred_element_type=jnp.float32))     # (K, D)
        # u_hat[k, c*E+e] = sum_d comp[k, d] * W_fc[k, d, c*E+e]: one broadcast
        # multiply + sublane reduce instead of K one-row matmuls.
        u_hat = jnp.sum(comp[:, :, None] * wfc, axis=1)                              # (K, C*E)

        logits = jnp.zeros((K, C), jnp.float32)
        act = jnp.zeros((1, C), jnp.float32)
        for _ in range(3):                                   # dynamic routing
            mx = jnp.max(logits, axis=-1, keepdims=True)
            ex = jnp.exp(logits - mx)
            coef = ex / jnp.sum(ex, axis=-1, keepdims=True)                           # (K, C)
            coef_e = jnp.dot(coef, Re, preferred_element_type=jnp.float32)            # (K, C*E)
            s = jnp.sum(coef_e * u_hat, axis=0, keepdims=True)                        # (1, C*E)
            nrm = jnp.dot(s * s, ReT, preferred_element_type=jnp.float32)             # (1, C) = ||s_c||^2
            scale = (nrm / (1.0 + nrm)) * jax.lax.rsqrt(nrm + 1e-8)
            v = s * jnp.dot(scale, Re, preferred_element_type=jnp.float32)            # squashed poses
            logits = logits + jnp.dot(u_hat * v, ReT, preferred_element_type=jnp.float32)
            act = nrm / (1.0 + nrm)                                                   # ||v_c||
        act_ref[b] = act
        return carry

    jax.lax.fori_loop(0, B, body, 0)


def caps_head(prim, cp):
    """prim: (B, J, D) primary capsules.  Returns class activations (B, C)."""
    B = prim.shape[0]
    C = cp["re"].shape[0]
    acts = pl.pallas_call(
        _caps_kernel,
        out_shape=jax.ShapeDtypeStruct((B, 1, C), jnp.float32),
    )(prim, cp["w_comp"], cp["w_fc"], cp["re"], cp["ret"])
    return acts.reshape(B, C)


# ----------------------------------------------------------------------------
# Full HCapsNet forward (HAN word enc -> HAN sent enc -> CapsNet head).
# ----------------------------------------------------------------------------
def hcapsnet_forward(params, sents, cfg):
    n_doc, n_sents, sen_len = sents.shape
    J, D = cfg["num_caps"], cfg["dim_caps"]

    # --- AttentionWordEncoder.  Token ids go time-major with a SENTENCE-major
    # batch order (b = s*n_doc + d): the id transpose is tiny int32, and it lets
    # every later hand-off stay time-major with zero large-activation transposes.
    ids_tm = jnp.transpose(sents, (2, 1, 0)).reshape(sen_len, n_sents * n_doc)
    emb = jnp.take(params["embed"], ids_tm, axis=0)                    # (L, Bw, E)
    hw = bigru(emb, params["word_gru"])                                # (L, Bw, 2*WH)
    sen_enc, word_alpha = attention_pool(hw, params["word_attn"])      # (Bw, 2WH), (Bw, L)

    # --- AttentionSentEncoder.  The sentence-major batch makes this reshape the
    # time-major input of the sentence GRU directly (no transpose).
    xs = sen_enc.reshape(n_sents, n_doc, -1)
    hs = bigru(xs, params["sent_gru"])                                 # (n_sents, n_doc, 2*SH)
    doc_enc, sent_attn = attention_pool(hs, params["sent_attn"])       # (n_doc, 2SH), (n_doc, n_sents)

    # --- CapsNet_Text head.  doc_encoding.unsqueeze(2) has spatial extent 1, so
    # the primary-capsule conv is a plain linear map.
    caps = params["caps"]
    prim = dense(doc_enc, caps["w_prim"], caps["b_prim"]).reshape(n_doc, J, D)
    activations = caps_head(prim, caps)                                # (n_doc, C)

    # Present word attention in the PyTorch sents.view(-1, sen_len) row order.
    word_attn = jnp.transpose(
        word_alpha.reshape(n_sents, n_doc, sen_len), (1, 0, 2)
    ).reshape(n_doc * n_sents, sen_len)

    return activations, word_attn, sent_attn, 0


# ----------------------------------------------------------------------------
# Deterministic synthetic parameter init (shapes implied by the module),
# pre-packed into the fused layouts the kernels expect.
# ----------------------------------------------------------------------------
def init_params(key, cfg):
    keys = iter(jax.random.split(key, 32))

    def nrm(shape, scale=0.1):
        return jax.random.normal(next(keys), shape, jnp.float32) * scale

    def gru_p(din, h):
        # Per-direction fused gate layout [W_r | W_z | W_n] (PyTorch ordering).
        # NOTE: real checkpoints store weight_ih/hh as (3H, in); transpose + keep
        # the (r,z,n) order and the b_hh split when loading them.
        wih_f, wih_b = nrm((din, 3 * h)), nrm((din, 3 * h))
        whh_f, whh_b = nrm((h, 3 * h)), nrm((h, 3 * h))
        wih_cat = jnp.concatenate([wih_f, wih_b], axis=1)               # (F, 6H)
        whh_cat = jnp.zeros((2 * h, 6 * h), jnp.float32)                # block-diag (2H, 6H)
        whh_cat = whh_cat.at[0:h, 0:3 * h].set(whh_f)
        whh_cat = whh_cat.at[h:, 3 * h:].set(whh_b)
        return dict(
            wih_cat=wih_cat.astype(MATMUL_DTYPE),
            bih_cat=jnp.zeros((1, 6 * h), jnp.float32),
            whh_cat=whh_cat.astype(MATMUL_DTYPE),
            bhh_cat=jnp.zeros((1, 6 * h), jnp.float32),
        )

    def attn_p(d):
        return dict(
            w=nrm((d, d)).astype(MATMUL_DTYPE),
            b=jnp.zeros((1, d), jnp.float32),
            ctx=nrm((1, d)),
        )

    E, WH, SH = cfg["embed_size"], cfg["word_hidden"], cfg["sent_hidden"]
    word_out, sent_out = 2 * WH, 2 * SH                  # bidirectional encoders
    J, K = cfg["num_caps"], cfg["num_compressed_caps"]
    C, D = cfg["num_classes"], cfg["dim_caps"]
    re = jnp.repeat(jnp.eye(C, dtype=jnp.float32), D, axis=1)           # (C, C*D)

    return dict(
        embed=nrm((cfg["num_tokens"], E), 1.0),
        word_gru=gru_p(E, WH),
        word_attn=attn_p(word_out),
        sent_gru=gru_p(word_out, SH),
        sent_attn=attn_p(sent_out),
        caps=dict(
            w_prim=nrm((sent_out, J * D)).astype(MATMUL_DTYPE),
            b_prim=jnp.zeros((1, J * D), jnp.float32),
            w_comp=nrm((K, J)),
            w_fc=nrm((K, D, C * D)),
            re=re,
            ret=re.T,
        ),
    )


if __name__ == "__main__":
    # Small, lane-friendly config: 2H = 128, 6H = 384, attention width 128, J*D = 128.
    cfg = dict(
        num_tokens=50, embed_size=128, word_hidden=64, sent_hidden=64,
        num_classes=8, dim_caps=16, num_caps=8, num_compressed_caps=16,
    )
    key = jax.random.PRNGKey(0)
    pkey, dkey = jax.random.split(key)
    params = init_params(pkey, cfg)
    # documents: n_doc=2, n_sents=4, sen_len=8, int token ids
    sents = jax.random.randint(dkey, (2, 4, 8), 0, cfg["num_tokens"], dtype=jnp.int32)

    fwd = jax.jit(functools.partial(hcapsnet_forward, cfg=cfg))
    acts, word_attn, sent_attn, rec_loss = fwd(params, sents)
    jax.block_until_ready((acts, word_attn, sent_attn))

    assert acts.shape == (2, cfg["num_classes"])
    assert word_attn.shape == (2 * 4, 8)
    assert sent_attn.shape == (2, 4)
    assert bool(jnp.all(jnp.isfinite(acts)))
    assert bool(jnp.all(jnp.isfinite(word_attn)))
    assert bool(jnp.all(jnp.isfinite(sent_attn)))
    assert rec_loss == 0
    print("KERNEL_OK")
</pallas_src>

<mosaic_0001>
module attributes {stable_mosaic.version = 11 : i64} {
  func.func @_dense_kernel(%arg0: i32, %arg1: memref<8x128xf32, #tpu.memory_space<vmem>>, %arg2: memref<128x384xbf16, #tpu.memory_space<vmem>>, %arg3: memref<1x384xf32, #tpu.memory_space<vmem>>, %arg4: memref<8x384xbf16, #tpu.memory_space<vmem>>) attributes {dimension_semantics = [#tpu.dimension_semantics<parallel>], iteration_bounds = array<i64: 1>, scalar_prefetch = 0 : i64, scratch_operands = 0 : i64, tpu.core_type = #tpu.core_type<tc>, window_params = [{transform_indices = @transform_0, window_bounds = array<i64: 8, 128>}, {pipeline_mode = #tpu.pipeline_mode<synchronous>, transform_indices = @transform_1, window_bounds = array<i64: 128, 384>}, {pipeline_mode = #tpu.pipeline_mode<synchronous>, transform_indices = @transform_2, window_bounds = array<i64: 1, 384>}, {transform_indices = @transform_3, window_bounds = array<i64: 8, 384>}]} {
    %c0 = arith.constant 0 : index
    %c0_0 = arith.constant 0 : index
    %0 = vector.load %arg2[%c0, %c0_0] : memref<128x384xbf16, #tpu.memory_space<vmem>>, vector<128x384xbf16>
    %c0_1 = arith.constant 0 : index
    %c0_2 = arith.constant 0 : index
    %1 = vector.load %arg1[%c0_1, %c0_2] : memref<8x128xf32, #tpu.memory_space<vmem>>, vector<8x128xf32>
    %2 = arith.truncf %1 : vector<8x128xf32> to vector<8x128xbf16>
    %cst = arith.constant dense<0.000000e+00> : vector<8x384xf32>
    %3 = tpu.matmul %2, %0, %cst {dimension_numbers = #tpu.dot_dimension_numbers<[1], [0], [0], [1], [0, 0, 1, 1], [], []>} : vector<8x128xbf16>, vector<128x384xbf16>, vector<8x384xf32> -> vector<8x384xf32>
    %c0_3 = arith.constant 0 : index
    %c0_4 = arith.constant 0 : index
    %4 = vector.load %arg3[%c0_3, %c0_4] : memref<1x384xf32, #tpu.memory_space<vmem>>, vector<1x384xf32>
    %5 = vector.broadcast %4 : vector<1x384xf32> to vector<8x384xf32>
    %6 = arith.addf %3, %5 : vector<8x384xf32>
    %7 = arith.truncf %6 : vector<8x384xf32> to vector<8x384xbf16>
    %c0_5 = arith.constant 0 : index
    %c0_6 = arith.constant 0 : index
    %8 = vector.load %arg4[%c0_5, %c0_6] : memref<8x384xbf16, #tpu.memory_space<vmem>>, vector<8x384xbf16>
    tpu.vector_store %arg4[%c0_5, %c0_6], %7 {strides = array<i32>} : memref<8x384xbf16, #tpu.memory_space<vmem>>, vector<8x384xbf16>,
    return
  }
  func.func @transform_0(%arg0: i32) -> (i32, i32) {
    %c0_i32 = arith.constant 0 : i32
    %c0_i32_0 = arith.constant 0 : i32
    return %arg0, %c0_i32 : i32, i32
  }
  func.func @transform_1(%arg0: i32) -> (i32, i32) {
    %c0_i32 = arith.constant 0 : i32
    %c0_i32_0 = arith.constant 0 : i32
    %c0_i32_1 = arith.constant 0 : i32
    return %c0_i32, %c0_i32_0 : i32, i32
  }
  func.func @transform_2(%arg0: i32) -> (i32, i32) {
    %c0_i32 = arith.constant 0 : i32
    %c0_i32_0 = arith.constant 0 : i32
    %c0_i32_1 = arith.constant 0 : i32
    return %c0_i32, %c0_i32_0 : i32, i32
  }
  func.func @transform_3(%arg0: i32) -> (i32, i32) {
    %c0_i32 = arith.constant 0 : i32
    %c0_i32_0 = arith.constant 0 : i32
    return %arg0, %c0_i32 : i32, i32
  }
}

module attributes {stable_mosaic.version = 11 : i64} {
  func.func @_dense_kernel(%arg0: i32, %arg1: memref<64x128xf32, #tpu.memory_space<vmem>>, %arg2: memref<128x384xbf16, #tpu.memory_space<vmem>>, %arg3: memref<1x384xf32, #tpu.memory_space<vmem>>, %arg4: memref<64x384xbf16, #tpu.memory_space<vmem>>) attributes {dimension_semantics = [#tpu.dimension_semantics<parallel>], iteration_bounds = array<i64: 1>, scalar_prefetch = 0 : i64, scratch_operands = 0 : i64, tpu.core_type = #tpu.core_type<tc>, window_params = [{transform_indices = @transform_0, window_bounds = array<i64: 64, 128>}, {pipeline_mode = #tpu.pipeline_mode<synchronous>, transform_indices = @transform_1, window_bounds = array<i64: 128, 384>}, {pipeline_mode = #tpu.pipeline_mode<synchronous>, transform_indices = @transform_2, window_bounds = array<i64: 1, 384>}, {transform_indices = @transform_3, window_bounds = array<i64: 64, 384>}]} {
    %c0 = arith.constant 0 : index
    %c0_0 = arith.constant 0 : index
    %0 = vector.load %arg2[%c0, %c0_0] : memref<128x384xbf16, #tpu.memory_space<vmem>>, vector<128x384xbf16>
    %c0_1 = arith.constant 0 : index
    %c0_2 = arith.constant 0 : index
    %1 = vector.load %arg1[%c0_1, %c0_2] : memref<64x128xf32, #tpu.memory_space<vmem>>, vector<64x128xf32>
    %2 = arith.truncf %1 : vector<64x128xf32> to vector<64x128xbf16>
    %cst = arith.constant dense<0.000000e+00> : vector<64x384xf32>
    %3 = tpu.matmul %2, %0, %cst {dimension_numbers = #tpu.dot_dimension_numbers<[1], [0], [0], [1], [0, 0, 1, 1], [], []>} : vector<64x128xbf16>, vector<128x384xbf16>, vector<64x384xf32> -> vector<64x384xf32>
    %c0_3 = arith.constant 0 : index
    %c0_4 = arith.constant 0 : index
    %4 = vector.load %arg3[%c0_3, %c0_4] : memref<1x384xf32, #tpu.memory_space<vmem>>, vector<1x384xf32>
    %5 = vector.broadcast %4 : vector<1x384xf32> to vector<64x384xf32>
    %6 = arith.addf %3, %5 : vector<64x384xf32>
    %7 = arith.truncf %6 : vector<64x384xf32> to vector<64x384xbf16>
    %c0_5 = arith.constant 0 : index
    %c0_6 = arith.constant 0 : index
    %8 = vector.load %arg4[%c0_5, %c0_6] : memref<64x384xbf16, #tpu.memory_space<vmem>>, vector<64x384xbf16>
    tpu.vector_store %arg4[%c0_5, %c0_6], %7 {strides = array<i32>} : memref<64x384xbf16, #tpu.memory_space<vmem>>, vector<64x384xbf16>,
    return
  }
  func.func @transform_0(%arg0: i32) -> (i32, i32) {
    %c0_i32 = arith.constant 0 : i32
    %c0_i32_0 = arith.constant 0 : i32
    return %arg0, %c0_i32 : i32, i32
  }
  func.func @transform_1(%arg0: i32) -> (i32, i32) {
    %c0_i32 = arith.constant 0 : i32
    %c0_i32_0 = arith.constant 0 : i32
    %c0_i32_1 = arith.constant 0 : i32
    return %c0_i32, %c0_i32_0 : i32, i32
  }
  func.func @transform_2(%arg0: i32) -> (i32, i32) {
    %c0_i32 = arith.constant 0 : i32
    %c0_i32_0 = arith.constant 0 : i32
    %c0_i32_1 = arith.constant 0 : i32
    return %c0_i32, %c0_i32_0 : i32, i32
  }
  func.func @transform_3(%arg0: i32) -> (i32, i32) {
    %c0_i32 = arith.constant 0 : i32
    %c0_i32_0 = arith.constant 0 : i32
    return %arg0, %c0_i32 : i32, i32
  }
}

module attributes {stable_mosaic.version = 11 : i64} {
  func.func @_bigru_kernel(%arg0: i32, %arg1: memref<8x8x384xbf16, #tpu.memory_space<vmem>>, %arg2: memref<128x384xbf16, #tpu.memory_space<vmem>>, %arg3: memref<1x384xf32, #tpu.memory_space<vmem>>, %arg4: memref<8x8x128xf32, #tpu.memory_space<vmem>>) attributes {dimension_semantics = [#tpu.dimension_semantics<parallel>], iteration_bounds = array<i64: 1>, scalar_prefetch = 0 : i64, scratch_operands = 0 : i64, tpu.core_type = #tpu.core_type<tc>, window_params = [{transform_indices = @transform_0, window_bounds = array<i64: 8, 8, 384>}, {pipeline_mode = #tpu.pipeline_mode<synchronous>, transform_indices = @transform_1, window_bounds = array<i64: 128, 384>}, {pipeline_mode = #tpu.pipeline_mode<synchronous>, transform_indices = @transform_2, window_bounds = array<i64: 1, 384>}, {transform_indices = @transform_3, window_bounds = array<i64: 8, 8, 128>}]} {
    %c0 = arith.constant 0 : index
    %c0_0 = arith.constant 0 : index
    %0 = vector.load %arg2[%c0, %c0_0] : memref<128x384xbf16, #tpu.memory_space<vmem>>, vector<128x384xbf16>
    %c0_1 = arith.constant 0 : index
    %c0_2 = arith.constant 0 : index
    %1 = vector.load %arg3[%c0_1, %c0_2] : memref<1x384xf32, #tpu.memory_space<vmem>>, vector<1x384xf32>
    %cst = arith.constant 0.000000e+00 : f32
    %2 = vector.broadcast %cst : f32 to vector<8x128xf32>
    %c0_i32 = arith.constant 0 : i32
    %c8_i32 = arith.constant 8 : i32
    %3 = arith.addi %c0_i32, %c8_i32 : i32
    %c1_i32 = arith.constant 1 : i32
    %4 = scf.for %arg5 = %c0_i32 to %3 step %c1_i32 iter_args(%arg6 = %2) -> (vector<8x128xf32>)  : i32 {
      %c7_i32 = arith.constant 7 : i32
      %5 = arith.subi %c7_i32, %arg5 : i32
      %6 = arith.truncf %arg6 : vector<8x128xf32> to vector<8x128xbf16>
      %cst_4 = arith.constant dense<0.000000e+00> : vector<8x384xf32>
      %7 = tpu.matmul %6, %0, %cst_4 {dimension_numbers = #tpu.dot_dimension_numbers<[1], [0], [0], [1], [0, 0, 1, 1], [], []>} : vector<8x128xbf16>, vector<128x384xbf16>, vector<8x384xf32> -> vector<8x384xf32>
      %8 = vector.broadcast %1 : vector<1x384xf32> to vector<8x384xf32>
      %9 = arith.addf %7, %8 : vector<8x384xf32>
      %10 = arith.index_cast %arg5 : i32 to index
      %c0_5 = arith.constant 0 : index
      %c0_6 = arith.constant 0 : index
      %11 = vector.load %arg1[%10, %c0_5, %c0_6] : memref<8x8x384xbf16, #tpu.memory_space<vmem>>, vector<1x8x384xbf16>
      %12 = vector.shape_cast %11 : vector<1x8x384xbf16> to vector<8x384xbf16>
      %13 = vector.extract_strided_slice %12 {offsets = [0, 0], sizes = [8, 192], strides = [1, 1]} : vector<8x384xbf16> to vector<8x192xbf16>
      %14 = arith.extf %13 : vector<8x192xbf16> to vector<8x192xf32>
      %15 = arith.index_cast %5 : i32 to index
      %c0_7 = arith.constant 0 : index
      %c0_8 = arith.constant 0 : index
      %16 = vector.load %arg1[%15, %c0_7, %c0_8] : memref<8x8x384xbf16, #tpu.memory_space<vmem>>, vector<1x8x384xbf16>
      %17 = vector.shape_cast %16 : vector<1x8x384xbf16> to vector<8x384xbf16>
      %18 = vector.extract_strided_slice %17 {offsets = [0, 192], sizes = [8, 192], strides = [1, 1]} : vector<8x384xbf16> to vector<8x192xbf16>
      %19 = arith.extf %18 : vector<8x192xbf16> to vector<8x192xf32>
      %20 = vector.extract_strided_slice %9 {offsets = [0, 0], sizes = [8, 192], strides = [1, 1]} : vector<8x384xf32> to vector<8x192xf32>
      %21 = vector.extract_strided_slice %arg6 {offsets = [0, 0], sizes = [8, 64], strides = [1, 1]} : vector<8x128xf32> to vector<8x64xf32>
      %22 = vector.extract_strided_slice %14 {offsets = [0, 0], sizes = [8, 64], strides = [1, 1]} : vector<8x192xf32> to vector<8x64xf32>
      %23 = vector.extract_strided_slice %20 {offsets = [0, 0], sizes = [8, 64], strides = [1, 1]} : vector<8x192xf32> to vector<8x64xf32>
      %24 = arith.addf %22, %23 : vector<8x64xf32>
      %25 = arith.negf %24 : vector<8x64xf32>
      %26 = math.exp %25 : vector<8x64xf32>
      %cst_9 = arith.constant 1.000000e+00 : f32
      %27 = vector.broadcast %cst_9 : f32 to vector<8x64xf32>
      %28 = arith.addf %27, %26 : vector<8x64xf32>
      %29 = arith.divf %27, %28 : vector<8x64xf32>
      %30 = vector.extract_strided_slice %14 {offsets = [0, 64], sizes = [8, 64], strides = [1, 1]} : vector<8x192xf32> to vector<8x64xf32>
      %31 = vector.extract_strided_slice %20 {offsets = [0, 64], sizes = [8, 64], strides = [1, 1]} : vector<8x192xf32> to vector<8x64xf32>
      %32 = arith.addf %30, %31 : vector<8x64xf32>
      %33 = arith.negf %32 : vector<8x64xf32>
      %34 = math.exp %33 : vector<8x64xf32>
      %cst_10 = arith.constant 1.000000e+00 : f32
      %35 = vector.broadcast %cst_10 : f32 to vector<8x64xf32>
      %36 = arith.addf %35, %34 : vector<8x64xf32>
      %37 = arith.divf %35, %36 : vector<8x64xf32>
      %38 = vector.extract_strided_slice %14 {offsets = [0, 128], sizes = [8, 64], strides = [1, 1]} : vector<8x192xf32> to vector<8x64xf32>
      %39 = vector.extract_strided_slice %20 {offsets = [0, 128], sizes = [8, 64], strides = [1, 1]} : vector<8x192xf32> to vector<8x64xf32>
      %40 = arith.mulf %29, %39 : vector<8x64xf32>
      %41 = arith.addf %38, %40 : vector<8x64xf32>
      %42 = math.tanh %41 : vector<8x64xf32>
      %cst_11 = arith.constant 1.000000e+00 : f32
      %43 = vector.broadcast %cst_11 : f32 to vector<8x64xf32>
      %44 = arith.subf %43, %37 : vector<8x64xf32>
      %45 = arith.mulf %44, %42 : vector<8x64xf32>
      %46 = arith.mulf %37, %21 : vector<8x64xf32>
      %47 = arith.addf %45, %46 : vector<8x64xf32>
      %48 = vector.extract_strided_slice %9 {offsets = [0, 192], sizes = [8, 192], strides = [1, 1]} : vector<8x384xf32> to vector<8x192xf32>
      %49 = vector.extract_strided_slice %arg6 {offsets = [0, 64], sizes = [8, 64], strides = [1, 1]} : vector<8x128xf32> to vector<8x64xf32>
      %50 = vector.extract_strided_slice %19 {offsets = [0, 0], sizes = [8, 64], strides = [1, 1]} : vector<8x192xf32> to vector<8x64xf32>
      %51 = vector.extract_strided_slice %48 {offsets = [0, 0], sizes = [8, 64], strides = [1, 1]} : vector<8x192xf32> to vector<8x64xf32>
      %52 = arith.addf %50, %51 : vector<8x64xf32>
      %53 = arith.negf %52 : vector<8x64xf32>
      %54 = math.exp %53 : vector<8x64xf32>
      %cst_12 = arith.constant 1.000000e+00 : f32
      %55 = vector.broadcast %cst_12 : f32 to vector<8x64xf32>
      %56 = arith.addf %55, %54 : vector<8x64xf32>
      %57 = arith.divf %55, %56 : vector<8x64xf32>
      %58 = vector.extract_strided_slice %19 {offsets = [0, 64], sizes = [8, 64], strides = [1, 1]} : vector<8x192xf32> to vector<8x64xf32>
      %59 = vector.extract_strided_slice %48 {offsets = [0, 64], sizes = [8, 64], strides = [1, 1]} : vector<8x192xf32> to vector<8x64xf32>
      %60 = arith.addf %58, %59 : vector<8x64xf32>
      %61 = arith.negf %60 : vector<8x64xf32>
      %62 = math.exp %61 : vector<8x64xf32>
      %cst_13 = arith.constant 1.000000e+00 : f32
      %63 = vector.broadcast %cst_13 : f32 to vector<8x64xf32>
      %64 = arith.addf %63, %62 : vector<8x64xf32>
      %65 = arith.divf %63, %64 : vector<8x64xf32>
      %66 = vector.extract_strided_slice %19 {offsets = [0, 128], sizes = [8, 64], strides = [1, 1]} : vector<8x192xf32> to vector<8x64xf32>
      %67 = vector.extract_strided_slice %48 {offsets = [0, 128], sizes = [8, 64], strides = [1, 1]} : vector<8x192xf32> to vector<8x64xf32>
      %68 = arith.mulf %57, %67 : vector<8x64xf32>
      %69 = arith.addf %66, %68 : vector<8x64xf32>
      %70 = math.tanh %69 : vector<8x64xf32>
      %cst_14 = arith.constant 1.000000e+00 : f32
      %71 = vector.broadcast %cst_14 : f32 to vector<8x64xf32>
      %72 = arith.subf %71, %65 : vector<8x64xf32>
      %73 = arith.mulf %72, %70 : vector<8x64xf32>
      %74 = arith.mulf %65, %49 : vector<8x64xf32>
      %75 = arith.addf %73, %74 : vector<8x64xf32>
      %76 = arith.index_cast %arg5 : i32 to index
      %c0_15 = arith.constant 0 : index
      %c0_16 = arith.constant 0 : index
      %77 = vector.load %arg4[%76, %c0_15, %c0_16] : memref<8x8x128xf32, #tpu.memory_space<vmem>>, vector<1x8x64xf32>
      %78 = vector.shape_cast %77 : vector<1x8x64xf32> to vector<8x64xf32>
      %79 = vector.shape_cast %47 : vector<8x64xf32> to vector<1x8x64xf32>
      tpu.vector_store %arg4[%76, %c0_15, %c0_16], %79 {strides = array<i32>} : memref<8x8x128xf32, #tpu.memory_space<vmem>>, vector<1x8x64xf32>,
      %80 = arith.index_cast %5 : i32 to index
      %c0_17 = arith.constant 0 : index
      %c64 = arith.constant 64 : index
      %81 = vector.load %arg4[%80, %c0_17, %c64] : memref<8x8x128xf32, #tpu.memory_space<vmem>>, vector<1x8x64xf32>
      %82 = vector.shape_cast %81 : vector<1x8x64xf32> to vector<8x64xf32>
      %83 = vector.shape_cast %75 : vector<8x64xf32> to vector<1x8x64xf32>
      tpu.vector_store %arg4[%80, %c0_17, %c64], %83 {strides = array<i32>} : memref<8x8x128xf32, #tpu.memory_space<vmem>>, vector<1x8x64xf32>,
      %84 = tpu.concatenate %47, %75 in 1 : vector<8x64xf32>, vector<8x64xf32> -> vector<8x128xf32>
      scf.yield %84 : vector<8x128xf32>
    }
    %c8_i32_3 = arith.constant 8 : i32
    return
  }
  func.func @transform_0(%arg0: i32) -> (i32, i32, i32) {
    %c0_i32 = arith.constant 0 : i32
    %c0_i32_0 = arith.constant 0 : i32
    %c0_i32_1 = arith.constant 0 : i32
    return %c0_i32, %arg0, %c0_i32_0 : i32, i32, i32
  }
  func.func @transform_1(%arg0: i32) -> (i32, i32) {
    %c0_i32 = arith.constant 0 : i32
    %c0_i32_0 = arith.constant 0 : i32
    %c0_i32_1 = arith.constant 0 : i32
    return %c0_i32, %c0_i32_0 : i32, i32
  }
  func.func @transform_2(%arg0: i32) -> (i32, i32) {
    %c0_i32 = arith.constant 0 : i32
    %c0_i32_0 = arith.constant 0 : i32
    %c0_i32_1 = arith.constant 0 : i32
    return %c0_i32, %c0_i32_0 : i32, i32
  }
  func.func @transform_3(%arg0: i32) -> (i32, i32, i32) {
    %c0_i32 = arith.constant 0 : i32
    %c0_i32_0 = arith.constant 0 : i32
    %c0_i32_1 = arith.constant 0 : i32
    return %c0_i32, %arg0, %c0_i32_0 : i32, i32, i32
  }
}

module attributes {stable_mosaic.version = 11 : i64} {
  func.func @_attn_pool_kernel(%arg0: i32, %arg1: memref<8x8x128xf32, #tpu.memory_space<vmem>>, %arg2: memref<128x128xbf16, #tpu.memory_space<vmem>>, %arg3: memref<1x128xf32, #tpu.memory_space<vmem>>, %arg4: memref<1x128xf32, #tpu.memory_space<vmem>>, %arg5: memref<8x128xf32, #tpu.memory_space<vmem>>, %arg6: memref<8x8xf32, #tpu.memory_space<vmem>>) attributes {dimension_semantics = [#tpu.dimension_semantics<parallel>], iteration_bounds = array<i64: 1>, scalar_prefetch = 0 : i64, scratch_operands = 0 : i64, tpu.core_type = #tpu.core_type<tc>, window_params = [{transform_indices = @transform_0, window_bounds = array<i64: 8, 8, 128>}, {pipeline_mode = #tpu.pipeline_mode<synchronous>, transform_indices = @transform_1, window_bounds = array<i64: 128, 128>}, {pipeline_mode = #tpu.pipeline_mode<synchronous>, transform_indices = @transform_2, window_bounds = array<i64: 1, 128>}, {pipeline_mode = #tpu.pipeline_mode<synchronous>, transform_indices = @transform_3, window_bounds = array<i64: 1, 128>}, {transform_indices = @transform_4, window_bounds = array<i64: 8, 128>}, {transform_indices = @transform_5, window_bounds = array<i64: 8, 8>}]} {
    %c0 = arith.constant 0 : index
    %c0_0 = arith.constant 0 : index
    %0 = vector.load %arg2[%c0, %c0_0] : memref<128x128xbf16, #tpu.memory_space<vmem>>, vector<128x128xbf16>
    %c0_1 = arith.constant 0 : index
    %c0_2 = arith.constant 0 : index
    %1 = vector.load %arg3[%c0_1, %c0_2] : memref<1x128xf32, #tpu.memory_space<vmem>>, vector<1x128xf32>
    %c0_3 = arith.constant 0 : index
    %c0_4 = arith.constant 0 : index
    %2 = vector.load %arg4[%c0_3, %c0_4] : memref<1x128xf32, #tpu.memory_space<vmem>>, vector<1x128xf32>
    %c0_5 = arith.constant 0 : index
    %c0_6 = arith.constant 0 : index
    %c0_7 = arith.constant 0 : index
    %3 = vector.load %arg1[%c0_5, %c0_6, %c0_7] : memref<8x8x128xf32, #tpu.memory_space<vmem>>, vector<1x8x128xf32>
    %4 = vector.shape_cast %3 : vector<1x8x128xf32> to vector<8x128xf32>
    %5 = arith.truncf %4 : vector<8x128xf32> to vector<8x128xbf16>
    %cst = arith.constant dense<0.000000e+00> : vector<8x128xf32>
    %6 = tpu.matmul %5, %0, %cst {dimension_numbers = #tpu.dot_dimension_numbers<[1], [0], [0], [1], [0, 0, 1, 1], [], []>} : vector<8x128xbf16>, vector<128x128xbf16>, vector<8x128xf32> -> vector<8x128xf32>
    %7 = vector.broadcast %1 : vector<1x128xf32> to vector<8x128xf32>
    %8 = arith.addf %6, %7 : vector<8x128xf32>
    %9 = math.tanh %8 : vector<8x128xf32>
    %10 = vector.broadcast %2 : vector<1x128xf32> to vector<8x128xf32>
    %11 = arith.mulf %9, %10 : vector<8x128xf32>
    %cst_8 = arith.constant dense<0.000000e+00> : vector<8xf32>
    %12 = vector.multi_reduction <add>, %11, %cst_8 [1] : vector<8x128xf32> to vector<8xf32>
    %13 = vector.shape_cast %12 : vector<8xf32> to vector<8x1xf32>
    %c1 = arith.constant 1 : index
    %c0_9 = arith.constant 0 : index
    %c0_10 = arith.constant 0 : index
    %14 = vector.load %arg1[%c1, %c0_9, %c0_10] : memref<8x8x128xf32, #tpu.memory_space<vmem>>, vector<1x8x128xf32>
    %15 = vector.shape_cast %14 : vector<1x8x128xf32> to vector<8x128xf32>
    %16 = arith.truncf %15 : vector<8x128xf32> to vector<8x128xbf16>
    %cst_11 = arith.constant dense<0.000000e+00> : vector<8x128xf32>
    %17 = tpu.matmul %16, %0, %cst_11 {dimension_numbers = #tpu.dot_dimension_numbers<[1], [0], [0], [1], [0, 0, 1, 1], [], []>} : vector<8x128xbf16>, vector<128x128xbf16>, vector<8x128xf32> -> vector<8x128xf32>
    %18 = vector.broadcast %1 : vector<1x128xf32> to vector<8x128xf32>
    %19 = arith.addf %17, %18 : vector<8x128xf32>
    %20 = math.tanh %19 : vector<8x128xf32>
    %21 = vector.broadcast %2 : vector<1x128xf32> to vector<8x128xf32>
    %22 = arith.mulf %20, %21 : vector<8x128xf32>
    %cst_12 = arith.constant dense<0.000000e+00> : vector<8xf32>
    %23 = vector.multi_reduction <add>, %22, %cst_12 [1] : vector<8x128xf32> to vector<8xf32>
    %24 = vector.shape_cast %23 : vector<8xf32> to vector<8x1xf32>
    %c2 = arith.constant 2 : index
    %c0_13 = arith.constant 0 : index
    %c0_14 = arith.constant 0 : index
    %25 = vector.load %arg1[%c2, %c0_13, %c0_14] : memref<8x8x128xf32, #tpu.memory_space<vmem>>, vector<1x8x128xf32>
    %26 = vector.shape_cast %25 : vector<1x8x128xf32> to vector<8x128xf32>
    %27 = arith.truncf %26 : vector<8x128xf32> to vector<8x128xbf16>
    %cst_15 = arith.constant dense<0.000000e+00> : vector<8x128xf32>
    %28 = tpu.matmul %27, %0, %cst_15 {dimension_numbers = #tpu.dot_dimension_numbers<[1], [0], [0], [1], [0, 0, 1, 1], [], []>} : vector<8x128xbf16>, vector<128x128xbf16>, vector<8x128xf32> -> vector<8x128xf32>
    %29 = vector.broadcast %1 : vector<1x128xf32> to vector<8x128xf32>
    %30 = arith.addf %28, %29 : vector<8x128xf32>
    %31 = math.tanh %30 : vector<8x128xf32>
    %32 = vector.broadcast %2 : vector<1x128xf32> to vector<8x128xf32>
    %33 = arith.mulf %31, %32 : vector<8x128xf32>
    %cst_16 = arith.constant dense<0.000000e+00> : vector<8xf32>
    %34 = vector.multi_reduction <add>, %33, %cst_16 [1] : vector<8x128xf32> to vector<8xf32>
    %35 = vector.shape_cast %34 : vector<8xf32> to vector<8x1xf32>
    %c3 = arith.constant 3 : index
    %c0_17 = arith.constant 0 : index
    %c0_18 = arith.constant 0 : index
    %36 = vector.load %arg1[%c3, %c0_17, %c0_18] : memref<8x8x128xf32, #tpu.memory_space<vmem>>, vector<1x8x128xf32>
    %37 = vector.shape_cast %36 : vector<1x8x128xf32> to vector<8x128xf32>
    %38 = arith.truncf %37 : vector<8x128xf32> to vector<8x128xbf16>
    %cst_19 = arith.constant dense<0.000000e+00> : vector<8x128xf32>
    %39 = tpu.matmul %38, %0, %cst_19 {dimension_numbers = #tpu.dot_dimension_numbers<[1], [0], [0], [1], [0, 0, 1, 1], [], []>} : vector<8x128xbf16>, vector<128x128xbf16>, vector<8x128xf32> -> vector<8x128xf32>
    %40 = vector.broadcast %1 : vector<1x128xf32> to vector<8x128xf32>
    %41 = arith.addf %39, %40 : vector<8x128xf32>
    %42 = math.tanh %41 : vector<8x128xf32>
    %43 = vector.broadcast %2 : vector<1x128xf32> to vector<8x128xf32>
    %44 = arith.mulf %42, %43 : vector<8x128xf32>
    %cst_20 = arith.constant dense<0.000000e+00> : vector<8xf32>
    %45 = vector.multi_reduction <add>, %44, %cst_20 [1] : vector<8x128xf32> to vector<8xf32>
    %46 = vector.shape_cast %45 : vector<8xf32> to vector<8x1xf32>
    %c4 = arith.constant 4 : index
    %c0_21 = arith.constant 0 : index
    %c0_22 = arith.constant 0 : index
    %47 = vector.load %arg1[%c4, %c0_21, %c0_22] : memref<8x8x128xf32, #tpu.memory_space<vmem>>, vector<1x8x128xf32>
    %48 = vector.shape_cast %47 : vector<1x8x128xf32> to vector<8x128xf32>
    %49 = arith.truncf %48 : vector<8x128xf32> to vector<8x128xbf16>
    %cst_23 = arith.constant dense<0.000000e+00> : vector<8x128xf32>
    %50 = tpu.matmul %49, %0, %cst_23 {dimension_numbers = #tpu.dot_dimension_numbers<[1], [0], [0], [1], [0, 0, 1, 1], [], []>} : vector<8x128xbf16>, vector<128x128xbf16>, vector<8x128xf32> -> vector<8x128xf32>
    %51 = vector.broadcast %1 : vector<1x128xf32> to vector<8x128xf32>
    %52 = arith.addf %50, %51 : vector<8x128xf32>
    %53 = math.tanh %52 : vector<8x128xf32>
    %54 = vector.broadcast %2 : vector<1x128xf32> to vector<8x128xf32>
    %55 = arith.mulf %53, %54 : vector<8x128xf32>
    %cst_24 = arith.constant dense<0.000000e+00> : vector<8xf32>
    %56 = vector.multi_reduction <add>, %55, %cst_24 [1] : vector<8x128xf32> to vector<8xf32>
    %57 = vector.shape_cast %56 : vector<8xf32> to vector<8x1xf32>
    %c5 = arith.constant 5 : index
    %c0_25 = arith.constant 0 : index
    %c0_26 = arith.constant 0 : index
    %58 = vector.load %arg1[%c5, %c0_25, %c0_26] : memref<8x8x128xf32, #tpu.memory_space<vmem>>, vector<1x8x128xf32>
    %59 = vector.shape_cast %58 : vector<1x8x128xf32> to vector<8x128xf32>
    %60 = arith.truncf %59 : vector<8x128xf32> to vector<8x128xbf16>
    %cst_27 = arith.constant dense<0.000000e+00> : vector<8x128xf32>
    %61 = tpu.matmul %60, %0, %cst_27 {dimension_numbers = #tpu.dot_dimension_numbers<[1], [0], [0], [1], [0, 0, 1, 1], [], []>} : vector<8x128xbf16>, vector<128x128xbf16>, vector<8x128xf32> -> vector<8x128xf32>
    %62 = vector.broadcast %1 : vector<1x128xf32> to vector<8x128xf32>
    %63 = arith.addf %61, %62 : vector<8x128xf32>
    %64 = math.tanh %63 : vector<8x128xf32>
    %65 = vector.broadcast %2 : vector<1x128xf32> to vector<8x128xf32>
    %66 = arith.mulf %64, %65 : vector<8x128xf32>
    %cst_28 = arith.constant dense<0.000000e+00> : vector<8xf32>
    %67 = vector.multi_reduction <add>, %66, %cst_28 [1] : vector<8x128xf32> to vector<8xf32>
    %68 = vector.shape_cast %67 : vector<8xf32> to vector<8x1xf32>
    %c6 = arith.constant 6 : index
    %c0_29 = arith.constant 0 : index
    %c0_30 = arith.constant 0 : index
    %69 = vector.load %arg1[%c6, %c0_29, %c0_30] : memref<8x8x128xf32, #tpu.memory_space<vmem>>, vector<1x8x128xf32>
    %70 = vector.shape_cast %69 : vector<1x8x128xf32> to vector<8x128xf32>
    %71 = arith.truncf %70 : vector<8x128xf32> to vector<8x128xbf16>
    %cst_31 = arith.constant dense<0.000000e+00> : vector<8x128xf32>
    %72 = tpu.matmul %71, %0, %cst_31 {dimension_numbers = #tpu.dot_dimension_numbers<[1], [0], [0], [1], [0, 0, 1, 1], [], []>} : vector<8x128xbf16>, vector<128x128xbf16>, vector<8x128xf32> -> vector<8x128xf32>
    %73 = vector.broadcast %1 : vector<1x128xf32> to vector<8x128xf32>
    %74 = arith.addf %72, %73 : vector<8x128xf32>
    %75 = math.tanh %74 : vector<8x128xf32>
    %76 = vector.broadcast %2 : vector<1x128xf32> to vector<8x128xf32>
    %77 = arith.mulf %75, %76 : vector<8x128xf32>
    %cst_32 = arith.constant dense<0.000000e+00> : vector<8xf32>
    %78 = vector.multi_reduction <add>, %77, %cst_32 [1] : vector<8x128xf32> to vector<8xf32>
    %79 = vector.shape_cast %78 : vector<8xf32> to vector<8x1xf32>
    %c7 = arith.constant 7 : index
    %c0_33 = arith.constant 0 : index
    %c0_34 = arith.constant 0 : index
    %80 = vector.load %arg1[%c7, %c0_33, %c0_34] : memref<8x8x128xf32, #tpu.memory_space<vmem>>, vector<1x8x128xf32>
    %81 = vector.shape_cast %80 : vector<1x8x128xf32> to vector<8x128xf32>
    %82 = arith.truncf %81 : vector<8x128xf32> to vector<8x128xbf16>
    %cst_35 = arith.constant dense<0.000000e+00> : vector<8x128xf32>
    %83 = tpu.matmul %82, %0, %cst_35 {dimension_numbers = #tpu.dot_dimension_numbers<[1], [0], [0], [1], [0, 0, 1, 1], [], []>} : vector<8x128xbf16>, vector<128x128xbf16>, vector<8x128xf32> -> vector<8x128xf32>
    %84 = vector.broadcast %1 : vector<1x128xf32> to vector<8x128xf32>
    %85 = arith.addf %83, %84 : vector<8x128xf32>
    %86 = math.tanh %85 : vector<8x128xf32>
    %87 = vector.broadcast %2 : vector<1x128xf32> to vector<8x128xf32>
    %88 = arith.mulf %86, %87 : vector<8x128xf32>
    %cst_36 = arith.constant dense<0.000000e+00> : vector<8xf32>
    %89 = vector.multi_reduction <add>, %88, %cst_36 [1] : vector<8x128xf32> to vector<8xf32>
    %90 = vector.shape_cast %89 : vector<8xf32> to vector<8x1xf32>
    %91 = tpu.concatenate %13, %24, %35, %46, %57, %68, %79, %90 in 1 : vector<8x1xf32>, vector<8x1xf32>, vector<8x1xf32>, vector<8x1xf32>, vector<8x1xf32>, vector<8x1xf32>, vector<8x1xf32>, vector<8x1xf32> -> vector<8x8xf32>
    %cst_37 = arith.constant dense<0xFF800000> : vector<8xf32>
    %92 = vector.multi_reduction <maximumf>, %91, %cst_37 [1] : vector<8x8xf32> to vector<8xf32>
    %93 = vector.shape_cast %92 : vector<8xf32> to vector<8x1xf32>
    %94 = vector.broadcast %93 : vector<8x1xf32> to vector<8x8xf32>
    %95 = arith.subf %91, %94 : vector<8x8xf32>
    %96 = math.exp %95 : vector<8x8xf32>
    %cst_38 = arith.constant dense<0.000000e+00> : vector<8xf32>
    %97 = vector.multi_reduction <add>, %96, %cst_38 [1] : vector<8x8xf32> to vector<8xf32>
    %98 = vector.shape_cast %97 : vector<8xf32> to vector<8x1xf32>
    %99 = vector.broadcast %98 : vector<8x1xf32> to vector<8x8xf32>
    %100 = arith.divf %96, %99 : vector<8x8xf32>
    %c0_39 = arith.constant 0 : index
    %c0_40 = arith.constant 0 : index
    %101 = vector.load %arg6[%c0_39, %c0_40] : memref<8x8xf32, #tpu.memory_space<vmem>>, vector<8x8xf32>
    tpu.vector_store %arg6[%c0_39, %c0_40], %100 {strides = array<i32>} : memref<8x8xf32, #tpu.memory_space<vmem>>, vector<8x8xf32>,
    %102 = vector.extract_strided_slice %100 {offsets = [0, 0], sizes = [8, 1], strides = [1, 1]} : vector<8x8xf32> to vector<8x1xf32>
    %c0_41 = arith.constant 0 : index
    %c0_42 = arith.constant 0 : index
    %c0_43 = arith.constant 0 : index
    %103 = vector.load %arg1[%c0_41, %c0_42, %c0_43] : memref<8x8x128xf32, #tpu.memory_space<vmem>>, vector<1x8x128xf32>
    %104 = vector.shape_cast %103 : vector<1x8x128xf32> to vector<8x128xf32>
    %105 = vector.broadcast %102 : vector<8x1xf32> to vector<8x128xf32>
    %106 = arith.mulf %105, %104 : vector<8x128xf32>
    %107 = vector.extract_strided_slice %100 {offsets = [0, 1], sizes = [8, 1], strides = [1, 1]} : vector<8x8xf32> to vector<8x1xf32>
    %c1_44 = arith.constant 1 : index
    %c0_45 = arith.constant 0 : index
    %c0_46 = arith.constant 0 : index
    %108 = vector.load %arg1[%c1_44, %c0_45, %c0_46] : memref<8x8x128xf32, #tpu.memory_space<vmem>>, vector<1x8x128xf32>
    %109 = vector.shape_cast %108 : vector<1x8x128xf32> to vector<8x128xf32>
    %110 = vector.broadcast %107 : vector<8x1xf32> to vector<8x128xf32>
    %111 = arith.mulf %110, %109 : vector<8x128xf32>
    %112 = arith.addf %106, %111 : vector<8x128xf32>
    %113 = vector.extract_strided_slice %100 {offsets = [0, 2], sizes = [8, 1], strides = [1, 1]} : vector<8x8xf32> to vector<8x1xf32>
    %c2_47 = arith.constant 2 : index
    %c0_48 = arith.constant 0 : index
    %c0_49 = arith.constant 0 : index
    %114 = vector.load %arg1[%c2_47, %c0_48, %c0_49] : memref<8x8x128xf32, #tpu.memory_space<vmem>>, vector<1x8x128xf32>
    %115 = vector.shape_cast %114 : vector<1x8x128xf32> to vector<8x128xf32>
    %116 = vector.broadcast %113 : vector<8x1xf32> to vector<8x128xf32>
    %117 = arith.mulf %116, %115 : vector<8x128xf32>
    %118 = arith.addf %112, %117 : vector<8x128xf32>
    %119 = vector.extract_strided_slice %100 {offsets = [0, 3], sizes = [8, 1], strides = [1, 1]} : vector<8x8xf32> to vector<8x1xf32>
    %c3_50 = arith.constant 3 : index
    %c0_51 = arith.constant 0 : index
    %c0_52 = arith.constant 0 : index
    %120 = vector.load %arg1[%c3_50, %c0_51, %c0_52] : memref<8x8x128xf32, #tpu.memory_space<vmem>>, vector<1x8x128xf32>
    %121 = vector.shape_cast %120 : vector<1x8x128xf32> to vector<8x128xf32>
    %122 = vector.broadcast %119 : vector<8x1xf32> to vector<8x128xf32>
    %123 = arith.mulf %122, %121 : vector<8x128xf32>
    %124 = arith.addf %118, %123 : vector<8x128xf32>
    %125 = vector.extract_strided_slice %100 {offsets = [0, 4], sizes = [8, 1], strides = [1, 1]} : vector<8x8xf32> to vector<8x1xf32>
    %c4_53 = arith.constant 4 : index
    %c0_54 = arith.constant 0 : index
    %c0_55 = arith.constant 0 : index
    %126 = vector.load %arg1[%c4_53, %c0_54, %c0_55] : memref<8x8x128xf32, #tpu.memory_space<vmem>>, vector<1x8x128xf32>
    %127 = vector.shape_cast %126 : vector<1x8x128xf32> to vector<8x128xf32>
    %128 = vector.broadcast %125 : vector<8x1xf32> to vector<8x128xf32>
    %129 = arith.mulf %128, %127 : vector<8x128xf32>
    %130 = arith.addf %124, %129 : vector<8x128xf32>
    %131 = vector.extract_strided_slice %100 {offsets = [0, 5], sizes = [8, 1], strides = [1, 1]} : vector<8x8xf32> to vector<8x1xf32>
    %c5_56 = arith.constant 5 : index
    %c0_57 = arith.constant 0 : index
    %c0_58 = arith.constant 0 : index
    %132 = vector.load %arg1[%c5_56, %c0_57, %c0_58] : memref<8x8x128xf32, #tpu.memory_space<vmem>>, vector<1x8x128xf32>
    %133 = vector.shape_cast %132 : vector<1x8x128xf32> to vector<8x128xf32>
    %134 = vector.broadcast %131 : vector<8x1xf32> to vector<8x128xf32>
    %135 = arith.mulf %134, %133 : vector<8x128xf32>
    %136 = arith.addf %130, %135 : vector<8x128xf32>
    %137 = vector.extract_strided_slice %100 {offsets = [0, 6], sizes = [8, 1], strides = [1, 1]} : vector<8x8xf32> to vector<8x1xf32>
    %c6_59 = arith.constant 6 : index
    %c0_60 = arith.constant 0 : index
    %c0_61 = arith.constant 0 : index
    %138 = vector.load %arg1[%c6_59, %c0_60, %c0_61] : memref<8x8x128xf32, #tpu.memory_space<vmem>>, vector<1x8x128xf32>
    %139 = vector.shape_cast %138 : vector<1x8x128xf32> to vector<8x128xf32>
    %140 = vector.broadcast %137 : vector<8x1xf32> to vector<8x128xf32>
    %141 = arith.mulf %140, %139 : vector<8x128xf32>
    %142 = arith.addf %136, %141 : vector<8x128xf32>
    %143 = vector.extract_strided_slice %100 {offsets = [0, 7], sizes = [8, 1], strides = [1, 1]} : vector<8x8xf32> to vector<8x1xf32>
    %c7_62 = arith.constant 7 : index
    %c0_63 = arith.constant 0 : index
    %c0_64 = arith.constant 0 : index
    %144 = vector.load %arg1[%c7_62, %c0_63, %c0_64] : memref<8x8x128xf32, #tpu.memory_space<vmem>>, vector<1x8x128xf32>
    %145 = vector.shape_cast %144 : vector<1x8x128xf32> to vector<8x128xf32>
    %146 = vector.broadcast %143 : vector<8x1xf32> to vector<8x128xf32>
    %147 = arith.mulf %146, %145 : vector<8x128xf32>
    %148 = arith.addf %142, %147 : vector<8x128xf32>
    %c0_65 = arith.constant 0 : index
    %c0_66 = arith.constant 0 : index
    %149 = vector.load %arg5[%c0_65, %c0_66] : memref<8x128xf32, #tpu.memory_space<vmem>>, vector<8x128xf32>
    tpu.vector_store %arg5[%c0_65, %c0_66], %148 {strides = array<i32>} : memref<8x128xf32, #tpu.memory_space<vmem>>, vector<8x128xf32>,
    return
  }
  func.func @transform_0(%arg0: i32) -> (i32, i32, i32) {
    %c0_i32 = arith.constant 0 : i32
    %c0_i32_0 = arith.constant 0 : i32
    %c0_i32_1 = arith.constant 0 : i32
    return %c0_i32, %arg0, %c0_i32_0 : i32, i32, i32
  }
  func.func @transform_1(%arg0: i32) -> (i32, i32) {
    %c0_i32 = arith.constant 0 : i32
    %c0_i32_0 = arith.constant 0 : i32
    %c0_i32_1 = arith.constant 0 : i32
    return %c0_i32, %c0_i32_0 : i32, i32
  }
  func.func @transform_2(%arg0: i32) -> (i32, i32) {
    %c0_i32 = arith.constant 0 : i32
    %c0_i32_0 = arith.constant 0 : i32
    %c0_i32_1 = arith.constant 0 : i32
    return %c0_i32, %c0_i32_0 : i32, i32
  }
  func.func @transform_3(%arg0: i32) -> (i32, i32) {
    %c0_i32 = arith.constant 0 : i32
    %c0_i32_0 = arith.constant 0 : i32
    %c0_i32_1 = arith.constant 0 : i32
    return %c0_i32, %c0_i32_0 : i32, i32
  }
  func.func @transform_4(%arg0: i32) -> (i32, i32) {
    %c0_i32 = arith.constant 0 : i32
    %c0_i32_0 = arith.constant 0 : i32
    return %arg0, %c0_i32 : i32, i32
  }
  func.func @transform_5(%arg0: i32) -> (i32, i32) {
    %c0_i32 = arith.constant 0 : i32
    %c0_i32_0 = arith.constant 0 : i32
    return %arg0, %c0_i32 : i32, i32
  }
}

module attributes {stable_mosaic.version = 11 : i64} {
  func.func @_bigru_kernel(%arg0: i32, %arg1: memref<4x2x384xbf16, #tpu.memory_space<vmem>>, %arg2: memref<128x384xbf16, #tpu.memory_space<vmem>>, %arg3: memref<1x384xf32, #tpu.memory_space<vmem>>, %arg4: memref<4x2x128xf32, #tpu.memory_space<vmem>>) attributes {dimension_semantics = [#tpu.dimension_semantics<parallel>], iteration_bounds = array<i64: 1>, scalar_prefetch = 0 : i64, scratch_operands = 0 : i64, tpu.core_type = #tpu.core_type<tc>, window_params = [{transform_indices = @transform_0, window_bounds = array<i64: 4, 2, 384>}, {pipeline_mode = #tpu.pipeline_mode<synchronous>, transform_indices = @transform_1, window_bounds = array<i64: 128, 384>}, {pipeline_mode = #tpu.pipeline_mode<synchronous>, transform_indices = @transform_2, window_bounds = array<i64: 1, 384>}, {transform_indices = @transform_3, window_bounds = array<i64: 4, 2, 128>}]} {
    %c0 = arith.constant 0 : index
    %c0_0 = arith.constant 0 : index
    %0 = vector.load %arg2[%c0, %c0_0] : memref<128x384xbf16, #tpu.memory_space<vmem>>, vector<128x384xbf16>
    %c0_1 = arith.constant 0 : index
    %c0_2 = arith.constant 0 : index
    %1 = vector.load %arg3[%c0_1, %c0_2] : memref<1x384xf32, #tpu.memory_space<vmem>>, vector<1x384xf32>
    %cst = arith.constant 0.000000e+00 : f32
    %2 = vector.broadcast %cst : f32 to vector<2x128xf32>
    %c0_i32 = arith.constant 0 : i32
    %c4_i32 = arith.constant 4 : i32
    %3 = arith.addi %c0_i32, %c4_i32 : i32
    %c1_i32 = arith.constant 1 : i32
    %4 = scf.for %arg5 = %c0_i32 to %3 step %c1_i32 iter_args(%arg6 = %2) -> (vector<2x128xf32>)  : i32 {
      %c3_i32 = arith.constant 3 : i32
      %5 = arith.subi %c3_i32, %arg5 : i32
      %6 = arith.truncf %arg6 : vector<2x128xf32> to vector<2x128xbf16>
      %cst_4 = arith.constant dense<0.000000e+00> : vector<2x384xf32>
      %7 = tpu.matmul %6, %0, %cst_4 {dimension_numbers = #tpu.dot_dimension_numbers<[1], [0], [0], [1], [0, 0, 1, 1], [], []>} : vector<2x128xbf16>, vector<128x384xbf16>, vector<2x384xf32> -> vector<2x384xf32>
      %8 = vector.broadcast %1 : vector<1x384xf32> to vector<2x384xf32>
      %9 = arith.addf %7, %8 : vector<2x384xf32>
      %10 = arith.index_cast %arg5 : i32 to index
      %c0_5 = arith.constant 0 : index
      %c0_6 = arith.constant 0 : index
      %11 = vector.load %arg1[%10, %c0_5, %c0_6] : memref<4x2x384xbf16, #tpu.memory_space<vmem>>, vector<1x2x384xbf16>
      %12 = vector.shape_cast %11 : vector<1x2x384xbf16> to vector<2x384xbf16>
      %13 = vector.extract_strided_slice %12 {offsets = [0, 0], sizes = [2, 192], strides = [1, 1]} : vector<2x384xbf16> to vector<2x192xbf16>
      %14 = arith.extf %13 : vector<2x192xbf16> to vector<2x192xf32>
      %15 = arith.index_cast %5 : i32 to index
      %c0_7 = arith.constant 0 : index
      %c0_8 = arith.constant 0 : index
      %16 = vector.load %arg1[%15, %c0_7, %c0_8] : memref<4x2x384xbf16, #tpu.memory_space<vmem>>, vector<1x2x384xbf16>
      %17 = vector.shape_cast %16 : vector<1x2x384xbf16> to vector<2x384xbf16>
      %18 = vector.extract_strided_slice %17 {offsets = [0, 192], sizes = [2, 192], strides = [1, 1]} : vector<2x384xbf16> to vector<2x192xbf16>
      %19 = arith.extf %18 : vector<2x192xbf16> to vector<2x192xf32>
      %20 = vector.extract_strided_slice %9 {offsets = [0, 0], sizes = [2, 192], strides = [1, 1]} : vector<2x384xf32> to vector<2x192xf32>
      %21 = vector.extract_strided_slice %arg6 {offsets = [0, 0], sizes = [2, 64], strides = [1, 1]} : vector<2x128xf32> to vector<2x64xf32>
      %22 = vector.extract_strided_slice %14 {offsets = [0, 0], sizes = [2, 64], strides = [1, 1]} : vector<2x192xf32> to vector<2x64xf32>
      %23 = vector.extract_strided_slice %20 {offsets = [0, 0], sizes = [2, 64], strides = [1, 1]} : vector<2x192xf32> to vector<2x64xf32>
      %24 = arith.addf %22, %23 : vector<2x64xf32>
      %25 = arith.negf %24 : vector<2x64xf32>
      %26 = math.exp %25 : vector<2x64xf32>
      %cst_9 = arith.constant 1.000000e+00 : f32
      %27 = vector.broadcast %cst_9 : f32 to vector<2x64xf32>
      %28 = arith.addf %27, %26 : vector<2x64xf32>
      %29 = arith.divf %27, %28 : vector<2x64xf32>
      %30 = vector.extract_strided_slice %14 {offsets = [0, 64], sizes = [2, 64], strides = [1, 1]} : vector<2x192xf32> to vector<2x64xf32>
      %31 = vector.extract_strided_slice %20 {offsets = [0, 64], sizes = [2, 64], strides = [1, 1]} : vector<2x192xf32> to vector<2x64xf32>
      %32 = arith.addf %30, %31 : vector<2x64xf32>
      %33 = arith.negf %32 : vector<2x64xf32>
      %34 = math.exp %33 : vector<2x64xf32>
      %cst_10 = arith.constant 1.000000e+00 : f32
      %35 = vector.broadcast %cst_10 : f32 to vector<2x64xf32>
      %36 = arith.addf %35, %34 : vector<2x64xf32>
      %37 = arith.divf %35, %36 : vector<2x64xf32>
      %38 = vector.extract_strided_slice %14 {offsets = [0, 128], sizes = [2, 64], strides = [1, 1]} : vector<2x192xf32> to vector<2x64xf32>
      %39 = vector.extract_strided_slice %20 {offsets = [0, 128], sizes = [2, 64], strides = [1, 1]} : vector<2x192xf32> to vector<2x64xf32>
      %40 = arith.mulf %29, %39 : vector<2x64xf32>
      %41 = arith.addf %38, %40 : vector<2x64xf32>
      %42 = math.tanh %41 : vector<2x64xf32>
      %cst_11 = arith.constant 1.000000e+00 : f32
      %43 = vector.broadcast %cst_11 : f32 to vector<2x64xf32>
      %44 = arith.subf %43, %37 : vector<2x64xf32>
      %45 = arith.mulf %44, %42 : vector<2x64xf32>
      %46 = arith.mulf %37, %21 : vector<2x64xf32>
      %47 = arith.addf %45, %46 : vector<2x64xf32>
      %48 = vector.extract_strided_slice %9 {offsets = [0, 192], sizes = [2, 192], strides = [1, 1]} : vector<2x384xf32> to vector<2x192xf32>
      %49 = vector.extract_strided_slice %arg6 {offsets = [0, 64], sizes = [2, 64], strides = [1, 1]} : vector<2x128xf32> to vector<2x64xf32>
      %50 = vector.extract_strided_slice %19 {offsets = [0, 0], sizes = [2, 64], strides = [1, 1]} : vector<2x192xf32> to vector<2x64xf32>
      %51 = vector.extract_strided_slice %48 {offsets = [0, 0], sizes = [2, 64], strides = [1, 1]} : vector<2x192xf32> to vector<2x64xf32>
      %52 = arith.addf %50, %51 : vector<2x64xf32>
      %53 = arith.negf %52 : vector<2x64xf32>
      %54 = math.exp %53 : vector<2x64xf32>
      %cst_12 = arith.constant 1.000000e+00 : f32
      %55 = vector.broadcast %cst_12 : f32 to vector<2x64xf32>
      %56 = arith.addf %55, %54 : vector<2x64xf32>
      %57 = arith.divf %55, %56 : vector<2x64xf32>
      %58 = vector.extract_strided_slice %19 {offsets = [0, 64], sizes = [2, 64], strides = [1, 1]} : vector<2x192xf32> to vector<2x64xf32>
      %59 = vector.extract_strided_slice %48 {offsets = [0, 64], sizes = [2, 64], strides = [1, 1]} : vector<2x192xf32> to vector<2x64xf32>
      %60 = arith.addf %58, %59 : vector<2x64xf32>
      %61 = arith.negf %60 : vector<2x64xf32>
      %62 = math.exp %61 : vector<2x64xf32>
      %cst_13 = arith.constant 1.000000e+00 : f32
      %63 = vector.broadcast %cst_13 : f32 to vector<2x64xf32>
      %64 = arith.addf %63, %62 : vector<2x64xf32>
      %65 = arith.divf %63, %64 : vector<2x64xf32>
      %66 = vector.extract_strided_slice %19 {offsets = [0, 128], sizes = [2, 64], strides = [1, 1]} : vector<2x192xf32> to vector<2x64xf32>
      %67 = vector.extract_strided_slice %48 {offsets = [0, 128], sizes = [2, 64], strides = [1, 1]} : vector<2x192xf32> to vector<2x64xf32>
      %68 = arith.mulf %57, %67 : vector<2x64xf32>
      %69 = arith.addf %66, %68 : vector<2x64xf32>
      %70 = math.tanh %69 : vector<2x64xf32>
      %cst_14 = arith.constant 1.000000e+00 : f32
      %71 = vector.broadcast %cst_14 : f32 to vector<2x64xf32>
      %72 = arith.subf %71, %65 : vector<2x64xf32>
      %73 = arith.mulf %72, %70 : vector<2x64xf32>
      %74 = arith.mulf %65, %49 : vector<2x64xf32>
      %75 = arith.addf %73, %74 : vector<2x64xf32>
      %76 = arith.index_cast %arg5 : i32 to index
      %c0_15 = arith.constant 0 : index
      %c0_16 = arith.constant 0 : index
      %77 = vector.load %arg4[%76, %c0_15, %c0_16] : memref<4x2x128xf32, #tpu.memory_space<vmem>>, vector<1x2x64xf32>
      %78 = vector.shape_cast %77 : vector<1x2x64xf32> to vector<2x64xf32>
      %79 = vector.shape_cast %47 : vector<2x64xf32> to vector<1x2x64xf32>
      tpu.vector_store %arg4[%76, %c0_15, %c0_16], %79 {strides = array<i32>} : memref<4x2x128xf32, #tpu.memory_space<vmem>>, vector<1x2x64xf32>,
      %80 = arith.index_cast %5 : i32 to index
      %c0_17 = arith.constant 0 : index
      %c64 = arith.constant 64 : index
      %81 = vector.load %arg4[%80, %c0_17, %c64] : memref<4x2x128xf32, #tpu.memory_space<vmem>>, vector<1x2x64xf32>
      %82 = vector.shape_cast %81 : vector<1x2x64xf32> to vector<2x64xf32>
      %83 = vector.shape_cast %75 : vector<2x64xf32> to vector<1x2x64xf32>
      tpu.vector_store %arg4[%80, %c0_17, %c64], %83 {strides = array<i32>} : memref<4x2x128xf32, #tpu.memory_space<vmem>>, vector<1x2x64xf32>,
      %84 = tpu.concatenate %47, %75 in 1 : vector<2x64xf32>, vector<2x64xf32> -> vector<2x128xf32>
      scf.yield %84 : vector<2x128xf32>
    }
    %c4_i32_3 = arith.constant 4 : i32
    return
  }
  func.func @transform_0(%arg0: i32) -> (i32, i32, i32) {
    %c0_i32 = arith.constant 0 : i32
    %c0_i32_0 = arith.constant 0 : i32
    %c0_i32_1 = arith.constant 0 : i32
    return %c0_i32, %arg0, %c0_i32_0 : i32, i32, i32
  }
  func.func @transform_1(%arg0: i32) -> (i32, i32) {
    %c0_i32 = arith.constant 0 : i32
    %c0_i32_0 = arith.constant 0 : i32
    %c0_i32_1 = arith.constant 0 : i32
    return %c0_i32, %c0_i32_0 : i32, i32
  }
  func.func @transform_2(%arg0: i32) -> (i32, i32) {
    %c0_i32 = arith.constant 0 : i32
    %c0_i32_0 = arith.constant 0 : i32
    %c0_i32_1 = arith.constant 0 : i32
    return %c0_i32, %c0_i32_0 : i32, i32
  }
  func.func @transform_3(%arg0: i32) -> (i32, i32, i32) {
    %c0_i32 = arith.constant 0 : i32
    %c0_i32_0 = arith.constant 0 : i32
    %c0_i32_1 = arith.constant 0 : i32
    return %c0_i32, %arg0, %c0_i32_0 : i32, i32, i32
  }
}

module attributes {stable_mosaic.version = 11 : i64} {
  func.func @_attn_pool_kernel(%arg0: i32, %arg1: memref<4x2x128xf32, #tpu.memory_space<vmem>>, %arg2: memref<128x128xbf16, #tpu.memory_space<vmem>>, %arg3: memref<1x128xf32, #tpu.memory_space<vmem>>, %arg4: memref<1x128xf32, #tpu.memory_space<vmem>>, %arg5: memref<2x128xf32, #tpu.memory_space<vmem>>, %arg6: memref<2x4xf32, #tpu.memory_space<vmem>>) attributes {dimension_semantics = [#tpu.dimension_semantics<parallel>], iteration_bounds = array<i64: 1>, scalar_prefetch = 0 : i64, scratch_operands = 0 : i64, tpu.core_type = #tpu.core_type<tc>, window_params = [{transform_indices = @transform_0, window_bounds = array<i64: 4, 2, 128>}, {pipeline_mode = #tpu.pipeline_mode<synchronous>, transform_indices = @transform_1, window_bounds = array<i64: 128, 128>}, {pipeline_mode = #tpu.pipeline_mode<synchronous>, transform_indices = @transform_2, window_bounds = array<i64: 1, 128>}, {pipeline_mode = #tpu.pipeline_mode<synchronous>, transform_indices = @transform_3, window_bounds = array<i64: 1, 128>}, {transform_indices = @transform_4, window_bounds = array<i64: 2, 128>}, {transform_indices = @transform_5, window_bounds = array<i64: 2, 4>}]} {
    %c0 = arith.constant 0 : index
    %c0_0 = arith.constant 0 : index
    %0 = vector.load %arg2[%c0, %c0_0] : memref<128x128xbf16, #tpu.memory_space<vmem>>, vector<128x128xbf16>
    %c0_1 = arith.constant 0 : index
    %c0_2 = arith.constant 0 : index
    %1 = vector.load %arg3[%c0_1, %c0_2] : memref<1x128xf32, #tpu.memory_space<vmem>>, vector<1x128xf32>
    %c0_3 = arith.constant 0 : index
    %c0_4 = arith.constant 0 : index
    %2 = vector.load %arg4[%c0_3, %c0_4] : memref<1x128xf32, #tpu.memory_space<vmem>>, vector<1x128xf32>
    %c0_5 = arith.constant 0 : index
    %c0_6 = arith.constant 0 : index
    %c0_7 = arith.constant 0 : index
    %3 = vector.load %arg1[%c0_5, %c0_6, %c0_7] : memref<4x2x128xf32, #tpu.memory_space<vmem>>, vector<1x2x128xf32>
    %4 = vector.shape_cast %3 : vector<1x2x128xf32> to vector<2x128xf32>
    %5 = arith.truncf %4 : vector<2x128xf32> to vector<2x128xbf16>
    %cst = arith.constant dense<0.000000e+00> : vector<2x128xf32>
    %6 = tpu.matmul %5, %0, %cst {dimension_numbers = #tpu.dot_dimension_numbers<[1], [0], [0], [1], [0, 0, 1, 1], [], []>} : vector<2x128xbf16>, vector<128x128xbf16>, vector<2x128xf32> -> vector<2x128xf32>
    %7 = vector.broadcast %1 : vector<1x128xf32> to vector<2x128xf32>
    %8 = arith.addf %6, %7 : vector<2x128xf32>
    %9 = math.tanh %8 : vector<2x128xf32>
    %10 = vector.broadcast %2 : vector<1x128xf32> to vector<2x128xf32>
    %11 = arith.mulf %9, %10 : vector<2x128xf32>
    %cst_8 = arith.constant dense<0.000000e+00> : vector<2xf32>
    %12 = vector.multi_reduction <add>, %11, %cst_8 [1] : vector<2x128xf32> to vector<2xf32>
    %13 = vector.shape_cast %12 : vector<2xf32> to vector<2x1xf32>
    %c1 = arith.constant 1 : index
    %c0_9 = arith.constant 0 : index
    %c0_10 = arith.constant 0 : index
    %14 = vector.load %arg1[%c1, %c0_9, %c0_10] : memref<4x2x128xf32, #tpu.memory_space<vmem>>, vector<1x2x128xf32>
    %15 = vector.shape_cast %14 : vector<1x2x128xf32> to vector<2x128xf32>
    %16 = arith.truncf %15 : vector<2x128xf32> to vector<2x128xbf16>
    %cst_11 = arith.constant dense<0.000000e+00> : vector<2x128xf32>
    %17 = tpu.matmul %16, %0, %cst_11 {dimension_numbers = #tpu.dot_dimension_numbers<[1], [0], [0], [1], [0, 0, 1, 1], [], []>} : vector<2x128xbf16>, vector<128x128xbf16>, vector<2x128xf32> -> vector<2x128xf32>
    %18 = vector.broadcast %1 : vector<1x128xf32> to vector<2x128xf32>
    %19 = arith.addf %17, %18 : vector<2x128xf32>
    %20 = math.tanh %19 : vector<2x128xf32>
    %21 = vector.broadcast %2 : vector<1x128xf32> to vector<2x128xf32>
    %22 = arith.mulf %20, %21 : vector<2x128xf32>
    %cst_12 = arith.constant dense<0.000000e+00> : vector<2xf32>
    %23 = vector.multi_reduction <add>, %22, %cst_12 [1] : vector<2x128xf32> to vector<2xf32>
    %24 = vector.shape_cast %23 : vector<2xf32> to vector<2x1xf32>
    %c2 = arith.constant 2 : index
    %c0_13 = arith.constant 0 : index
    %c0_14 = arith.constant 0 : index
    %25 = vector.load %arg1[%c2, %c0_13, %c0_14] : memref<4x2x128xf32, #tpu.memory_space<vmem>>, vector<1x2x128xf32>
    %26 = vector.shape_cast %25 : vector<1x2x128xf32> to vector<2x128xf32>
    %27 = arith.truncf %26 : vector<2x128xf32> to vector<2x128xbf16>
    %cst_15 = arith.constant dense<0.000000e+00> : vector<2x128xf32>
    %28 = tpu.matmul %27, %0, %cst_15 {dimension_numbers = #tpu.dot_dimension_numbers<[1], [0], [0], [1], [0, 0, 1, 1], [], []>} : vector<2x128xbf16>, vector<128x128xbf16>, vector<2x128xf32> -> vector<2x128xf32>
    %29 = vector.broadcast %1 : vector<1x128xf32> to vector<2x128xf32>
    %30 = arith.addf %28, %29 : vector<2x128xf32>
    %31 = math.tanh %30 : vector<2x128xf32>
    %32 = vector.broadcast %2 : vector<1x128xf32> to vector<2x128xf32>
    %33 = arith.mulf %31, %32 : vector<2x128xf32>
    %cst_16 = arith.constant dense<0.000000e+00> : vector<2xf32>
    %34 = vector.multi_reduction <add>, %33, %cst_16 [1] : vector<2x128xf32> to vector<2xf32>
    %35 = vector.shape_cast %34 : vector<2xf32> to vector<2x1xf32>
    %c3 = arith.constant 3 : index
    %c0_17 = arith.constant 0 : index
    %c0_18 = arith.constant 0 : index
    %36 = vector.load %arg1[%c3, %c0_17, %c0_18] : memref<4x2x128xf32, #tpu.memory_space<vmem>>, vector<1x2x128xf32>
    %37 = vector.shape_cast %36 : vector<1x2x128xf32> to vector<2x128xf32>
    %38 = arith.truncf %37 : vector<2x128xf32> to vector<2x128xbf16>
    %cst_19 = arith.constant dense<0.000000e+00> : vector<2x128xf32>
    %39 = tpu.matmul %38, %0, %cst_19 {dimension_numbers = #tpu.dot_dimension_numbers<[1], [0], [0], [1], [0, 0, 1, 1], [], []>} : vector<2x128xbf16>, vector<128x128xbf16>, vector<2x128xf32> -> vector<2x128xf32>
    %40 = vector.broadcast %1 : vector<1x128xf32> to vector<2x128xf32>
    %41 = arith.addf %39, %40 : vector<2x128xf32>
    %42 = math.tanh %41 : vector<2x128xf32>
    %43 = vector.broadcast %2 : vector<1x128xf32> to vector<2x128xf32>
    %44 = arith.mulf %42, %43 : vector<2x128xf32>
    %cst_20 = arith.constant dense<0.000000e+00> : vector<2xf32>
    %45 = vector.multi_reduction <add>, %44, %cst_20 [1] : vector<2x128xf32> to vector<2xf32>
    %46 = vector.shape_cast %45 : vector<2xf32> to vector<2x1xf32>
    %47 = tpu.concatenate %13, %24, %35, %46 in 1 : vector<2x1xf32>, vector<2x1xf32>, vector<2x1xf32>, vector<2x1xf32> -> vector<2x4xf32>
    %cst_21 = arith.constant dense<0xFF800000> : vector<2xf32>
    %48 = vector.multi_reduction <maximumf>, %47, %cst_21 [1] : vector<2x4xf32> to vector<2xf32>
    %49 = vector.shape_cast %48 : vector<2xf32> to vector<2x1xf32>
    %50 = vector.broadcast %49 : vector<2x1xf32> to vector<2x4xf32>
    %51 = arith.subf %47, %50 : vector<2x4xf32>
    %52 = math.exp %51 : vector<2x4xf32>
    %cst_22 = arith.constant dense<0.000000e+00> : vector<2xf32>
    %53 = vector.multi_reduction <add>, %52, %cst_22 [1] : vector<2x4xf32> to vector<2xf32>
    %54 = vector.shape_cast %53 : vector<2xf32> to vector<2x1xf32>
    %55 = vector.broadcast %54 : vector<2x1xf32> to vector<2x4xf32>
    %56 = arith.divf %52, %55 : vector<2x4xf32>
    %c0_23 = arith.constant 0 : index
    %c0_24 = arith.constant 0 : index
    %57 = vector.load %arg6[%c0_23, %c0_24] : memref<2x4xf32, #tpu.memory_space<vmem>>, vector<2x4xf32>
    tpu.vector_store %arg6[%c0_23, %c0_24], %56 {strides = array<i32>} : memref<2x4xf32, #tpu.memory_space<vmem>>, vector<2x4xf32>,
    %58 = vector.extract_strided_slice %56 {offsets = [0, 0], sizes = [2, 1], strides = [1, 1]} : vector<2x4xf32> to vector<2x1xf32>
    %c0_25 = arith.constant 0 : index
    %c0_26 = arith.constant 0 : index
    %c0_27 = arith.constant 0 : index
    %59 = vector.load %arg1[%c0_25, %c0_26, %c0_27] : memref<4x2x128xf32, #tpu.memory_space<vmem>>, vector<1x2x128xf32>
    %60 = vector.shape_cast %59 : vector<1x2x128xf32> to vector<2x128xf32>
    %61 = vector.broadcast %58 : vector<2x1xf32> to vector<2x128xf32>
    %62 = arith.mulf %61, %60 : vector<2x128xf32>
    %63 = vector.extract_strided_slice %56 {offsets = [0, 1], sizes = [2, 1], strides = [1, 1]} : vector<2x4xf32> to vector<2x1xf32>
    %c1_28 = arith.constant 1 : index
    %c0_29 = arith.constant 0 : index
    %c0_30 = arith.constant 0 : index
    %64 = vector.load %arg1[%c1_28, %c0_29, %c0_30] : memref<4x2x128xf32, #tpu.memory_space<vmem>>, vector<1x2x128xf32>
    %65 = vector.shape_cast %64 : vector<1x2x128xf32> to vector<2x128xf32>
    %66 = vector.broadcast %63 : vector<2x1xf32> to vector<2x128xf32>
    %67 = arith.mulf %66, %65 : vector<2x128xf32>
    %68 = arith.addf %62, %67 : vector<2x128xf32>
    %69 = vector.extract_strided_slice %56 {offsets = [0, 2], sizes = [2, 1], strides = [1, 1]} : vector<2x4xf32> to vector<2x1xf32>
    %c2_31 = arith.constant 2 : index
    %c0_32 = arith.constant 0 : index
    %c0_33 = arith.constant 0 : index
    %70 = vector.load %arg1[%c2_31, %c0_32, %c0_33] : memref<4x2x128xf32, #tpu.memory_space<vmem>>, vector<1x2x128xf32>
    %71 = vector.shape_cast %70 : vector<1x2x128xf32> to vector<2x128xf32>
    %72 = vector.broadcast %69 : vector<2x1xf32> to vector<2x128xf32>
    %73 = arith.mulf %72, %71 : vector<2x128xf32>
    %74 = arith.addf %68, %73 : vector<2x128xf32>
    %75 = vector.extract_strided_slice %56 {offsets = [0, 3], sizes = [2, 1], strides = [1, 1]} : vector<2x4xf32> to vector<2x1xf32>
    %c3_34 = arith.constant 3 : index
    %c0_35 = arith.constant 0 : index
    %c0_36 = arith.constant 0 : index
    %76 = vector.load %arg1[%c3_34, %c0_35, %c0_36] : memref<4x2x128xf32, #tpu.memory_space<vmem>>, vector<1x2x128xf32>
    %77 = vector.shape_cast %76 : vector<1x2x128xf32> to vector<2x128xf32>
    %78 = vector.broadcast %75 : vector<2x1xf32> to vector<2x128xf32>
    %79 = arith.mulf %78, %77 : vector<2x128xf32>
    %80 = arith.addf %74, %79 : vector<2x128xf32>
    %c0_37 = arith.constant 0 : index
    %c0_38 = arith.constant 0 : index
    %81 = vector.load %arg5[%c0_37, %c0_38] : memref<2x128xf32, #tpu.memory_space<vmem>>, vector<2x128xf32>
    tpu.vector_store %arg5[%c0_37, %c0_38], %80 {strides = array<i32>} : memref<2x128xf32, #tpu.memory_space<vmem>>, vector<2x128xf32>,
    return
  }
  func.func @transform_0(%arg0: i32) -> (i32, i32, i32) {
    %c0_i32 = arith.constant 0 : i32
    %c0_i32_0 = arith.constant 0 : i32
    %c0_i32_1 = arith.constant 0 : i32
    return %c0_i32, %arg0, %c0_i32_0 : i32, i32, i32
  }
  func.func @transform_1(%arg0: i32) -> (i32, i32) {
    %c0_i32 = arith.constant 0 : i32
    %c0_i32_0 = arith.constant 0 : i32
    %c0_i32_1 = arith.constant 0 : i32
    return %c0_i32, %c0_i32_0 : i32, i32
  }
  func.func @transform_2(%arg0: i32) -> (i32, i32) {
    %c0_i32 = arith.constant 0 : i32
    %c0_i32_0 = arith.constant 0 : i32
    %c0_i32_1 = arith.constant 0 : i32
    return %c0_i32, %c0_i32_0 : i32, i32
  }
  func.func @transform_3(%arg0: i32) -> (i32, i32) {
    %c0_i32 = arith.constant 0 : i32
    %c0_i32_0 = arith.constant 0 : i32
    %c0_i32_1 = arith.constant 0 : i32
    return %c0_i32, %c0_i32_0 : i32, i32
  }
  func.func @transform_4(%arg0: i32) -> (i32, i32) {
    %c0_i32 = arith.constant 0 : i32
    %c0_i32_0 = arith.constant 0 : i32
    return %arg0, %c0_i32 : i32, i32
  }
  func.func @transform_5(%arg0: i32) -> (i32, i32) {
    %c0_i32 = arith.constant 0 : i32
    %c0_i32_0 = arith.constant 0 : i32
    return %arg0, %c0_i32 : i32, i32
  }
}

module attributes {stable_mosaic.version = 11 : i64} {
  func.func @_dense_kernel(%arg0: i32, %arg1: memref<2x128xf32, #tpu.memory_space<vmem>>, %arg2: memref<128x128xbf16, #tpu.memory_space<vmem>>, %arg3: memref<1x128xf32, #tpu.memory_space<vmem>>, %arg4: memref<2x128xf32, #tpu.memory_space<vmem>>) attributes {dimension_semantics = [#tpu.dimension_semantics<parallel>], iteration_bounds = array<i64: 1>, scalar_prefetch = 0 : i64, scratch_operands = 0 : i64, tpu.core_type = #tpu.core_type<tc>, window_params = [{transform_indices = @transform_0, window_bounds = array<i64: 2, 128>}, {pipeline_mode = #tpu.pipeline_mode<synchronous>, transform_indices = @transform_1, window_bounds = array<i64: 128, 128>}, {pipeline_mode = #tpu.pipeline_mode<synchronous>, transform_indices = @transform_2, window_bounds = array<i64: 1, 128>}, {transform_indices = @transform_3, window_bounds = array<i64: 2, 128>}]} {
    %c0 = arith.constant 0 : index
    %c0_0 = arith.constant 0 : index
    %0 = vector.load %arg2[%c0, %c0_0] : memref<128x128xbf16, #tpu.memory_space<vmem>>, vector<128x128xbf16>
    %c0_1 = arith.constant 0 : index
    %c0_2 = arith.constant 0 : index
    %1 = vector.load %arg1[%c0_1, %c0_2] : memref<2x128xf32, #tpu.memory_space<vmem>>, vector<2x128xf32>
    %2 = arith.truncf %1 : vector<2x128xf32> to vector<2x128xbf16>
    %cst = arith.constant dense<0.000000e+00> : vector<2x128xf32>
    %3 = tpu.matmul %2, %0, %cst {dimension_numbers = #tpu.dot_dimension_numbers<[1], [0], [0], [1], [0, 0, 1, 1], [], []>} : vector<2x128xbf16>, vector<128x128xbf16>, vector<2x128xf32> -> vector<2x128xf32>
    %c0_3 = arith.constant 0 : index
    %c0_4 = arith.constant 0 : index
    %4 = vector.load %arg3[%c0_3, %c0_4] : memref<1x128xf32, #tpu.memory_space<vmem>>, vector<1x128xf32>
    %5 = vector.broadcast %4 : vector<1x128xf32> to vector<2x128xf32>
    %6 = arith.addf %3, %5 : vector<2x128xf32>
    %c0_5 = arith.constant 0 : index
    %c0_6 = arith.constant 0 : index
    %7 = vector.load %arg4[%c0_5, %c0_6] : memref<2x128xf32, #tpu.memory_space<vmem>>, vector<2x128xf32>
    tpu.vector_store %arg4[%c0_5, %c0_6], %6 {strides = array<i32>} : memref<2x128xf32, #tpu.memory_space<vmem>>, vector<2x128xf32>,
    return
  }
  func.func @transform_0(%arg0: i32) -> (i32, i32) {
    %c0_i32 = arith.constant 0 : i32
    %c0_i32_0 = arith.constant 0 : i32
    return %arg0, %c0_i32 : i32, i32
  }
  func.func @transform_1(%arg0: i32) -> (i32, i32) {
    %c0_i32 = arith.constant 0 : i32
    %c0_i32_0 = arith.constant 0 : i32
    %c0_i32_1 = arith.constant 0 : i32
    return %c0_i32, %c0_i32_0 : i32, i32
  }
  func.func @transform_2(%arg0: i32) -> (i32, i32) {
    %c0_i32 = arith.constant 0 : i32
    %c0_i32_0 = arith.constant 0 : i32
    %c0_i32_1 = arith.constant 0 : i32
    return %c0_i32, %c0_i32_0 : i32, i32
  }
  func.func @transform_3(%arg0: i32) -> (i32, i32) {
    %c0_i32 = arith.constant 0 : i32
    %c0_i32_0 = arith.constant 0 : i32
    return %arg0, %c0_i32 : i32, i32
  }
}

module attributes {stable_mosaic.version = 11 : i64} {
  func.func @_caps_kernel(%arg0: memref<2x8x16xf32, #tpu.memory_space<vmem>>, %arg1: memref<16x8xf32, #tpu.memory_space<vmem>>, %arg2: memref<16x16x128xf32, #tpu.memory_space<vmem>>, %arg3: memref<8x128xf32, #tpu.memory_space<vmem>>, %arg4: memref<128x8xf32, #tpu.memory_space<vmem>>, %arg5: memref<2x1x8xf32, #tpu.memory_space<vmem>>) attributes {dimension_semantics = [], scalar_prefetch = 0 : i64, scratch_operands = 0 : i64, tpu.core_type = #tpu.core_type<tc>} {
    %c0 = arith.constant 0 : index
    %c0_0 = arith.constant 0 : index
    %0 = vector.load %arg1[%c0, %c0_0] : memref<16x8xf32, #tpu.memory_space<vmem>>, vector<16x8xf32>
    %c0_1 = arith.constant 0 : index
    %c0_2 = arith.constant 0 : index
    %c0_3 = arith.constant 0 : index
    %1 = vector.load %arg2[%c0_1, %c0_2, %c0_3] : memref<16x16x128xf32, #tpu.memory_space<vmem>>, vector<16x16x128xf32>
    %c0_4 = arith.constant 0 : index
    %c0_5 = arith.constant 0 : index
    %2 = vector.load %arg3[%c0_4, %c0_5] : memref<8x128xf32, #tpu.memory_space<vmem>>, vector<8x128xf32>
    %c0_6 = arith.constant 0 : index
    %c0_7 = arith.constant 0 : index
    %3 = vector.load %arg4[%c0_6, %c0_7] : memref<128x8xf32, #tpu.memory_space<vmem>>, vector<128x8xf32>
    %c0_i32 = arith.constant 0 : i32
    %c2_i32 = arith.constant 2 : i32
    %4 = arith.addi %c0_i32, %c2_i32 : i32
    %c1_i32 = arith.constant 1 : i32
    scf.for %arg6 = %c0_i32 to %4 step %c1_i32  : i32 {
      %5 = arith.index_cast %arg6 : i32 to index
      %c0_9 = arith.constant 0 : index
      %c0_10 = arith.constant 0 : index
      %6 = vector.load %arg0[%5, %c0_9, %c0_10] : memref<2x8x16xf32, #tpu.memory_space<vmem>>, vector<1x8x16xf32>
      %7 = vector.shape_cast %6 : vector<1x8x16xf32> to vector<8x16xf32>
      %8 = arith.mulf %7, %7 : vector<8x16xf32>
      %cst = arith.constant dense<0.000000e+00> : vector<8xf32>
      %9 = vector.multi_reduction <add>, %8, %cst [1] : vector<8x16xf32> to vector<8xf32>
      %10 = vector.shape_cast %9 : vector<8xf32> to vector<8x1xf32>
      %cst_11 = arith.constant 1.000000e+00 : f32
      %11 = vector.broadcast %cst_11 : f32 to vector<8x1xf32>
      %12 = arith.addf %11, %10 : vector<8x1xf32>
      %13 = arith.divf %10, %12 : vector<8x1xf32>
      %14 = vector.broadcast %13 : vector<8x1xf32> to vector<8x16xf32>
      %15 = arith.mulf %7, %14 : vector<8x16xf32>
      %cst_12 = arith.constant 9.99999993E-9 : f32
      %16 = vector.broadcast %cst_12 : f32 to vector<8x1xf32>
      %17 = arith.addf %10, %16 : vector<8x1xf32>
      %18 = math.rsqrt %17 : vector<8x1xf32>
      %19 = vector.broadcast %18 : vector<8x1xf32> to vector<8x16xf32>
      %20 = arith.mulf %15, %19 : vector<8x16xf32>
      %cst_13 = arith.constant dense<0.000000e+00> : vector<16x16xf32>
      %21 = tpu.matmul %0, %20, %cst_13 {dimension_numbers = #tpu.dot_dimension_numbers<[1], [0], [0], [1], [0, 0, 1, 1], [], []>} : vector<16x8xf32>, vector<8x16xf32>, vector<16x16xf32> -> vector<16x16xf32>
      %22 = arith.mulf %21, %21 : vector<16x16xf32>
      %cst_14 = arith.constant dense<0.000000e+00> : vector<16xf32>
      %23 = vector.multi_reduction <add>, %22, %cst_14 [1] : vector<16x16xf32> to vector<16xf32>
      %24 = vector.shape_cast %23 : vector<16xf32> to vector<16x1xf32>
      %cst_15 = arith.constant 1.000000e+00 : f32
      %25 = vector.broadcast %cst_15 : f32 to vector<16x1xf32>
      %26 = arith.addf %25, %24 : vector<16x1xf32>
      %27 = arith.divf %24, %26 : vector<16x1xf32>
      %28 = vector.broadcast %27 : vector<16x1xf32> to vector<16x16xf32>
      %29 = arith.mulf %21, %28 : vector<16x16xf32>
      %cst_16 = arith.constant 9.99999993E-9 : f32
      %30 = vector.broadcast %cst_16 : f32 to vector<16x1xf32>
      %31 = arith.addf %24, %30 : vector<16x1xf32>
      %32 = math.rsqrt %31 : vector<16x1xf32>
      %33 = vector.broadcast %32 : vector<16x1xf32> to vector<16x16xf32>
      %34 = arith.mulf %29, %33 : vector<16x16xf32>
      %35 = vector.shape_cast %34 : vector<16x16xf32> to vector<16x16x1xf32>
      %36 = vector.broadcast %35 : vector<16x16x1xf32> to vector<16x16x128xf32>
      %37 = arith.mulf %36, %1 : vector<16x16x128xf32>
      %cst_17 = arith.constant dense<0.000000e+00> : vector<16x128xf32>
      %38 = vector.multi_reduction <add>, %37, %cst_17 [1] : vector<16x16x128xf32> to vector<16x128xf32>
      %cst_18 = arith.constant 0.000000e+00 : f32
      %39 = vector.broadcast %cst_18 : f32 to vector<16x8xf32>
      %cst_19 = arith.constant dense<0xFF800000> : vector<16xf32>
      %40 = vector.multi_reduction <maximumf>, %39, %cst_19 [1] : vector<16x8xf32> to vector<16xf32>
      %41 = vector.shape_cast %40 : vector<16xf32> to vector<16x1xf32>
      %42 = vector.broadcast %41 : vector<16x1xf32> to vector<16x8xf32>
      %43 = arith.subf %39, %42 : vector<16x8xf32>
      %44 = math.exp %43 : vector<16x8xf32>
      %cst_20 = arith.constant dense<0.000000e+00> : vector<16xf32>
      %45 = vector.multi_reduction <add>, %44, %cst_20 [1] : vector<16x8xf32> to vector<16xf32>
      %46 = vector.shape_cast %45 : vector<16xf32> to vector<16x1xf32>
      %47 = vector.broadcast %46 : vector<16x1xf32> to vector<16x8xf32>
      %48 = arith.divf %44, %47 : vector<16x8xf32>
      %cst_21 = arith.constant dense<0.000000e+00> : vector<16x128xf32>
      %49 = tpu.matmul %48, %2, %cst_21 {dimension_numbers = #tpu.dot_dimension_numbers<[1], [0], [0], [1], [0, 0, 1, 1], [], []>} : vector<16x8xf32>, vector<8x128xf32>, vector<16x128xf32> -> vector<16x128xf32>
      %50 = arith.mulf %49, %38 : vector<16x128xf32>
      %cst_22 = arith.constant dense<0.000000e+00> : vector<128xf32>
      %51 = vector.multi_reduction <add>, %50, %cst_22 [0] : vector<16x128xf32> to vector<128xf32>
      %52 = vector.shape_cast %51 : vector<128xf32> to vector<1x128xf32>
      %53 = arith.mulf %52, %52 : vector<1x128xf32>
      %cst_23 = arith.constant dense<0.000000e+00> : vector<1x8xf32>
      %54 = tpu.matmul %53, %3, %cst_23 {dimension_numbers = #tpu.dot_dimension_numbers<[1], [0], [0], [1], [0, 0, 1, 1], [], []>} : vector<1x128xf32>, vector<128x8xf32>, vector<1x8xf32> -> vector<1x8xf32>
      %cst_24 = arith.constant 1.000000e+00 : f32
      %55 = vector.broadcast %cst_24 : f32 to vector<1x8xf32>
      %56 = arith.addf %55, %54 : vector<1x8xf32>
      %57 = arith.divf %54, %56 : vector<1x8xf32>
      %cst_25 = arith.constant 9.99999993E-9 : f32
      %58 = vector.broadcast %cst_25 : f32 to vector<1x8xf32>
      %59 = arith.addf %54, %58 : vector<1x8xf32>
      %60 = math.rsqrt %59 : vector<1x8xf32>
      %61 = arith.mulf %57, %60 : vector<1x8xf32>
      %cst_26 = arith.constant dense<0.000000e+00> : vector<1x128xf32>
      %62 = tpu.matmul %61, %2, %cst_26 {dimension_numbers = #tpu.dot_dimension_numbers<[1], [0], [0], [1], [0, 0, 1, 1], [], []>} : vector<1x8xf32>, vector<8x128xf32>, vector<1x128xf32> -> vector<1x128xf32>
      %63 = arith.mulf %52, %62 : vector<1x128xf32>
      %64 = vector.broadcast %63 : vector<1x128xf32> to vector<16x128xf32>
      %65 = arith.mulf %38, %64 : vector<16x128xf32>
      %cst_27 = arith.constant dense<0.000000e+00> : vector<16x8xf32>
      %66 = tpu.matmul %65, %3, %cst_27 {dimension_numbers = #tpu.dot_dimension_numbers<[1], [0], [0], [1], [0, 0, 1, 1], [], []>} : vector<16x128xf32>, vector<128x8xf32>, vector<16x8xf32> -> vector<16x8xf32>
      %67 = arith.addf %39, %66 : vector<16x8xf32>
      %cst_28 = arith.constant dense<0xFF800000> : vector<16xf32>
      %68 = vector.multi_reduction <maximumf>, %67, %cst_28 [1] : vector<16x8xf32> to vector<16xf32>
      %69 = vector.shape_cast %68 : vector<16xf32> to vector<16x1xf32>
      %70 = vector.broadcast %69 : vector<16x1xf32> to vector<16x8xf32>
      %71 = arith.subf %67, %70 : vector<16x8xf32>
      %72 = math.exp %71 : vector<16x8xf32>
      %cst_29 = arith.constant dense<0.000000e+00> : vector<16xf32>
      %73 = vector.multi_reduction <add>, %72, %cst_29 [1] : vector<16x8xf32> to vector<16xf32>
      %74 = vector.shape_cast %73 : vector<16xf32> to vector<16x1xf32>
      %75 = vector.broadcast %74 : vector<16x1xf32> to vector<16x8xf32>
      %76 = arith.divf %72, %75 : vector<16x8xf32>
      %cst_30 = arith.constant dense<0.000000e+00> : vector<16x128xf32>
      %77 = tpu.matmul %76, %2, %cst_30 {dimension_numbers = #tpu.dot_dimension_numbers<[1], [0], [0], [1], [0, 0, 1, 1], [], []>} : vector<16x8xf32>, vector<8x128xf32>, vector<16x128xf32> -> vector<16x128xf32>
      %78 = arith.mulf %77, %38 : vector<16x128xf32>
      %cst_31 = arith.constant dense<0.000000e+00> : vector<128xf32>
      %79 = vector.multi_reduction <add>, %78, %cst_31 [0] : vector<16x128xf32> to vector<128xf32>
      %80 = vector.shape_cast %79 : vector<128xf32> to vector<1x128xf32>
      %81 = arith.mulf %80, %80 : vector<1x128xf32>
      %cst_32 = arith.constant dense<0.000000e+00> : vector<1x8xf32>
      %82 = tpu.matmul %81, %3, %cst_32 {dimension_numbers = #tpu.dot_dimension_numbers<[1], [0], [0], [1], [0, 0, 1, 1], [], []>} : vector<1x128xf32>, vector<128x8xf32>, vector<1x8xf32> -> vector<1x8xf32>
      %cst_33 = arith.constant 1.000000e+00 : f32
      %83 = vector.broadcast %cst_33 : f32 to vector<1x8xf32>
      %84 = arith.addf %83, %82 : vector<1x8xf32>
      %85 = arith.divf %82, %84 : vector<1x8xf32>
      %cst_34 = arith.constant 9.99999993E-9 : f32
      %86 = vector.broadcast %cst_34 : f32 to vector<1x8xf32>
      %87 = arith.addf %82, %86 : vector<1x8xf32>
      %88 = math.rsqrt %87 : vector<1x8xf32>
      %89 = arith.mulf %85, %88 : vector<1x8xf32>
      %cst_35 = arith.constant dense<0.000000e+00> : vector<1x128xf32>
      %90 = tpu.matmul %89, %2, %cst_35 {dimension_numbers = #tpu.dot_dimension_numbers<[1], [0], [0], [1], [0, 0, 1, 1], [], []>} : vector<1x8xf32>, vector<8x128xf32>, vector<1x128xf32> -> vector<1x128xf32>
      %91 = arith.mulf %80, %90 : vector<1x128xf32>
      %92 = vector.broadcast %91 : vector<1x128xf32> to vector<16x128xf32>
      %93 = arith.mulf %38, %92 : vector<16x128xf32>
      %cst_36 = arith.constant dense<0.000000e+00> : vector<16x8xf32>
      %94 = tpu.matmul %93, %3, %cst_36 {dimension_numbers = #tpu.dot_dimension_numbers<[1], [0], [0], [1], [0, 0, 1, 1], [], []>} : vector<16x128xf32>, vector<128x8xf32>, vector<16x8xf32> -> vector<16x8xf32>
      %95 = arith.addf %67, %94 : vector<16x8xf32>
      %cst_37 = arith.constant dense<0xFF800000> : vector<16xf32>
      %96 = vector.multi_reduction <maximumf>, %95, %cst_37 [1] : vector<16x8xf32> to vector<16xf32>
      %97 = vector.shape_cast %96 : vector<16xf32> to vector<16x1xf32>
      %98 = vector.broadcast %97 : vector<16x1xf32> to vector<16x8xf32>
      %99 = arith.subf %95, %98 : vector<16x8xf32>
      %100 = math.exp %99 : vector<16x8xf32>
      %cst_38 = arith.constant dense<0.000000e+00> : vector<16xf32>
      %101 = vector.multi_reduction <add>, %100, %cst_38 [1] : vector<16x8xf32> to vector<16xf32>
      %102 = vector.shape_cast %101 : vector<16xf32> to vector<16x1xf32>
      %103 = vector.broadcast %102 : vector<16x1xf32> to vector<16x8xf32>
      %104 = arith.divf %100, %103 : vector<16x8xf32>
      %cst_39 = arith.constant dense<0.000000e+00> : vector<16x128xf32>
      %105 = tpu.matmul %104, %2, %cst_39 {dimension_numbers = #tpu.dot_dimension_numbers<[1], [0], [0], [1], [0, 0, 1, 1], [], []>} : vector<16x8xf32>, vector<8x128xf32>, vector<16x128xf32> -> vector<16x128xf32>
      %106 = arith.mulf %105, %38 : vector<16x128xf32>
      %cst_40 = arith.constant dense<0.000000e+00> : vector<128xf32>
      %107 = vector.multi_reduction <add>, %106, %cst_40 [0] : vector<16x128xf32> to vector<128xf32>
      %108 = vector.shape_cast %107 : vector<128xf32> to vector<1x128xf32>
      %109 = arith.mulf %108, %108 : vector<1x128xf32>
      %cst_41 = arith.constant dense<0.000000e+00> : vector<1x8xf32>
      %110 = tpu.matmul %109, %3, %cst_41 {dimension_numbers = #tpu.dot_dimension_numbers<[1], [0], [0], [1], [0, 0, 1, 1], [], []>} : vector<1x128xf32>, vector<128x8xf32>, vector<1x8xf32> -> vector<1x8xf32>
      %cst_42 = arith.constant 1.000000e+00 : f32
      %111 = vector.broadcast %cst_42 : f32 to vector<1x8xf32>
      %112 = arith.addf %111, %110 : vector<1x8xf32>
      %113 = arith.divf %110, %112 : vector<1x8xf32>
      %114 = arith.index_cast %arg6 : i32 to index
      %c0_43 = arith.constant 0 : index
      %c0_44 = arith.constant 0 : index
      %115 = vector.load %arg5[%114, %c0_43, %c0_44] : memref<2x1x8xf32, #tpu.memory_space<vmem>>, vector<1x1x8xf32>
      %116 = vector.shape_cast %115 : vector<1x1x8xf32> to vector<1x8xf32>
      %117 = vector.shape_cast %113 : vector<1x8xf32> to vector<1x1x8xf32>
      tpu.vector_store %arg5[%114, %c0_43, %c0_44], %117 {strides = array<i32>} : memref<2x1x8xf32, #tpu.memory_space<vmem>>, vector<1x1x8xf32>,
    }
    %c2_i32_8 = arith.constant 2 : i32
    return
  }
}

</mosaic_0001>

<llo_original>
// kernel: hcapsnet_forward.11
$region0: #{hcapsnet_forward.11}
  #allocation0 [shape = 'u32[]', space=smem, size = 0x4, offset = 0x4, fixed_abs, tag = 'smem constant byte address 0x4 - core index']
  #allocation1 [shape = 'u32[72,128]{1,0:T(1,128)}', space=vmem, size = 0x9000, scoped, tag = 'internal scratch']
  %s0 = inlined_call_operand.vmem [shape: f32[8,128], index: 0, kind: input, shape index: {}]
  %s1 = inlined_call_operand.vmem [shape: bf16[128,384], index: 1, kind: input, shape index: {}]
  %s2 = inlined_call_operand.vmem [shape: f32[1,384], index: 2, kind: input, shape index: {}]
  %s3 = inlined_call_operand.vmem [shape: bf16[8,384], index: 3, kind: output, shape index: {}]
  %s4 = sld [smem:[#allocation0]]
  $region22: #{hcapsnet_forward.11} parent=0
    _
  %s6 = ssub.s32 1, %s4
  %s7 = scalar_select 0, %s6, %s4
  // Predicated region
  $region2: #{hcapsnet_forward.11} parent=0 // pred_check
    _
  $region3: #{hcapsnet_forward.11} parent=0 // pred_check_branch
    %9 = sbr.rel (0) target = $region5
  $region4: #{hcapsnet_forward.11} parent=0 // pred_region
    _
  $region5: #{hcapsnet_forward.11} parent=0 // pred_fallthru
    _
  // Predicated region
  $region6: #{hcapsnet_forward.11} parent=0 // pred_check
    _
  $region7: #{hcapsnet_forward.11} parent=0 // pred_check_branch
    %11 = sbr.rel (0) target = $region9
  $region8: #{hcapsnet_forward.11} parent=0 // pred_region
    _
  $region9: #{hcapsnet_forward.11} parent=0 // pred_fallthru
    _
  // Predicated region
  $region10: #{hcapsnet_forward.11} parent=0 // pred_check
    _
  $region11: #{hcapsnet_forward.11} parent=0 // pred_check_branch
    %13 = sbr.rel (0) target = $region13
  $region12: #{hcapsnet_forward.11} parent=0 // pred_region
    _
  $region13: #{hcapsnet_forward.11} parent=0 // pred_fallthru
    _
  %v14 = vld [vmem:[%s1] sm:$0xff]
  %v15 = vld [vmem:[%s1 + $0x8] sm:$0xf]
  %v16 = vld [vmem:[%s1 + $0xc] sm:$0xff]
  %v17 = vld [vmem:[%s1 + $0x14] sm:$0xf]
  %v18 = vld [vmem:[%s1 + $0x18] sm:$0xff]
  %v19 = vld [vmem:[%s1 + $0x20] sm:$0xf]
  %v20 = vld [vmem:[%s1 + $0x24] sm:$0xff]
  %v21 = vld [vmem:[%s1 + $0x2c] sm:$0xf]
  %v22 = vld [vmem:[%s1 + $0x30] sm:$0xff]
  %v23 = vld [vmem:[%s1 + $0x38] sm:$0xf]
  %v24 = vld [vmem:[%s1 + $0x3c] sm:$0xff]
  %v25 = vld [vmem:[%s1 + $0x44] sm:$0xf]
  %v26 = vld [vmem:[%s1 + $0x48] sm:$0xff]
  %v27 = vld [vmem:[%s1 + $0x50] sm:$0xf]
  %v28 = vld [vmem:[%s1 + $0x54] sm:$0xff]
  %v29 = vld [vmem:[%s1 + $0x5c] sm:$0xf]
  %v30 = vld [vmem:[%s1 + $0x60] sm:$0xff]
  %v31 = vld [vmem:[%s1 + $0x68] sm:$0xf]
  %v32 = vld [vmem:[%s1 + $0x6c] sm:$0xff]
  %v33 = vld [vmem:[%s1 + $0x74] sm:$0xf]
  %v34 = vld [vmem:[%s1 + $0x78] sm:$0xff]
  %v35 = vld [vmem:[%s1 + $0x80] sm:$0xf]
  %v36 = vld [vmem:[%s1 + $0x84] sm:$0xff]
  %v37 = vld [vmem:[%s1 + $0x8c] sm:$0xf]
  %v38 = vld [vmem:[%s1 + $0x90] sm:$0xff]
  %v39 = vld [vmem:[%s1 + $0x98] sm:$0xf]
  %v40 = vld [vmem:[%s1 + $0x9c] sm:$0xff]
  %v41 = vld [vmem:[%s1 + $0xa4] sm:$0xf]
  %v42 = vld [vmem:[%s1 + $0xa8] sm:$0xff]
  %v43 = vld [vmem:[%s1 + $0xb0] sm:$0xf]
  %v44 = vld [vmem:[%s1 + $0xb4] sm:$0xff]
  %v45 = vld [vmem:[%s1 + $0xbc] sm:$0xf]
  %v46 = vld [vmem:[%s0] sm:$0xff]
  %v47 = vpack.c.bf16 %v46, %v46
  %v48 = vld [vmem:[%s2] sm:$0x7]
  %v50 = vperm.slane %v48, 0
  %v51 = vperm.slane %v48, 1
  %v52 = vperm.slane %v48, 2
  %v88 = vunpack.c.l.b16 %v14
  %v89 = vunpack.c.h.b16 %v14
  %v90 = vunpack.c.l.b16 %v15
  %v91 = vunpack.c.l.b16 %v16
  %v92 = vunpack.c.h.b16 %v16
  %v93 = vunpack.c.l.b16 %v17
  %v94 = vunpack.c.l.b16 %v18
  %v95 = vunpack.c.h.b16 %v18
  %v96 = vunpack.c.l.b16 %v19
  %v97 = vunpack.c.l.b16 %v20
  %v98 = vunpack.c.h.b16 %v20
  %v99 = vunpack.c.l.b16 %v21
  %v100 = vunpack.c.l.b16 %v22
  %v101 = vunpack.c.h.b16 %v22
  %v102 = vunpack.c.l.b16 %v23
  %v103 = vunpack.c.l.b16 %v24
  %v104 = vunpack.c.h.b16 %v24
  %v105 = vunpack.c.l.b16 %v25
  %v106 = vunpack.c.l.b16 %v26
  %v107 = vunpack.c.h.b16 %v26
  %v108 = vunpack.c.l.b16 %v27
  %v109 = vunpack.c.l.b16 %v28
  %v110 = vunpack.c.h.b16 %v28
  %v111 = vunpack.c.l.b16 %v29
  %v112 = vunpack.c.l.b16 %v30
  %v113 = vunpack.c.h.b16 %v30
  %v114 = vunpack.c.l.b16 %v31
  %v115 = vunpack.c.l.b16 %v32
  %v116 = vunpack.c.h.b16 %v32
  %v117 = vunpack.c.l.b16 %v33
  %v118 = vunpack.c.l.b16 %v34
  %v119 = vunpack.c.h.b16 %v34
  %v120 = vunpack.c.l.b16 %v35
  %v121 = vunpack.c.l.b16 %v36
  %v122 = vunpack.c.h.b16 %v36
  %v123 = vunpack.c.l.b16 %v37
  %v124 = vunpack.c.l.b16 %v38
  %v125 = vunpack.c.h.b16 %v38
  %v126 = vunpack.c.l.b16 %v39
  %v127 = vunpack.c.l.b16 %v40
  %v128 = vunpack.c.h.b16 %v40
  %v129 = vunpack.c.l.b16 %v41
  %v130 = vunpack.c.l.b16 %v42
  %v131 = vunpack.c.h.b16 %v42
  %v132 = vunpack.c.l.b16 %v43
  %v133 = vunpack.c.l.b16 %v44
  %v134 = vunpack.c.h.b16 %v44
  %v135 = vunpack.c.l.b16 %v45
  %v136 = vpack.c.b16 %v91, %v88
  %v137 = vpack.c.b16 %v92, %v89
  %v138 = vpack.c.b16 %v93, %v90
  %v139 = vpack.c.b16 %v97, %v94
  %v140 = vpack.c.b16 %v98, %v95
  %v141 = vpack.c.b16 %v99, %v96
  %v142 = vpack.c.b16 %v103, %v100
  %v143 = vpack.c.b16 %v104, %v101
  %v144 = vpack.c.b16 %v105, %v102
  %v145 = vpack.c.b16 %v109, %v106
  %v146 = vpack.c.b16 %v110, %v107
  %v147 = vpack.c.b16 %v111, %v108
  %v148 = vpack.c.b16 %v115, %v112
  %v149 = vpack.c.b16 %v116, %v113
  %v150 = vpack.c.b16 %v117, %v114
  %v151 = vpack.c.b16 %v121, %v118
  %v152 = vpack.c.b16 %v122, %v119
  %v153 = vpack.c.b16 %v123, %v120
  %v154 = vpack.c.b16 %v127, %v124
  %v155 = vpack.c.b16 %v128, %v125
  %v156 = vpack.c.b16 %v129, %v126
  %v157 = vpack.c.b16 %v133, %v130
  %v158 = vpack.c.b16 %v134, %v131
  %v159 = vpack.c.b16 %v135, %v132
  %184 = vmatpush.bf16.msra.mxu0 %v157
  %185 = vmatpush.bf16.msra.mxu0 %v154
  %186 = vmatpush.bf16.msra.mxu0 %v151
  %187 = vmatpush.bf16.msra.mxu0 %v148
  %188 = vmatpush.bf16.msra.mxu0 %v145
  %189 = vmatpush.bf16.msra.mxu0 %v142
  %190 = vmatpush.bf16.msra.mxu0 %v139
  %191 = vmatpush.bf16.msra.mxu0 %v136
  %192 = vmatmul.bf16.gmra.mxu0 %v47
  %v193 = vpop.f32.mrf.mxu0
  %v194 = vadd.f32 %v50, %v193
  %v195 = vpop.f32.mrf.mxu0
  %196 = vdwg.mxu0
  %197 = vmatpush.bf16.msra.mxu0 %v158
  %198 = vmatpush.bf16.msra.mxu0 %v155
  %199 = vmatpush.bf16.msra.mxu0 %v152
  %200 = vmatpush.bf16.msra.mxu0 %v149
  %201 = vmatpush.bf16.msra.mxu0 %v146
  %202 = vmatpush.bf16.msra.mxu0 %v143
  %203 = vmatpush.bf16.msra.mxu0 %v140
  %204 = vmatpush.bf16.msra.mxu0 %v137
  %205 = vmatmul.bf16.gmra.mxu0 %v47
  %v206 = vpop.f32.mrf.mxu0
  %v207 = vadd.f32 %v51, %v206
  %v208 = vpop.f32.mrf.mxu0
  %209 = vdwg.mxu0
  %210 = vmatpush.bf16.msra.mxu0 %v159
  %211 = vmatpush.bf16.msra.mxu0 %v156
  %212 = vmatpush.bf16.msra.mxu0 %v153
  %213 = vmatpush.bf16.msra.mxu0 %v150
  %214 = vmatpush.bf16.msra.mxu0 %v147
  %215 = vmatpush.bf16.msra.mxu0 %v144
  %216 = vmatpush.bf16.msra.mxu0 %v141
  %217 = vmatpush.bf16.msra.mxu0 %v138
  %218 = vmatmul.bf16.gmra.mxu0 %v47
  %v219 = vpop.f32.mrf.mxu0
  %v220 = vadd.f32 %v52, %v219
  %v221 = vpop.f32.mrf.mxu0
  %222 = vdwg.mxu0
  %v223 = vpack.c.bf16 %v207, %v194
  %v224 = vpack.c.bf16 %v220, %v220
  %225 = vst [vmem:[%s3] sm:$0xff] %v223
  %226 = vst [vmem:[%s3 + $0x8] sm:$0xf] %v224
  // Predicated region
  $region14: #{hcapsnet_forward.11} parent=0 // pred_check
    _
  $region15: #{hcapsnet_forward.11} parent=0 // pred_check_branch
    %228 = sbr.rel (0) target = $region17
  $region16: #{hcapsnet_forward.11} parent=0 // pred_region
    _
  $region17: #{hcapsnet_forward.11} parent=0 // pred_fallthru
    _
  // Predicated region
  $region18: #{hcapsnet_forward.11} parent=0 // pred_check
    _
  $region19: #{hcapsnet_forward.11} parent=0 // pred_check_branch
    %230 = sbr.rel (0) target = $region21
  $region20: #{hcapsnet_forward.11} parent=0 // pred_region
    _
  $region21: #{hcapsnet_forward.11} parent=0 // pred_fallthru
    _

// kernel: hcapsnet_forward.8
$region0: #{hcapsnet_forward.8}
  #allocation0 [shape = 'u32[]', space=smem, size = 0x4, offset = 0x4, fixed_abs, tag = 'smem constant byte address 0x4 - core index']
  #allocation1 [shape = 'u32[72,128]{1,0:T(1,128)}', space=vmem, size = 0x9000, scoped, tag = 'internal scratch']
  %s0 = inlined_call_operand.vmem [shape: f32[64,128], index: 0, kind: input, shape index: {}]
  %s1 = inlined_call_operand.vmem [shape: bf16[128,384], index: 1, kind: input, shape index: {}]
  %s2 = inlined_call_operand.vmem [shape: f32[1,384], index: 2, kind: input, shape index: {}]
  %s3 = inlined_call_operand.vmem [shape: bf16[64,384], index: 3, kind: output, shape index: {}]
  %s4 = sld [smem:[#allocation0]]
  $region22: #{hcapsnet_forward.8} parent=0
    _
  %s6 = ssub.s32 1, %s4
  %s7 = scalar_select 0, %s6, %s4
  // Predicated region
  $region2: #{hcapsnet_forward.8} parent=0 // pred_check
    _
  $region3: #{hcapsnet_forward.8} parent=0 // pred_check_branch
    %9 = sbr.rel (0) target = $region5
  $region4: #{hcapsnet_forward.8} parent=0 // pred_region
    _
  $region5: #{hcapsnet_forward.8} parent=0 // pred_fallthru
    _
  // Predicated region
  $region6: #{hcapsnet_forward.8} parent=0 // pred_check
    _
  $region7: #{hcapsnet_forward.8} parent=0 // pred_check_branch
    %11 = sbr.rel (0) target = $region9
  $region8: #{hcapsnet_forward.8} parent=0 // pred_region
    _
  $region9: #{hcapsnet_forward.8} parent=0 // pred_fallthru
    _
  // Predicated region
  $region10: #{hcapsnet_forward.8} parent=0 // pred_check
    _
  $region11: #{hcapsnet_forward.8} parent=0 // pred_check_branch
    %13 = sbr.rel (0) target = $region13
  $region12: #{hcapsnet_forward.8} parent=0 // pred_region
    _
  $region13: #{hcapsnet_forward.8} parent=0 // pred_fallthru
    _
  %v14 = vld [vmem:[%s1] sm:$0xff]
  %v15 = vld [vmem:[%s1 + $0x8] sm:$0xf]
  %v16 = vld [vmem:[%s1 + $0xc] sm:$0xff]
  %v17 = vld [vmem:[%s1 + $0x14] sm:$0xf]
  %v18 = vld [vmem:[%s1 + $0x18] sm:$0xff]
  %v19 = vld [vmem:[%s1 + $0x20] sm:$0xf]
  %v20 = vld [vmem:[%s1 + $0x24] sm:$0xff]
  %v21 = vld [vmem:[%s1 + $0x2c] sm:$0xf]
  %v22 = vld [vmem:[%s1 + $0x30] sm:$0xff]
  %v23 = vld [vmem:[%s1 + $0x38] sm:$0xf]
  %v24 = vld [vmem:[%s1 + $0x3c] sm:$0xff]
  %v25 = vld [vmem:[%s1 + $0x44] sm:$0xf]
  %v26 = vld [vmem:[%s1 + $0x48] sm:$0xff]
  %v27 = vld [vmem:[%s1 + $0x50] sm:$0xf]
  %v28 = vld [vmem:[%s1 + $0x54] sm:$0xff]
  %v29 = vld [vmem:[%s1 + $0x5c] sm:$0xf]
  %v30 = vld [vmem:[%s1 + $0x60] sm:$0xff]
  %v31 = vld [vmem:[%s1 + $0x68] sm:$0xf]
  %v32 = vld [vmem:[%s1 + $0x6c] sm:$0xff]
  %v33 = vld [vmem:[%s1 + $0x74] sm:$0xf]
  %v34 = vld [vmem:[%s1 + $0x78] sm:$0xff]
  %v35 = vld [vmem:[%s1 + $0x80] sm:$0xf]
  %v36 = vld [vmem:[%s1 + $0x84] sm:$0xff]
  %v37 = vld [vmem:[%s1 + $0x8c] sm:$0xf]
  %v38 = vld [vmem:[%s1 + $0x90] sm:$0xff]
  %v39 = vld [vmem:[%s1 + $0x98] sm:$0xf]
  %v40 = vld [vmem:[%s1 + $0x9c] sm:$0xff]
  %v41 = vld [vmem:[%s1 + $0xa4] sm:$0xf]
  %v42 = vld [vmem:[%s1 + $0xa8] sm:$0xff]
  %v43 = vld [vmem:[%s1 + $0xb0] sm:$0xf]
  %v44 = vld [vmem:[%s1 + $0xb4] sm:$0xff]
  %v45 = vld [vmem:[%s1 + $0xbc] sm:$0xf]
  %v46 = vld [vmem:[%s0] sm:$0xff]
  %v47 = vld [vmem:[%s0 + $0x8] sm:$0xff]
  %v48 = vld [vmem:[%s0 + $0x10] sm:$0xff]
  %v49 = vld [vmem:[%s0 + $0x18] sm:$0xff]
  %v50 = vld [vmem:[%s0 + $0x20] sm:$0xff]
  %v51 = vld [vmem:[%s0 + $0x28] sm:$0xff]
  %v52 = vld [vmem:[%s0 + $0x30] sm:$0xff]
  %v53 = vld [vmem:[%s0 + $0x38] sm:$0xff]
  %v54 = vpack.c.bf16 %v47, %v46
  %v55 = vpack.c.bf16 %v49, %v48
  %v56 = vpack.c.bf16 %v51, %v50
  %v57 = vpack.c.bf16 %v53, %v52
  %v58 = vld [vmem:[%s2] sm:$0x7]
  %v60 = vperm.slane %v58, 0
  %v61 = vperm.slane %v58, 1
  %v62 = vperm.slane %v58, 2
  %v98 = vunpack.c.l.b16 %v14
  %v99 = vunpack.c.h.b16 %v14
  %v100 = vunpack.c.l.b16 %v15
  %v101 = vunpack.c.l.b16 %v16
  %v102 = vunpack.c.h.b16 %v16
  %v103 = vunpack.c.l.b16 %v17
  %v104 = vunpack.c.l.b16 %v18
  %v105 = vunpack.c.h.b16 %v18
  %v106 = vunpack.c.l.b16 %v19
  %v107 = vunpack.c.l.b16 %v20
  %v108 = vunpack.c.h.b16 %v20
  %v109 = vunpack.c.l.b16 %v21
  %v110 = vunpack.c.l.b16 %v22
  %v111 = vunpack.c.h.b16 %v22
  %v112 = vunpack.c.l.b16 %v23
  %v113 = vunpack.c.l.b16 %v24
  %v114 = vunpack.c.h.b16 %v24
  %v115 = vunpack.c.l.b16 %v25
  %v116 = vunpack.c.l.b16 %v26
  %v117 = vunpack.c.h.b16 %v26
  %v118 = vunpack.c.l.b16 %v27
  %v119 = vunpack.c.l.b16 %v28
  %v120 = vunpack.c.h.b16 %v28
  %v121 = vunpack.c.l.b16 %v29
  %v122 = vunpack.c.l.b16 %v30
  %v123 = vunpack.c.h.b16 %v30
  %v124 = vunpack.c.l.b16 %v31
  %v125 = vunpack.c.l.b16 %v32
  %v126 = vunpack.c.h.b16 %v32
  %v127 = vunpack.c.l.b16 %v33
  %v128 = vunpack.c.l.b16 %v34
  %v129 = vunpack.c.h.b16 %v34
  %v130 = vunpack.c.l.b16 %v35
  %v131 = vunpack.c.l.b16 %v36
  %v132 = vunpack.c.h.b16 %v36
  %v133 = vunpack.c.l.b16 %v37
  %v134 = vunpack.c.l.b16 %v38
  %v135 = vunpack.c.h.b16 %v38
  %v136 = vunpack.c.l.b16 %v39
  %v137 = vunpack.c.l.b16 %v40
  %v138 = vunpack.c.h.b16 %v40
  %v139 = vunpack.c.l.b16 %v41
  %v140 = vunpack.c.l.b16 %v42
  %v141 = vunpack.c.h.b16 %v42
  %v142 = vunpack.c.l.b16 %v43
  %v143 = vunpack.c.l.b16 %v44
  %v144 = vunpack.c.h.b16 %v44
  %v145 = vunpack.c.l.b16 %v45
  %v146 = vpack.c.b16 %v101, %v98
  %v147 = vpack.c.b16 %v102, %v99
  %v148 = vpack.c.b16 %v103, %v100
  %v149 = vpack.c.b16 %v107, %v104
  %v150 = vpack.c.b16 %v108, %v105
  %v151 = vpack.c.b16 %v109, %v106
  %v152 = vpack.c.b16 %v113, %v110
  %v153 = vpack.c.b16 %v114, %v111
  %v154 = vpack.c.b16 %v115, %v112
  %v155 = vpack.c.b16 %v119, %v116
  %v156 = vpack.c.b16 %v120, %v117
  %v157 = vpack.c.b16 %v121, %v118
  %v158 = vpack.c.b16 %v125, %v122
  %v159 = vpack.c.b16 %v126, %v123
  %v160 = vpack.c.b16 %v127, %v124
  %v161 = vpack.c.b16 %v131, %v128
  %v162 = vpack.c.b16 %v132, %v129
  %v163 = vpack.c.b16 %v133, %v130
  %v164 = vpack.c.b16 %v137, %v134
  %v165 = vpack.c.b16 %v138, %v135
  %v166 = vpack.c.b16 %v139, %v136
  %v167 = vpack.c.b16 %v143, %v140
  %v168 = vpack.c.b16 %v144, %v141
  %v169 = vpack.c.b16 %v145, %v142
  %194 = vmatpush.bf16.msra.mxu0 %v167
  %195 = vmatpush.bf16.msra.mxu0 %v164
  %196 = vmatpush.bf16.msra.mxu0 %v161
  %197 = vmatpush.bf16.msra.mxu0 %v158
  %198 = vmatpush.bf16.msra.mxu0 %v155
  %199 = vmatpush.bf16.msra.mxu0 %v152
  %200 = vmatpush.bf16.msra.mxu0 %v149
  %201 = vmatpush.bf16.msra.mxu0 %v146
  %202 = vmatmul.bf16.gmra.mxu0 %v54
  %v203 = vpop.f32.mrf.mxu0
  %v204 = vadd.f32 %v60, %v203
  %v205 = vpop.f32.mrf.mxu0
  %v206 = vadd.f32 %v60, %v205
  %207 = vmatmul.bf16.gmra.mxu0 %v55
  %v208 = vpop.f32.mrf.mxu0
  %v209 = vadd.f32 %v60, %v208
  %v210 = vpop.f32.mrf.mxu0
  %v211 = vadd.f32 %v60, %v210
  %212 = vmatmul.bf16.gmra.mxu0 %v56
  %v213 = vpop.f32.mrf.mxu0
  %v214 = vadd.f32 %v60, %v213
  %v215 = vpop.f32.mrf.mxu0
  %v216 = vadd.f32 %v60, %v215
  %217 = vmatmul.bf16.gmra.mxu0 %v57
  %v218 = vpop.f32.mrf.mxu0
  %v219 = vadd.f32 %v60, %v218
  %v220 = vpop.f32.mrf.mxu0
  %v221 = vadd.f32 %v60, %v220
  %222 = vdwg.mxu0
  %223 = vmatpush.bf16.msra.mxu0 %v168
  %224 = vmatpush.bf16.msra.mxu0 %v165
  %225 = vmatpush.bf16.msra.mxu0 %v162
  %226 = vmatpush.bf16.msra.mxu0 %v159
  %227 = vmatpush.bf16.msra.mxu0 %v156
  %228 = vmatpush.bf16.msra.mxu0 %v153
  %229 = vmatpush.bf16.msra.mxu0 %v150
  %230 = vmatpush.bf16.msra.mxu0 %v147
  %231 = vmatmul.bf16.gmra.mxu0 %v54
  %v232 = vpop.f32.mrf.mxu0
  %v233 = vadd.f32 %v61, %v232
  %v234 = vpop.f32.mrf.mxu0
  %v235 = vadd.f32 %v61, %v234
  %236 = vmatmul.bf16.gmra.mxu0 %v55
  %v237 = vpop.f32.mrf.mxu0
  %v238 = vadd.f32 %v61, %v237
  %v239 = vpop.f32.mrf.mxu0
  %v240 = vadd.f32 %v61, %v239
  %241 = vmatmul.bf16.gmra.mxu0 %v56
  %v242 = vpop.f32.mrf.mxu0
  %v243 = vadd.f32 %v61, %v242
  %v244 = vpop.f32.mrf.mxu0
  %v245 = vadd.f32 %v61, %v244
  %246 = vmatmul.bf16.gmra.mxu0 %v57
  %v247 = vpop.f32.mrf.mxu0
  %v248 = vadd.f32 %v61, %v247
  %v249 = vpop.f32.mrf.mxu0
  %v250 = vadd.f32 %v61, %v249
  %251 = vdwg.mxu0
  %252 = vmatpush.bf16.msra.mxu0 %v169
  %253 = vmatpush.bf16.msra.mxu0 %v166
  %254 = vmatpush.bf16.msra.mxu0 %v163
  %255 = vmatpush.bf16.msra.mxu0 %v160
  %256 = vmatpush.bf16.msra.mxu0 %v157
  %257 = vmatpush.bf16.msra.mxu0 %v154
  %258 = vmatpush.bf16.msra.mxu0 %v151
  %259 = vmatpush.bf16.msra.mxu0 %v148
  %260 = vmatmul.bf16.gmra.mxu0 %v54
  %v261 = vpop.f32.mrf.mxu0
  %v262 = vadd.f32 %v62, %v261
  %v263 = vpop.f32.mrf.mxu0
  %v264 = vadd.f32 %v62, %v263
  %265 = vmatmul.bf16.gmra.mxu0 %v55
  %v266 = vpop.f32.mrf.mxu0
  %v267 = vadd.f32 %v62, %v266
  %v268 = vpop.f32.mrf.mxu0
  %v269 = vadd.f32 %v62, %v268
  %270 = vmatmul.bf16.gmra.mxu0 %v56
  %v271 = vpop.f32.mrf.mxu0
  %v272 = vadd.f32 %v62, %v271
  %v273 = vpop.f32.mrf.mxu0
  %v274 = vadd.f32 %v62, %v273
  %275 = vmatmul.bf16.gmra.mxu0 %v57
  %v276 = vpop.f32.mrf.mxu0
  %v277 = vadd.f32 %v62, %v276
  %v278 = vpop.f32.mrf.mxu0
  %v279 = vadd.f32 %v62, %v278
  %280 = vdwg.mxu0
  %v281 = vpack.c.bf16 %v233, %v204
  %v282 = vpack.c.bf16 %v262, %v262
  %v283 = vpack.c.bf16 %v235, %v206
  %v284 = vpack.c.bf16 %v264, %v264
  %v285 = vpack.c.bf16 %v238, %v209
  %v286 = vpack.c.bf16 %v267, %v267
  %v287 = vpack.c.bf16 %v240, %v211
  %v288 = vpack.c.bf16 %v269, %v269
  %v289 = vpack.c.bf16 %v243, %v214
  %v290 = vpack.c.bf16 %v272, %v272
  %v291 = vpack.c.bf16 %v245, %v216
  %v292 = vpack.c.bf16 %v274, %v274
  %v293 = vpack.c.bf16 %v248, %v219
  %v294 = vpack.c.bf16 %v277, %v277
  %v295 = vpack.c.bf16 %v250, %v221
  %v296 = vpack.c.bf16 %v279, %v279
  %297 = vst [vmem:[%s3] sm:$0xff] %v281
  %298 = vst [vmem:[%s3 + $0x8] sm:$0xf] %v282
  %299 = vst [vmem:[%s3 + $0xc] sm:$0xff] %v283
  %300 = vst [vmem:[%s3 + $0x14] sm:$0xf] %v284
  %301 = vst [vmem:[%s3 + $0x18] sm:$0xff] %v285
  %302 = vst [vmem:[%s3 + $0x20] sm:$0xf] %v286
  %303 = vst [vmem:[%s3 + $0x24] sm:$0xff] %v287
  %304 = vst [vmem:[%s3 + $0x2c] sm:$0xf] %v288
  %305 = vst [vmem:[%s3 + $0x30] sm:$0xff] %v289
  %306 = vst [vmem:[%s3 + $0x38] sm:$0xf] %v290
  %307 = vst [vmem:[%s3 + $0x3c] sm:$0xff] %v291
  %308 = vst [vmem:[%s3 + $0x44] sm:$0xf] %v292
  %309 = vst [vmem:[%s3 + $0x48] sm:$0xff] %v293
  %310 = vst [vmem:[%s3 + $0x50] sm:$0xf] %v294
  %311 = vst [vmem:[%s3 + $0x54] sm:$0xff] %v295
  %312 = vst [vmem:[%s3 + $0x5c] sm:$0xf] %v296
  // Predicated region
  $region14: #{hcapsnet_forward.8} parent=0 // pred_check
    _
  $region15: #{hcapsnet_forward.8} parent=0 // pred_check_branch
    %314 = sbr.rel (0) target = $region17
  $region16: #{hcapsnet_forward.8} parent=0 // pred_region
    _
  $region17: #{hcapsnet_forward.8} parent=0 // pred_fallthru
    _
  // Predicated region
  $region18: #{hcapsnet_forward.8} parent=0 // pred_check
    _
  $region19: #{hcapsnet_forward.8} parent=0 // pred_check_branch
    %316 = sbr.rel (0) target = $region21
  $region20: #{hcapsnet_forward.8} parent=0 // pred_region
    _
  $region21: #{hcapsnet_forward.8} parent=0 // pred_fallthru
    _

// kernel: hcapsnet_forward.9
$region0: #{hcapsnet_forward.9}
  #allocation0 [shape = 'u32[]', space=smem, size = 0x4, offset = 0x4, fixed_abs, tag = 'smem constant byte address 0x4 - core index']
  #allocation1 [shape = 'u32[72,128]{1,0:T(1,128)}', space=vmem, size = 0x9000, scoped, tag = 'internal scratch']
  %s0 = inlined_call_operand.vmem [shape: bf16[8,8,384], index: 0, kind: input, shape index: {}]
  %s1 = inlined_call_operand.vmem [shape: bf16[128,384], index: 1, kind: input, shape index: {}]
  %s2 = inlined_call_operand.vmem [shape: f32[1,384], index: 2, kind: input, shape index: {}]
  %s3 = inlined_call_operand.vmem [shape: f32[8,8,128], index: 3, kind: output, shape index: {}]
  %s4 = sld [smem:[#allocation0]]
  $region29: #{hcapsnet_forward.9} parent=0
    _
  %s6 = ssub.s32 1, %s4
  %s7 = scalar_select 0, %s6, %s4
  // Predicated region
  $region2: #{hcapsnet_forward.9} parent=0 // pred_check
    _
  $region3: #{hcapsnet_forward.9} parent=0 // pred_check_branch
    %9 = sbr.rel (0) target = $region5
  $region4: #{hcapsnet_forward.9} parent=0 // pred_region
    _
  $region5: #{hcapsnet_forward.9} parent=0 // pred_fallthru
    _
  // Predicated region
  $region6: #{hcapsnet_forward.9} parent=0 // pred_check
    _
  $region7: #{hcapsnet_forward.9} parent=0 // pred_check_branch
    %11 = sbr.rel (0) target = $region9
  $region8: #{hcapsnet_forward.9} parent=0 // pred_region
    _
  $region9: #{hcapsnet_forward.9} parent=0 // pred_fallthru
    _
  // Predicated region
  $region10: #{hcapsnet_forward.9} parent=0 // pred_check
    _
  $region11: #{hcapsnet_forward.9} parent=0 // pred_check_branch
    %13 = sbr.rel (0) target = $region13
  $region12: #{hcapsnet_forward.9} parent=0 // pred_region
    _
  $region13: #{hcapsnet_forward.9} parent=0 // pred_fallthru
    _
  %v14 = vld [vmem:[%s1] sm:$0xff]
  %v15 = vld [vmem:[%s1 + $0x8] sm:$0xf]
  %v16 = vld [vmem:[%s1 + $0xc] sm:$0xff]
  %v17 = vld [vmem:[%s1 + $0x14] sm:$0xf]
  %v18 = vld [vmem:[%s1 + $0x18] sm:$0xff]
  %v19 = vld [vmem:[%s1 + $0x20] sm:$0xf]
  %v20 = vld [vmem:[%s1 + $0x24] sm:$0xff]
  %v21 = vld [vmem:[%s1 + $0x2c] sm:$0xf]
  %v22 = vld [vmem:[%s1 + $0x30] sm:$0xff]
  %v23 = vld [vmem:[%s1 + $0x38] sm:$0xf]
  %v24 = vld [vmem:[%s1 + $0x3c] sm:$0xff]
  %v25 = vld [vmem:[%s1 + $0x44] sm:$0xf]
  %v26 = vld [vmem:[%s1 + $0x48] sm:$0xff]
  %v27 = vld [vmem:[%s1 + $0x50] sm:$0xf]
  %v28 = vld [vmem:[%s1 + $0x54] sm:$0xff]
  %v29 = vld [vmem:[%s1 + $0x5c] sm:$0xf]
  %v30 = vld [vmem:[%s1 + $0x60] sm:$0xff]
  %v31 = vld [vmem:[%s1 + $0x68] sm:$0xf]
  %v32 = vld [vmem:[%s1 + $0x6c] sm:$0xff]
  %v33 = vld [vmem:[%s1 + $0x74] sm:$0xf]
  %v34 = vld [vmem:[%s1 + $0x78] sm:$0xff]
  %v35 = vld [vmem:[%s1 + $0x80] sm:$0xf]
  %v36 = vld [vmem:[%s1 + $0x84] sm:$0xff]
  %v37 = vld [vmem:[%s1 + $0x8c] sm:$0xf]
  %v38 = vld [vmem:[%s1 + $0x90] sm:$0xff]
  %v39 = vld [vmem:[%s1 + $0x98] sm:$0xf]
  %v40 = vld [vmem:[%s1 + $0x9c] sm:$0xff]
  %v41 = vld [vmem:[%s1 + $0xa4] sm:$0xf]
  %v42 = vld [vmem:[%s1 + $0xa8] sm:$0xff]
  %v43 = vld [vmem:[%s1 + $0xb0] sm:$0xf]
  %v44 = vld [vmem:[%s1 + $0xb4] sm:$0xff]
  %v45 = vld [vmem:[%s1 + $0xbc] sm:$0xf]
  %v46 = vld [vmem:[%s2] sm:$0x7]
  loop: start=0, step=1, limit=8
  $region14: #{hcapsnet_forward.9} parent=0 // loop_pre_header
    _
  $region15: #{hcapsnet_forward.9} parent=0 // loop_header
    %s48 = sphi 0, %s52
    %p49 = scmp.ge.s32.totalorder %s48, 8
    %v53 = vphi 0.0, %v362
  $region16: #{hcapsnet_forward.9} parent=0 // loop_header_branch
    %51 = sbr.rel (%p49) target = $region20
  $region17: #{hcapsnet_forward.9} parent=0 // loop_body
    %s54 = ssub.s32 7, %s48
    %v55 = vpack.c.bf16 %v53, %v53
    %v57 = vperm.slane %v46, 0
    %v58 = vperm.slane %v46, 1
    %v59 = vperm.slane %v46, 2
    %v95 = vunpack.c.l.b16 %v14
    %v96 = vunpack.c.h.b16 %v14
    %v97 = vunpack.c.l.b16 %v15
    %v98 = vunpack.c.l.b16 %v16
    %v99 = vunpack.c.h.b16 %v16
    %v100 = vunpack.c.l.b16 %v17
    %v101 = vunpack.c.l.b16 %v18
    %v102 = vunpack.c.h.b16 %v18
    %v103 = vunpack.c.l.b16 %v19
    %v104 = vunpack.c.l.b16 %v20
    %v105 = vunpack.c.h.b16 %v20
    %v106 = vunpack.c.l.b16 %v21
    %v107 = vunpack.c.l.b16 %v22
    %v108 = vunpack.c.h.b16 %v22
    %v109 = vunpack.c.l.b16 %v23
    %v110 = vunpack.c.l.b16 %v24
    %v111 = vunpack.c.h.b16 %v24
    %v112 = vunpack.c.l.b16 %v25
    %v113 = vunpack.c.l.b16 %v26
    %v114 = vunpack.c.h.b16 %v26
    %v115 = vunpack.c.l.b16 %v27
    %v116 = vunpack.c.l.b16 %v28
    %v117 = vunpack.c.h.b16 %v28
    %v118 = vunpack.c.l.b16 %v29
    %v119 = vunpack.c.l.b16 %v30
    %v120 = vunpack.c.h.b16 %v30
    %v121 = vunpack.c.l.b16 %v31
    %v122 = vunpack.c.l.b16 %v32
    %v123 = vunpack.c.h.b16 %v32
    %v124 = vunpack.c.l.b16 %v33
    %v125 = vunpack.c.l.b16 %v34
    %v126 = vunpack.c.h.b16 %v34
    %v127 = vunpack.c.l.b16 %v35
    %v128 = vunpack.c.l.b16 %v36
    %v129 = vunpack.c.h.b16 %v36
    %v130 = vunpack.c.l.b16 %v37
    %v131 = vunpack.c.l.b16 %v38
    %v132 = vunpack.c.h.b16 %v38
    %v133 = vunpack.c.l.b16 %v39
    %v134 = vunpack.c.l.b16 %v40
    %v135 = vunpack.c.h.b16 %v40
    %v136 = vunpack.c.l.b16 %v41
    %v137 = vunpack.c.l.b16 %v42
    %v138 = vunpack.c.h.b16 %v42
    %v139 = vunpack.c.l.b16 %v43
    %v140 = vunpack.c.l.b16 %v44
    %v141 = vunpack.c.h.b16 %v44
    %v142 = vunpack.c.l.b16 %v45
    %v143 = vpack.c.b16 %v98, %v95
    %v144 = vpack.c.b16 %v99, %v96
    %v145 = vpack.c.b16 %v100, %v97
    %v146 = vpack.c.b16 %v104, %v101
    %v147 = vpack.c.b16 %v105, %v102
    %v148 = vpack.c.b16 %v106, %v103
    %v149 = vpack.c.b16 %v110, %v107
    %v150 = vpack.c.b16 %v111, %v108
    %v151 = vpack.c.b16 %v112, %v109
    %v152 = vpack.c.b16 %v116, %v113
    %v153 = vpack.c.b16 %v117, %v114
    %v154 = vpack.c.b16 %v118, %v115
    %v155 = vpack.c.b16 %v122, %v119
    %v156 = vpack.c.b16 %v123, %v120
    %v157 = vpack.c.b16 %v124, %v121
    %v158 = vpack.c.b16 %v128, %v125
    %v159 = vpack.c.b16 %v129, %v126
    %v160 = vpack.c.b16 %v130, %v127
    %v161 = vpack.c.b16 %v134, %v131
    %v162 = vpack.c.b16 %v135, %v132
    %v163 = vpack.c.b16 %v136, %v133
    %v164 = vpack.c.b16 %v140, %v137
    %v165 = vpack.c.b16 %v141, %v138
    %v166 = vpack.c.b16 %v142, %v139
    %191 = vmatpush.bf16.msra.mxu0 %v164
    %192 = vmatpush.bf16.msra.mxu0 %v161
    %193 = vmatpush.bf16.msra.mxu0 %v158
    %194 = vmatpush.bf16.msra.mxu0 %v155
    %195 = vmatpush.bf16.msra.mxu0 %v152
    %196 = vmatpush.bf16.msra.mxu0 %v149
    %197 = vmatpush.bf16.msra.mxu0 %v146
    %198 = vmatpush.bf16.msra.mxu0 %v143
    %199 = vmatmul.bf16.gmra.mxu0 %v55
    %v200 = vpop.f32.mrf.mxu0
    %v201 = vadd.f32 %v57, %v200
    %v202 = vpop.f32.mrf.mxu0
    %203 = vdwg.mxu0
    %204 = vmatpush.bf16.msra.mxu0 %v165
    %205 = vmatpush.bf16.msra.mxu0 %v162
    %206 = vmatpush.bf16.msra.mxu0 %v159
    %207 = vmatpush.bf16.msra.mxu0 %v156
    %208 = vmatpush.bf16.msra.mxu0 %v153
    %209 = vmatpush.bf16.msra.mxu0 %v150
    %210 = vmatpush.bf16.msra.mxu0 %v147
    %211 = vmatpush.bf16.msra.mxu0 %v144
    %212 = vmatmul.bf16.gmra.mxu0 %v55
    %v213 = vpop.f32.mrf.mxu0
    %v214 = vadd.f32 %v58, %v213
    %v215 = vpop.f32.mrf.mxu0
    %216 = vdwg.mxu0
    %217 = vmatpush.bf16.msra.mxu0 %v166
    %218 = vmatpush.bf16.msra.mxu0 %v163
    %219 = vmatpush.bf16.msra.mxu0 %v160
    %220 = vmatpush.bf16.msra.mxu0 %v157
    %221 = vmatpush.bf16.msra.mxu0 %v154
    %222 = vmatpush.bf16.msra.mxu0 %v151
    %223 = vmatpush.bf16.msra.mxu0 %v148
    %224 = vmatpush.bf16.msra.mxu0 %v145
    %225 = vmatmul.bf16.gmra.mxu0 %v55
    %v226 = vpop.f32.mrf.mxu0
    %v227 = vadd.f32 %v59, %v226
    %v228 = vpop.f32.mrf.mxu0
    %229 = vdwg.mxu0
    %s230 = smul.u32 %s48, 3
    %s231 = smul.addr %s230, 4
    %s232 = scalar_lea.vmem %s0, %s231
    %v233 = vld [vmem:[%s232] sm:$0xff]
    %v234 = vunpack.c.l.bf16 %v233
    %v235 = vunpack.c.h.bf16 %v233
    %s236 = smul.u32 %s54, 3
    %s237 = smul.addr %s236, 4
    %s238 = scalar_lea.vmem %s0, %s237
    %v239 = vld [vmem:[%s238] sm:$0xff]
    %v240 = vld [vmem:[%s238 + $0x8] sm:$0xf]
    %243 = vrot.lane.b32.xlu0 %v239, 64
    %v244 = vpop.permute.xlu0 %243
    %245 = vrot.lane.b32.xlu0 %v240, 64
    %v246 = vpop.permute.xlu0 %245
    %v247 = vrot.slane %v244, 4
    %v248 = vrot.slane %v246, 4
    %vm249 = vcmask 1043456
    %v250 = vsel %vm249, %v247, %v248
    %vm251 = vcmask 523264
    %v252 = vsel %vm251, %v250, %v246
    %v254 = vunpack.c.l.bf16 %v252
    %v255 = vunpack.c.h.bf16 %v252
    %v256 = vadd.f32 %v234, %v201
    %v257 = vxor.u32 %v256, 2147483648
    %v258 = vmul.f32 %v257, 1.442695
    %v259 = vpow.pop %v258
    %v260 = vadd.f32 %v259, 1.0
    %v261 = vrcp.pop %v260
    %v262 = vmul.f32 %v260, %v261
    %v263 = vsub.f32 1.0, %v262
    %v264 = vmul.f32 %v261, %v263
    %v265 = vadd.f32 %v261, %v264
    %vm266 = vweird.f32 %v260
    %vm267 = vweird.f32 %v261
    %vm268 = vmor %vm266, %vm267
    %v269 = vsel %vm268, %v261, %v265
    %v270 = vand.u32 2147483647, %v260
    %vm271 = vcmp.eq.f32.partialorder %v270, 8.507059e+37
    %v272 = vand.u32 %v260, 2147483648
    %v273 = vor.u32 1.1754944e-38, %v272
    %v274 = vsel %vm271, %v273, %v269
    %v275 = vmul.f32 1.0, %v274
    %v276 = vmul.f32 %v275, %v214
    %v277 = vadd.f32 %v235, %v276
    %v278 = vtanh.pop %v277
    %v279 = vsub.f32 1.0, %v275
    %281 = vrot.lane.b32.xlu0 %v278, 64
    %v282 = vpop.permute.xlu0 %281
    %v284 = vmul.f32 %v279, %v282
    %286 = vrot.lane.b32.xlu0 %v53, 64
    %v287 = vpop.permute.xlu0 %286
    %v289 = vmul.f32 %v275, %v287
    %v290 = vadd.f32 %v284, %v289
    %292 = vrot.lane.b32.xlu0 %v214, 64
    %v293 = vpop.permute.xlu0 %292
    %v295 = vadd.f32 %v254, %v293
    %v296 = vxor.u32 %v295, 2147483648
    %v297 = vmul.f32 %v296, 1.442695
    %v298 = vpow.pop %v297
    %v299 = vadd.f32 %v298, 1.0
    %v300 = vrcp.pop %v299
    %v301 = vmul.f32 %v299, %v300
    %v302 = vsub.f32 1.0, %v301
    %v303 = vmul.f32 %v300, %v302
    %v304 = vadd.f32 %v300, %v303
    %vm305 = vweird.f32 %v299
    %vm306 = vweird.f32 %v300
    %vm307 = vmor %vm305, %vm306
    %v308 = vsel %vm307, %v300, %v304
    %v309 = vand.u32 2147483647, %v299
    %vm310 = vcmp.eq.f32.partialorder %v309, 8.507059e+37
    %v311 = vand.u32 %v299, 2147483648
    %v312 = vor.u32 1.1754944e-38, %v311
    %v313 = vsel %vm310, %v312, %v308
    %v314 = vmul.f32 1.0, %v313
    %316 = vrot.lane.b32.xlu0 %v227, 64
    %v317 = vpop.permute.xlu0 %316
    %v319 = vadd.f32 %v254, %v317
    %v320 = vxor.u32 %v319, 2147483648
    %v321 = vmul.f32 %v320, 1.442695
    %v322 = vpow.pop %v321
    %v323 = vadd.f32 %v322, 1.0
    %v324 = vrcp.pop %v323
    %v325 = vmul.f32 %v323, %v324
    %v326 = vsub.f32 1.0, %v325
    %v327 = vmul.f32 %v324, %v326
    %v328 = vadd.f32 %v324, %v327
    %vm329 = vweird.f32 %v323
    %vm330 = vweird.f32 %v324
    %vm331 = vmor %vm329, %vm330
    %v332 = vsel %vm331, %v324, %v328
    %v333 = vand.u32 2147483647, %v323
    %vm334 = vcmp.eq.f32.partialorder %v333, 8.507059e+37
    %v335 = vand.u32 %v323, 2147483648
    %v336 = vor.u32 1.1754944e-38, %v335
    %v337 = vsel %vm334, %v336, %v332
    %v338 = vmul.f32 1.0, %v337
    %v339 = vmul.f32 %v314, %v317
    %v340 = vadd.f32 %v255, %v339
    %v341 = vtanh.pop %v340
    %v342 = vsub.f32 1.0, %v338
    %344 = vrot.lane.b32.xlu0 %v341, 64
    %v345 = vpop.permute.xlu0 %344
    %v347 = vmul.f32 %v342, %v345
    %v348 = vmul.f32 %v338, %v53
    %v349 = vadd.f32 %v347, %v348
    %351 = vrot.lane.b32.xlu0 %v290, 64
    %v352 = vpop.permute.xlu0 %351
    %s354 = smul.u32 %s48, 8
    %s355 = scalar_lea.vmem %s3, %s354
    %vm356 = vcmask 523264
    %357 = vst.msk [vmem:[%s355] sm:$0xff] %vm356, %v352
    %s358 = smul.u32 %s54, 8
    %s359 = scalar_lea.vmem %s3, %s358
    %vm360 = vcmask 1048064
    %361 = vst.msk [vmem:[%s359] sm:$0xff] %vm360, %v349
    %v362 = vsel %vm356, %v352, %v349
  $region18: #{hcapsnet_forward.9} parent=0 // loop_footer
    %s52 = sadd.s32 1, %s48
  $region19: #{hcapsnet_forward.9} parent=0 // loop_footer_branch
    %47 = sbr.rel target = $region15
  $region20: #{hcapsnet_forward.9} parent=0 // loop_exit
    _
  // Predicated region
  $region21: #{hcapsnet_forward.9} parent=0 // pred_check
    _
  $region22: #{hcapsnet_forward.9} parent=0 // pred_check_branch
    %364 = sbr.rel (0) target = $region24
  $region23: #{hcapsnet_forward.9} parent=0 // pred_region
    _
  $region24: #{hcapsnet_forward.9} parent=0 // pred_fallthru
    _
  // Predicated region
  $region25: #{hcapsnet_forward.9} parent=0 // pred_check
    _
  $region26: #{hcapsnet_forward.9} parent=0 // pred_check_branch
    %366 = sbr.rel (0) target = $region28
  $region27: #{hcapsnet_forward.9} parent=0 // pred_region
    _
  $region28: #{hcapsnet_forward.9} parent=0 // pred_fallthru
    _

// kernel: hcapsnet_forward.10
$region0: #{hcapsnet_forward.10}
  #allocation0 [shape = 'u32[]', space=smem, size = 0x4, offset = 0x4, fixed_abs, tag = 'smem constant byte address 0x4 - core index']
  #allocation1 [shape = 'u32[72,128]{1,0:T(1,128)}', space=vmem, size = 0x9000, scoped, tag = 'internal scratch']
  %s0 = inlined_call_operand.vmem [shape: f32[8,8,128], index: 0, kind: input, shape index: {}]
  %s1 = inlined_call_operand.hbm [shape: bf16[128,128], index: 1, kind: input, shape index: {}]
  %s2 = inlined_call_operand.vmem [shape: f32[1,128], index: 2, kind: input, shape index: {}]
  %s3 = inlined_call_operand.vmem [shape: f32[1,128], index: 3, kind: input, shape index: {}]
  %s4 = inlined_call_operand.vmem [shape: f32[8,128], index: 4, kind: output, shape index: {0}]
  %s5 = inlined_call_operand.vmem [shape: f32[8,8], index: 5, kind: output, shape index: {1}]
  %6 = xla_tuple %s4, %s5
  %s7 = sld [smem:[#allocation0]]
  $region38: #{hcapsnet_forward.10} parent=0
    _
  %s9 = ssub.s32 1, %s7
  %s10 = scalar_select 0, %s9, %s7
  $region1: #{hcapsnet_forward.10} parent=0
    #allocation2 [shape = 'u8[32768]{0}', space=vmem, size = 0x8000, scoped, tag = 'input window, operand 1, single buffered']
    #allocation3 [shape = 's32[1]{0}', space=sflag, size = 0x4, scoped, tag = 'scoped memory for hcapsnet_forward.10']
    %11 = vsyncpa [#allocation3], 0
    // Predicated region
    $region2: #{hcapsnet_forward.10} parent=1 // pred_check
      _
    $region3: #{hcapsnet_forward.10} parent=1 // pred_check_branch
      %13 = sbr.rel (0) target = $region5
    $region4: #{hcapsnet_forward.10} parent=1 // pred_region
      _
    $region5: #{hcapsnet_forward.10} parent=1 // pred_fallthru
      _
    // Predicated region
    $region6: #{hcapsnet_forward.10} parent=1 // pred_check
      _
    $region7: #{hcapsnet_forward.10} parent=1 // pred_check_branch
      %15 = sbr.rel (0) target = $region9
    $region8: #{hcapsnet_forward.10} parent=1 // pred_region
      %17 = vsyncadd [#allocation3], 0
      %s18 = sshll.u32 %s1, 4
      %s19 = int_to_ptr.hbm [resolvable:$true] %s18
      %s20 = sshll.u32 [#allocation2], 4
      %s21 = int_to_ptr.vmem [resolvable:$true] %s20
      %26 = dma.hbm_to_vmem [thread:$0]  %s19, 1024, %s21, [#allocation3], 64, 64, 4
    $region9: #{hcapsnet_forward.10} parent=1 // pred_fallthru
      _
    // Predicated region
    $region10: #{hcapsnet_forward.10} parent=1 // pred_check
      _
    $region11: #{hcapsnet_forward.10} parent=1 // pred_check_branch
      %28 = sbr.rel (0) target = $region13
    $region12: #{hcapsnet_forward.10} parent=1 // pred_region
      _
    $region13: #{hcapsnet_forward.10} parent=1 // pred_fallthru
      _
    // Predicated region
    $region14: #{hcapsnet_forward.10} parent=1 // pred_check
      _
    $region15: #{hcapsnet_forward.10} parent=1 // pred_check_branch
      %30 = sbr.rel (0) target = $region17
    $region16: #{hcapsnet_forward.10} parent=1 // pred_region
      _
    $region17: #{hcapsnet_forward.10} parent=1 // pred_fallthru
      _
    // Predicated region
    $region18: #{hcapsnet_forward.10} parent=1 // pred_check
      _
    $region19: #{hcapsnet_forward.10} parent=1 // pred_check_branch
      %32 = sbr.rel (0) target = $region21
    $region20: #{hcapsnet_forward.10} parent=1 // pred_region
      %34 = dma.done [#allocation3], 1024
    $region21: #{hcapsnet_forward.10} parent=1 // pred_fallthru
      _
    %v35 = vld [vmem:[#allocation2] sm:$0xf]
    %v36 = vld [vmem:[#allocation2 + $0x4] sm:$0xf]
    %v37 = vld [vmem:[#allocation2 + $0x8] sm:$0xf]
    %v38 = vld [vmem:[#allocation2 + $0xc] sm:$0xf]
    %v39 = vld [vmem:[#allocation2 + $0x10] sm:$0xf]
    %v40 = vld [vmem:[#allocation2 + $0x14] sm:$0xf]
    %v41 = vld [vmem:[#allocation2 + $0x18] sm:$0xf]
    %v42 = vld [vmem:[#allocation2 + $0x1c] sm:$0xf]
    %v43 = vld [vmem:[#allocation2 + $0x20] sm:$0xf]
    %v44 = vld [vmem:[#allocation2 + $0x24] sm:$0xf]
    %v45 = vld [vmem:[#allocation2 + $0x28] sm:$0xf]
    %v46 = vld [vmem:[#allocation2 + $0x2c] sm:$0xf]
    %v47 = vld [vmem:[#allocation2 + $0x30] sm:$0xf]
    %v48 = vld [vmem:[#allocation2 + $0x34] sm:$0xf]
    %v49 = vld [vmem:[#allocation2 + $0x38] sm:$0xf]
    %v50 = vld [vmem:[#allocation2 + $0x3c] sm:$0xf]
    %v51 = vld [vmem:[%s2] sm:$0x1]
    %v52 = vld [vmem:[%s3] sm:$0x1]
    %v53 = vld [vmem:[%s0] sm:$0xff]
    %v54 = vpack.c.bf16 %v53, %v53
    %v56 = vperm.slane %v51, 0
    %v74 = vunpack.c.l.b16 %v35
    %v75 = vunpack.c.l.b16 %v36
    %v76 = vunpack.c.l.b16 %v37
    %v77 = vunpack.c.l.b16 %v38
    %v78 = vunpack.c.l.b16 %v39
    %v79 = vunpack.c.l.b16 %v40
    %v80 = vunpack.c.l.b16 %v41
    %v81 = vunpack.c.l.b16 %v42
    %v82 = vunpack.c.l.b16 %v43
    %v83 = vunpack.c.l.b16 %v44
    %v84 = vunpack.c.l.b16 %v45
    %v85 = vunpack.c.l.b16 %v46
    %v86 = vunpack.c.l.b16 %v47
    %v87 = vunpack.c.l.b16 %v48
    %v88 = vunpack.c.l.b16 %v49
    %v89 = vunpack.c.l.b16 %v50
    %v90 = vpack.c.b16 %v75, %v74
    %v91 = vpack.c.b16 %v77, %v76
    %v92 = vpack.c.b16 %v79, %v78
    %v93 = vpack.c.b16 %v81, %v80
    %v94 = vpack.c.b16 %v83, %v82
    %v95 = vpack.c.b16 %v85, %v84
    %v96 = vpack.c.b16 %v87, %v86
    %v97 = vpack.c.b16 %v89, %v88
    %106 = vmatpush.bf16.msra.mxu0 %v97
    %107 = vmatpush.bf16.msra.mxu0 %v96
    %108 = vmatpush.bf16.msra.mxu0 %v95
    %109 = vmatpush.bf16.msra.mxu0 %v94
    %110 = vmatpush.bf16.msra.mxu0 %v93
    %111 = vmatpush.bf16.msra.mxu0 %v92
    %112 = vmatpush.bf16.msra.mxu0 %v91
    %113 = vmatpush.bf16.msra.mxu0 %v90
    %114 = vmatmul.bf16.gmra.mxu0 %v54
    %v115 = vpop.f32.mrf.mxu0
    %v116 = vadd.f32 %v56, %v115
    %v117 = vpop.f32.mrf.mxu0
    %118 = vdwg.mxu0
    %v119 = vtanh.pop %v116
    %v121 = vperm.slane %v52, 0
    %v123 = vmul.f32 %v119, %v121
    %124 = vadd.xlane.f32.xlu0 %v123
    %v125 = vpop.xlane.xlu0 %124
    %s126 = scalar_lea.vmem %s0, 8
    %v127 = vld [vmem:[%s126] sm:$0xff]
    %v128 = vpack.c.bf16 %v127, %v127
    %129 = vmatpush.bf16.msra.mxu0 %v97
    %130 = vmatpush.bf16.msra.mxu0 %v96
    %131 = vmatpush.bf16.msra.mxu0 %v95
    %132 = vmatpush.bf16.msra.mxu0 %v94
    %133 = vmatpush.bf16.msra.mxu0 %v93
    %134 = vmatpush.bf16.msra.mxu0 %v92
    %135 = vmatpush.bf16.msra.mxu0 %v91
    %136 = vmatpush.bf16.msra.mxu0 %v90
    %137 = vmatmul.bf16.gmra.mxu0 %v128
    %v138 = vpop.f32.mrf.mxu0
    %v139 = vadd.f32 %v56, %v138
    %v140 = vpop.f32.mrf.mxu0
    %141 = vdwg.mxu0
    %v142 = vtanh.pop %v139
    %v143 = vmul.f32 %v142, %v121
    %144 = vadd.xlane.f32.xlu0 %v143
    %v145 = vpop.xlane.xlu0 %144
    %s146 = scalar_lea.vmem %s0, 16
    %v147 = vld [vmem:[%s146] sm:$0xff]
    %v148 = vpack.c.bf16 %v147, %v147
    %149 = vmatpush.bf16.msra.mxu0 %v97
    %150 = vmatpush.bf16.msra.mxu0 %v96
    %151 = vmatpush.bf16.msra.mxu0 %v95
    %152 = vmatpush.bf16.msra.mxu0 %v94
    %153 = vmatpush.bf16.msra.mxu0 %v93
    %154 = vmatpush.bf16.msra.mxu0 %v92
    %155 = vmatpush.bf16.msra.mxu0 %v91
    %156 = vmatpush.bf16.msra.mxu0 %v90
    %157 = vmatmul.bf16.gmra.mxu0 %v148
    %v158 = vpop.f32.mrf.mxu0
    %v159 = vadd.f32 %v56, %v158
    %v160 = vpop.f32.mrf.mxu0
    %161 = vdwg.mxu0
    %v162 = vtanh.pop %v159
    %v163 = vmul.f32 %v162, %v121
    %164 = vadd.xlane.f32.xlu0 %v163
    %v165 = vpop.xlane.xlu0 %164
    %s166 = scalar_lea.vmem %s0, 24
    %v167 = vld [vmem:[%s166] sm:$0xff]
    %v168 = vpack.c.bf16 %v167, %v167
    %169 = vmatpush.bf16.msra.mxu0 %v97
    %170 = vmatpush.bf16.msra.mxu0 %v96
    %171 = vmatpush.bf16.msra.mxu0 %v95
    %172 = vmatpush.bf16.msra.mxu0 %v94
    %173 = vmatpush.bf16.msra.mxu0 %v93
    %174 = vmatpush.bf16.msra.mxu0 %v92
    %175 = vmatpush.bf16.msra.mxu0 %v91
    %176 = vmatpush.bf16.msra.mxu0 %v90
    %177 = vmatmul.bf16.gmra.mxu0 %v168
    %v178 = vpop.f32.mrf.mxu0
    %v179 = vadd.f32 %v56, %v178
    %v180 = vpop.f32.mrf.mxu0
    %181 = vdwg.mxu0
    %v182 = vtanh.pop %v179
    %v183 = vmul.f32 %v182, %v121
    %184 = vadd.xlane.f32.xlu0 %v183
    %v185 = vpop.xlane.xlu0 %184
    %s186 = scalar_lea.vmem %s0, 32
    %v187 = vld [vmem:[%s186] sm:$0xff]
    %v188 = vpack.c.bf16 %v187, %v187
    %189 = vmatpush.bf16.msra.mxu0 %v97
    %190 = vmatpush.bf16.msra.mxu0 %v96
    %191 = vmatpush.bf16.msra.mxu0 %v95
    %192 = vmatpush.bf16.msra.mxu0 %v94
    %193 = vmatpush.bf16.msra.mxu0 %v93
    %194 = vmatpush.bf16.msra.mxu0 %v92
    %195 = vmatpush.bf16.msra.mxu0 %v91
    %196 = vmatpush.bf16.msra.mxu0 %v90
    %197 = vmatmul.bf16.gmra.mxu0 %v188
    %v198 = vpop.f32.mrf.mxu0
    %v199 = vadd.f32 %v56, %v198
    %v200 = vpop.f32.mrf.mxu0
    %201 = vdwg.mxu0
    %v202 = vtanh.pop %v199
    %v203 = vmul.f32 %v202, %v121
    %204 = vadd.xlane.f32.xlu0 %v203
    %v205 = vpop.xlane.xlu0 %204
    %s206 = scalar_lea.vmem %s0, 40
    %v207 = vld [vmem:[%s206] sm:$0xff]
    %v208 = vpack.c.bf16 %v207, %v207
    %209 = vmatpush.bf16.msra.mxu0 %v97
    %210 = vmatpush.bf16.msra.mxu0 %v96
    %211 = vmatpush.bf16.msra.mxu0 %v95
    %212 = vmatpush.bf16.msra.mxu0 %v94
    %213 = vmatpush.bf16.msra.mxu0 %v93
    %214 = vmatpush.bf16.msra.mxu0 %v92
    %215 = vmatpush.bf16.msra.mxu0 %v91
    %216 = vmatpush.bf16.msra.mxu0 %v90
    %217 = vmatmul.bf16.gmra.mxu0 %v208
    %v218 = vpop.f32.mrf.mxu0
    %v219 = vadd.f32 %v56, %v218
    %v220 = vpop.f32.mrf.mxu0
    %221 = vdwg.mxu0
    %v222 = vtanh.pop %v219
    %v223 = vmul.f32 %v222, %v121
    %224 = vadd.xlane.f32.xlu0 %v223
    %v225 = vpop.xlane.xlu0 %224
    %s226 = scalar_lea.vmem %s0, 48
    %v227 = vld [vmem:[%s226] sm:$0xff]
    %v228 = vpack.c.bf16 %v227, %v227
    %229 = vmatpush.bf16.msra.mxu0 %v97
    %230 = vmatpush.bf16.msra.mxu0 %v96
    %231 = vmatpush.bf16.msra.mxu0 %v95
    %232 = vmatpush.bf16.msra.mxu0 %v94
    %233 = vmatpush.bf16.msra.mxu0 %v93
    %234 = vmatpush.bf16.msra.mxu0 %v92
    %235 = vmatpush.bf16.msra.mxu0 %v91
    %236 = vmatpush.bf16.msra.mxu0 %v90
    %237 = vmatmul.bf16.gmra.mxu0 %v228
    %v238 = vpop.f32.mrf.mxu0
    %v239 = vadd.f32 %v56, %v238
    %v240 = vpop.f32.mrf.mxu0
    %241 = vdwg.mxu0
    %v242 = vtanh.pop %v239
    %v243 = vmul.f32 %v242, %v121
    %244 = vadd.xlane.f32.xlu0 %v243
    %v245 = vpop.xlane.xlu0 %244
    %s246 = scalar_lea.vmem %s0, 56
    %v247 = vld [vmem:[%s246] sm:$0xff]
    %v248 = vpack.c.bf16 %v247, %v247
    %249 = vmatpush.bf16.msra.mxu0 %v97
    %250 = vmatpush.bf16.msra.mxu0 %v96
    %251 = vmatpush.bf16.msra.mxu0 %v95
    %252 = vmatpush.bf16.msra.mxu0 %v94
    %253 = vmatpush.bf16.msra.mxu0 %v93
    %254 = vmatpush.bf16.msra.mxu0 %v92
    %255 = vmatpush.bf16.msra.mxu0 %v91
    %256 = vmatpush.bf16.msra.mxu0 %v90
    %257 = vmatmul.bf16.gmra.mxu0 %v248
    %v258 = vpop.f32.mrf.mxu0
    %v259 = vadd.f32 %v56, %v258
    %v260 = vpop.f32.mrf.mxu0
    %261 = vdwg.mxu0
    %v262 = vtanh.pop %v259
    %v263 = vmul.f32 %v262, %v121
    %264 = vadd.xlane.f32.xlu0 %v263
    %v265 = vpop.xlane.xlu0 %264
    %vm266 = vcmask 7168
    %v267 = vsel %vm266, %v125, %v145
    %vm268 = vcmask 15360
    %v269 = vsel %vm268, %v267, %v165
    %vm270 = vcmask 23552
    %v271 = vsel %vm270, %v269, %v185
    %vm272 = vcmask 31744
    %v273 = vsel %vm272, %v271, %v205
    %vm274 = vcmask 39936
    %v275 = vsel %vm274, %v273, %v225
    %vm276 = vcmask 48128
    %v277 = vsel %vm276, %v275, %v245
    %vm278 = vcmask 56320
    %v279 = vsel %vm278, %v277, %v265
    %vm280 = vcmask 64512
    %v281 = vsel %vm280, %v279, -inf
    %282 = vmax.xlane.f32.xlu0 %v281
    %v283 = vpop.xlane.xlu0 %282
    %v284 = vsub.f32 %v279, %v283
    %v285 = vmul.f32 %v284, 1.442695
    %v286 = vpow.pop %v285
    %v287 = vsel %vm280, %v286, 0.0
    %288 = vadd.xlane.f32.xlu0 %v287
    %v289 = vpop.xlane.xlu0 %288
    %v290 = vrcp.pop %v289
    %v291 = vmul.f32 %v289, %v290
    %v292 = vsub.f32 1.0, %v291
    %v293 = vmul.f32 %v290, %v292
    %v294 = vadd.f32 %v290, %v293
    %vm295 = vweird.f32 %v289
    %vm296 = vweird.f32 %v290
    %vm297 = vmor %vm295, %vm296
    %v298 = vsel %vm297, %v290, %v294
    %v299 = vand.u32 2147483647, %v289
    %vm300 = vcmp.eq.f32.partialorder %v299, 8.507059e+37
    %v301 = vand.u32 %v289, 2147483648
    %v302 = vor.u32 1.1754944e-38, %v301
    %v303 = vsel %vm300, %v302, %v298
    %v304 = vmul.f32 %v286, %v303
    %305 = vst.msk [vmem:[%s5] sm:$0xff] %vm280, %v304
    %v306 = vld [vmem:[%s0] sm:$0xff]
    %308 = vset.pattern.permute.xlu0 0
    %309 = vperm.xlu0 %308, %v304
    %v310 = vpop.permute.xlu0 %309
    %v312 = vmul.f32 %v310, %v306
    %v313 = vld [vmem:[%s126] sm:$0xff]
    %314 = vset.pattern.permute.xlu0 1
    %315 = vperm.xlu0 %314, %v304
    %v316 = vpop.permute.xlu0 %315
    %v318 = vmul.f32 %v316, %v313
    %v319 = vadd.f32 %v312, %v318
    %v320 = vld [vmem:[%s146] sm:$0xff]
    %321 = vset.pattern.permute.xlu0 2
    %322 = vperm.xlu0 %321, %v304
    %v323 = vpop.permute.xlu0 %322
    %v325 = vmul.f32 %v323, %v320
    %v326 = vadd.f32 %v319, %v325
    %v327 = vld [vmem:[%s166] sm:$0xff]
    %328 = vset.pattern.permute.xlu0 3
    %329 = vperm.xlu0 %328, %v304
    %v330 = vpop.permute.xlu0 %329
    %v332 = vmul.f32 %v330, %v327
    %v333 = vadd.f32 %v326, %v332
    %v334 = vld [vmem:[%s186] sm:$0xff]
    %335 = vset.pattern.permute.xlu0 4
    %336 = vperm.xlu0 %335, %v304
    %v337 = vpop.permute.xlu0 %336
    %v339 = vmul.f32 %v337, %v334
    %v340 = vadd.f32 %v333, %v339
    %v341 = vld [vmem:[%s206] sm:$0xff]
    %342 = vset.pattern.permute.xlu0 5
    %343 = vperm.xlu0 %342, %v304
    %v344 = vpop.permute.xlu0 %343
    %v346 = vmul.f32 %v344, %v341
    %v347 = vadd.f32 %v340, %v346
    %v348 = vld [vmem:[%s226] sm:$0xff]
    %349 = vset.pattern.permute.xlu0 6
    %350 = vperm.xlu0 %349, %v304
    %v351 = vpop.permute.xlu0 %350
    %v353 = vmul.f32 %v351, %v348
    %v354 = vadd.f32 %v347, %v353
    %v355 = vld [vmem:[%s246] sm:$0xff]
    %356 = vset.pattern.permute.xlu0 7
    %357 = vperm.xlu0 %356, %v304
    %v358 = vpop.permute.xlu0 %357
    %v360 = vmul.f32 %v358, %v355
    %v361 = vadd.f32 %v354, %v360
    %362 = vst [vmem:[%s4] sm:$0xff] %v361
    // Predicated region
    $region22: #{hcapsnet_forward.10} parent=1 // pred_check
      _
    $region23: #{hcapsnet_forward.10} parent=1 // pred_check_branch
      %364 = sbr.rel (0) target = $region25
    $region24: #{hcapsnet_forward.10} parent=1 // pred_region
      _
    $region25: #{hcapsnet_forward.10} parent=1 // pred_fallthru
      _
    // Predicated region
    $region26: #{hcapsnet_forward.10} parent=1 // pred_check
      _
    $region27: #{hcapsnet_forward.10} parent=1 // pred_check_branch
      %366 = sbr.rel (0) target = $region29
    $region28: #{hcapsnet_forward.10} parent=1 // pred_region
      _
    $region29: #{hcapsnet_forward.10} parent=1 // pred_fallthru
      _
    // Predicated region
    $region30: #{hcapsnet_forward.10} parent=1 // pred_check
      _
    $region31: #{hcapsnet_forward.10} parent=1 // pred_check_branch
      %368 = sbr.rel (0) target = $region33
    $region32: #{hcapsnet_forward.10} parent=1 // pred_region
      _
    $region33: #{hcapsnet_forward.10} parent=1 // pred_fallthru
      _
    // Predicated region
    $region34: #{hcapsnet_forward.10} parent=1 // pred_check
      _
    $region35: #{hcapsnet_forward.10} parent=1 // pred_check_branch
      %370 = sbr.rel (0) target = $region37
    $region36: #{hcapsnet_forward.10} parent=1 // pred_region
      _
    $region37: #{hcapsnet_forward.10} parent=1 // pred_fallthru
      _
    %371 = vsyncpa [#allocation3], 1

// kernel: hcapsnet_forward.14
$region0: #{hcapsnet_forward.14}
  #allocation0 [shape = 'u32[]', space=smem, size = 0x4, offset = 0x4, fixed_abs, tag = 'smem constant byte address 0x4 - core index']
  #allocation1 [shape = 'u32[72,128]{1,0:T(1,128)}', space=vmem, size = 0x9000, scoped, tag = 'internal scratch']
  %s0 = inlined_call_operand.vmem [shape: f32[2,128], index: 0, kind: input, shape index: {}]
  %s1 = inlined_call_operand.hbm [shape: bf16[128,128], index: 1, kind: input, shape index: {}]
  %s2 = inlined_call_operand.vmem [shape: f32[1,128], index: 2, kind: input, shape index: {}]
  %s3 = inlined_call_operand.vmem [shape: f32[2,128], index: 3, kind: output, shape index: {}]
  %s4 = sld [smem:[#allocation0]]
  $region26: #{hcapsnet_forward.14} parent=0
    _
  %s6 = ssub.s32 1, %s4
  %s7 = scalar_select 0, %s6, %s4
  $region1: #{hcapsnet_forward.14} parent=0
    #allocation2 [shape = 'u8[32768]{0}', space=vmem, size = 0x8000, scoped, tag = 'input window, operand 1, single buffered']
    #allocation3 [shape = 's32[1]{0}', space=sflag, size = 0x4, scoped, tag = 'scoped memory for hcapsnet_forward.14']
    %8 = vsyncpa [#allocation3], 0
    // Predicated region
    $region2: #{hcapsnet_forward.14} parent=1 // pred_check
      _
    $region3: #{hcapsnet_forward.14} parent=1 // pred_check_branch
      %10 = sbr.rel (0) target = $region5
    $region4: #{hcapsnet_forward.14} parent=1 // pred_region
      _
    $region5: #{hcapsnet_forward.14} parent=1 // pred_fallthru
      _
    // Predicated region
    $region6: #{hcapsnet_forward.14} parent=1 // pred_check
      _
    $region7: #{hcapsnet_forward.14} parent=1 // pred_check_branch
      %12 = sbr.rel (0) target = $region9
    $region8: #{hcapsnet_forward.14} parent=1 // pred_region
      %14 = vsyncadd [#allocation3], 0
      %s15 = sshll.u32 %s1, 4
      %s16 = int_to_ptr.hbm [resolvable:$true] %s15
      %s17 = sshll.u32 [#allocation2], 4
      %s18 = int_to_ptr.vmem [resolvable:$true] %s17
      %23 = dma.hbm_to_vmem [thread:$0]  %s16, 1024, %s18, [#allocation3], 64, 64, 4
    $region9: #{hcapsnet_forward.14} parent=1 // pred_fallthru
      _
    // Predicated region
    $region10: #{hcapsnet_forward.14} parent=1 // pred_check
      _
    $region11: #{hcapsnet_forward.14} parent=1 // pred_check_branch
      %25 = sbr.rel (0) target = $region13
    $region12: #{hcapsnet_forward.14} parent=1 // pred_region
      _
    $region13: #{hcapsnet_forward.14} parent=1 // pred_fallthru
      _
    // Predicated region
    $region14: #{hcapsnet_forward.14} parent=1 // pred_check
      _
    $region15: #{hcapsnet_forward.14} parent=1 // pred_check_branch
      %27 = sbr.rel (0) target = $region17
    $region16: #{hcapsnet_forward.14} parent=1 // pred_region
      %29 = dma.done [#allocation3], 1024
    $region17: #{hcapsnet_forward.14} parent=1 // pred_fallthru
      _
    %v30 = vld [vmem:[#allocation2] sm:$0xf]
    %v31 = vld [vmem:[#allocation2 + $0x4] sm:$0xf]
    %v32 = vld [vmem:[#allocation2 + $0x8] sm:$0xf]
    %v33 = vld [vmem:[#allocation2 + $0xc] sm:$0xf]
    %v34 = vld [vmem:[#allocation2 + $0x10] sm:$0xf]
    %v35 = vld [vmem:[#allocation2 + $0x14] sm:$0xf]
    %v36 = vld [vmem:[#allocation2 + $0x18] sm:$0xf]
    %v37 = vld [vmem:[#allocation2 + $0x1c] sm:$0xf]
    %v38 = vld [vmem:[#allocation2 + $0x20] sm:$0xf]
    %v39 = vld [vmem:[#allocation2 + $0x24] sm:$0xf]
    %v40 = vld [vmem:[#allocation2 + $0x28] sm:$0xf]
    %v41 = vld [vmem:[#allocation2 + $0x2c] sm:$0xf]
    %v42 = vld [vmem:[#allocation2 + $0x30] sm:$0xf]
    %v43 = vld [vmem:[#allocation2 + $0x34] sm:$0xf]
    %v44 = vld [vmem:[#allocation2 + $0x38] sm:$0xf]
    %v45 = vld [vmem:[#allocation2 + $0x3c] sm:$0xf]
    %v46 = vld [vmem:[%s0] sm:$0x3]
    %v47 = vpack.c.bf16 %v46, %v46
    %v48 = vld [vmem:[%s2] sm:$0x1]
    %v50 = vperm.slane %v48, 0
    %v68 = vunpack.c.l.b16 %v30
    %v69 = vunpack.c.l.b16 %v31
    %v70 = vunpack.c.l.b16 %v32
    %v71 = vunpack.c.l.b16 %v33
    %v72 = vunpack.c.l.b16 %v34
    %v73 = vunpack.c.l.b16 %v35
    %v74 = vunpack.c.l.b16 %v36
    %v75 = vunpack.c.l.b16 %v37
    %v76 = vunpack.c.l.b16 %v38
    %v77 = vunpack.c.l.b16 %v39
    %v78 = vunpack.c.l.b16 %v40
    %v79 = vunpack.c.l.b16 %v41
    %v80 = vunpack.c.l.b16 %v42
    %v81 = vunpack.c.l.b16 %v43
    %v82 = vunpack.c.l.b16 %v44
    %v83 = vunpack.c.l.b16 %v45
    %v84 = vpack.c.b16 %v69, %v68
    %v85 = vpack.c.b16 %v71, %v70
    %v86 = vpack.c.b16 %v73, %v72
    %v87 = vpack.c.b16 %v75, %v74
    %v88 = vpack.c.b16 %v77, %v76
    %v89 = vpack.c.b16 %v79, %v78
    %v90 = vpack.c.b16 %v81, %v80
    %v91 = vpack.c.b16 %v83, %v82
    %100 = vmatpush.bf16.msra.mxu0 %v91
    %101 = vmatpush.bf16.msra.mxu0 %v90
    %102 = vmatpush.bf16.msra.mxu0 %v89
    %103 = vmatpush.bf16.msra.mxu0 %v88
    %104 = vmatpush.bf16.msra.mxu0 %v87
    %105 = vmatpush.bf16.msra.mxu0 %v86
    %106 = vmatpush.bf16.msra.mxu0 %v85
    %107 = vmatpush.bf16.msra.mxu0 %v84
    %108 = vmatmul.bf16.gmra.mxu0 %v47
    %v109 = vpop.f32.mrf.mxu0
    %v110 = vadd.f32 %v50, %v109
    %v111 = vpop.f32.mrf.mxu0
    %112 = vdwg.mxu0
    %113 = vst [vmem:[%s3] sm:$0x3] %v110
    // Predicated region
    $region18: #{hcapsnet_forward.14} parent=1 // pred_check
      _
    $region19: #{hcapsnet_forward.14} parent=1 // pred_check_branch
      %115 = sbr.rel (0) target = $region21
    $region20: #{hcapsnet_forward.14} parent=1 // pred_region
      _
    $region21: #{hcapsnet_forward.14} parent=1 // pred_fallthru
      _
    // Predicated region
    $region22: #{hcapsnet_forward.14} parent=1 // pred_check
      _
    $region23: #{hcapsnet_forward.14} parent=1 // pred_check_branch
      %117 = sbr.rel (0) target = $region25
    $region24: #{hcapsnet_forward.14} parent=1 // pred_region
      _
    $region25: #{hcapsnet_forward.14} parent=1 // pred_fallthru
      _
    %118 = vsyncpa [#allocation3], 1

// kernel: hcapsnet_forward.13
$region0: #{hcapsnet_forward.13}
  #allocation0 [shape = 'u32[]', space=smem, size = 0x4, offset = 0x4, fixed_abs, tag = 'smem constant byte address 0x4 - core index']
  #allocation1 [shape = 'u32[72,128]{1,0:T(1,128)}', space=vmem, size = 0x9000, scoped, tag = 'internal scratch']
  %s0 = inlined_call_operand.vmem [shape: f32[4,2,128], index: 0, kind: input, shape index: {}]
  %s1 = inlined_call_operand.hbm [shape: bf16[128,128], index: 1, kind: input, shape index: {}]
  %s2 = inlined_call_operand.vmem [shape: f32[1,128], index: 2, kind: input, shape index: {}]
  %s3 = inlined_call_operand.vmem [shape: f32[1,128], index: 3, kind: input, shape index: {}]
  %s4 = inlined_call_operand.vmem [shape: f32[2,128], index: 4, kind: output, shape index: {0}]
  %s5 = inlined_call_operand.hbm [shape: f32[2,4], index: 5, kind: output, shape index: {1}]
  %6 = xla_tuple %s4, %s5
  %s7 = sld [smem:[#allocation0]]
  $region38: #{hcapsnet_forward.13} parent=0
    _
  %s9 = ssub.s32 1, %s7
  %s10 = scalar_select 0, %s9, %s7
  $region1: #{hcapsnet_forward.13} parent=0
    #allocation2 [shape = 'u8[32768]{0}', space=vmem, size = 0x8000, scoped, tag = 'input window, operand 1, single buffered']
    #allocation3 [shape = 's32[1]{0}', space=sflag, size = 0x4, scoped, tag = 'scoped memory for hcapsnet_forward.13']
    #allocation4 [shape = 's32[1]{0}', space=sflag, size = 0x4, scoped, tag = 'scoped memory for hcapsnet_forward.13']
    #allocation5 [shape = 'u8[1024]{0}', space=vmem, size = 0x400, scoped, tag = 'output window, operand 1, single buffered']
    %11 = vsyncpa [#allocation3], 0
    %12 = vsyncpa [#allocation4], 0
    // Predicated region
    $region2: #{hcapsnet_forward.13} parent=1 // pred_check
      _
    $region3: #{hcapsnet_forward.13} parent=1 // pred_check_branch
      %14 = sbr.rel (0) target = $region5
    $region4: #{hcapsnet_forward.13} parent=1 // pred_region
      _
    $region5: #{hcapsnet_forward.13} parent=1 // pred_fallthru
      _
    // Predicated region
    $region6: #{hcapsnet_forward.13} parent=1 // pred_check
      _
    $region7: #{hcapsnet_forward.13} parent=1 // pred_check_branch
      %16 = sbr.rel (0) target = $region9
    $region8: #{hcapsnet_forward.13} parent=1 // pred_region
      %18 = vsyncadd [#allocation3], 0
      %s19 = sshll.u32 %s1, 4
      %s20 = int_to_ptr.hbm [resolvable:$true] %s19
      %s21 = sshll.u32 [#allocation2], 4
      %s22 = int_to_ptr.vmem [resolvable:$true] %s21
      %27 = dma.hbm_to_vmem [thread:$0]  %s20, 1024, %s22, [#allocation3], 64, 64, 4
    $region9: #{hcapsnet_forward.13} parent=1 // pred_fallthru
      _
    // Predicated region
    $region10: #{hcapsnet_forward.13} parent=1 // pred_check
      _
    $region11: #{hcapsnet_forward.13} parent=1 // pred_check_branch
      %29 = sbr.rel (0) target = $region13
    $region12: #{hcapsnet_forward.13} parent=1 // pred_region
      _
    $region13: #{hcapsnet_forward.13} parent=1 // pred_fallthru
      _
    // Predicated region
    $region14: #{hcapsnet_forward.13} parent=1 // pred_check
      _
    $region15: #{hcapsnet_forward.13} parent=1 // pred_check_branch
      %31 = sbr.rel (0) target = $region17
    $region16: #{hcapsnet_forward.13} parent=1 // pred_region
      _
    $region17: #{hcapsnet_forward.13} parent=1 // pred_fallthru
      _
    // Predicated region
    $region18: #{hcapsnet_forward.13} parent=1 // pred_check
      _
    $region19: #{hcapsnet_forward.13} parent=1 // pred_check_branch
      %33 = sbr.rel (0) target = $region21
    $region20: #{hcapsnet_forward.13} parent=1 // pred_region
      %35 = dma.done [#allocation3], 1024
    $region21: #{hcapsnet_forward.13} parent=1 // pred_fallthru
      _
    %v36 = vld [vmem:[#allocation2] sm:$0xf]
    %v37 = vld [vmem:[#allocation2 + $0x4] sm:$0xf]
    %v38 = vld [vmem:[#allocation2 + $0x8] sm:$0xf]
    %v39 = vld [vmem:[#allocation2 + $0xc] sm:$0xf]
    %v40 = vld [vmem:[#allocation2 + $0x10] sm:$0xf]
    %v41 = vld [vmem:[#allocation2 + $0x14] sm:$0xf]
    %v42 = vld [vmem:[#allocation2 + $0x18] sm:$0xf]
    %v43 = vld [vmem:[#allocation2 + $0x1c] sm:$0xf]
    %v44 = vld [vmem:[#allocation2 + $0x20] sm:$0xf]
    %v45 = vld [vmem:[#allocation2 + $0x24] sm:$0xf]
    %v46 = vld [vmem:[#allocation2 + $0x28] sm:$0xf]
    %v47 = vld [vmem:[#allocation2 + $0x2c] sm:$0xf]
    %v48 = vld [vmem:[#allocation2 + $0x30] sm:$0xf]
    %v49 = vld [vmem:[#allocation2 + $0x34] sm:$0xf]
    %v50 = vld [vmem:[#allocation2 + $0x38] sm:$0xf]
    %v51 = vld [vmem:[#allocation2 + $0x3c] sm:$0xf]
    %v52 = vld [vmem:[%s2] sm:$0x1]
    %v53 = vld [vmem:[%s3] sm:$0x1]
    %v54 = vld [vmem:[%s0] sm:$0x3]
    %v55 = vpack.c.bf16 %v54, %v54
    %v57 = vperm.slane %v52, 0
    %v75 = vunpack.c.l.b16 %v36
    %v76 = vunpack.c.l.b16 %v37
    %v77 = vunpack.c.l.b16 %v38
    %v78 = vunpack.c.l.b16 %v39
    %v79 = vunpack.c.l.b16 %v40
    %v80 = vunpack.c.l.b16 %v41
    %v81 = vunpack.c.l.b16 %v42
    %v82 = vunpack.c.l.b16 %v43
    %v83 = vunpack.c.l.b16 %v44
    %v84 = vunpack.c.l.b16 %v45
    %v85 = vunpack.c.l.b16 %v46
    %v86 = vunpack.c.l.b16 %v47
    %v87 = vunpack.c.l.b16 %v48
    %v88 = vunpack.c.l.b16 %v49
    %v89 = vunpack.c.l.b16 %v50
    %v90 = vunpack.c.l.b16 %v51
    %v91 = vpack.c.b16 %v76, %v75
    %v92 = vpack.c.b16 %v78, %v77
    %v93 = vpack.c.b16 %v80, %v79
    %v94 = vpack.c.b16 %v82, %v81
    %v95 = vpack.c.b16 %v84, %v83
    %v96 = vpack.c.b16 %v86, %v85
    %v97 = vpack.c.b16 %v88, %v87
    %v98 = vpack.c.b16 %v90, %v89
    %107 = vmatpush.bf16.msra.mxu0 %v98
    %108 = vmatpush.bf16.msra.mxu0 %v97
    %109 = vmatpush.bf16.msra.mxu0 %v96
    %110 = vmatpush.bf16.msra.mxu0 %v95
    %111 = vmatpush.bf16.msra.mxu0 %v94
    %112 = vmatpush.bf16.msra.mxu0 %v93
    %113 = vmatpush.bf16.msra.mxu0 %v92
    %114 = vmatpush.bf16.msra.mxu0 %v91
    %115 = vmatmul.bf16.gmra.mxu0 %v55
    %v116 = vpop.f32.mrf.mxu0
    %v117 = vadd.f32 %v57, %v116
    %v118 = vpop.f32.mrf.mxu0
    %119 = vdwg.mxu0
    %v120 = vtanh.pop %v117
    %v122 = vperm.slane %v53, 0
    %v124 = vmul.f32 %v120, %v122
    %vm125 = vcmask 1041408
    %v126 = vsel %vm125, %v124, 0.0
    %127 = vadd.xlane.f32.xlu0 %v126
    %v128 = vpop.xlane.xlu0 %127
    %s129 = scalar_lea.vmem %s0, 2
    %v130 = vld [vmem:[%s129] sm:$0x3]
    %v131 = vpack.c.bf16 %v130, %v130
    %132 = vmatpush.bf16.msra.mxu0 %v98
    %133 = vmatpush.bf16.msra.mxu0 %v97
    %134 = vmatpush.bf16.msra.mxu0 %v96
    %135 = vmatpush.bf16.msra.mxu0 %v95
    %136 = vmatpush.bf16.msra.mxu0 %v94
    %137 = vmatpush.bf16.msra.mxu0 %v93
    %138 = vmatpush.bf16.msra.mxu0 %v92
    %139 = vmatpush.bf16.msra.mxu0 %v91
    %140 = vmatmul.bf16.gmra.mxu0 %v131
    %v141 = vpop.f32.mrf.mxu0
    %v142 = vadd.f32 %v57, %v141
    %v143 = vpop.f32.mrf.mxu0
    %144 = vdwg.mxu0
    %v145 = vtanh.pop %v142
    %v146 = vmul.f32 %v145, %v122
    %v147 = vsel %vm125, %v146, 0.0
    %148 = vadd.xlane.f32.xlu0 %v147
    %v149 = vpop.xlane.xlu0 %148
    %s150 = scalar_lea.vmem %s0, 4
    %v151 = vld [vmem:[%s150] sm:$0x3]
    %v152 = vpack.c.bf16 %v151, %v151
    %153 = vmatpush.bf16.msra.mxu0 %v98
    %154 = vmatpush.bf16.msra.mxu0 %v97
    %155 = vmatpush.bf16.msra.mxu0 %v96
    %156 = vmatpush.bf16.msra.mxu0 %v95
    %157 = vmatpush.bf16.msra.mxu0 %v94
    %158 = vmatpush.bf16.msra.mxu0 %v93
    %159 = vmatpush.bf16.msra.mxu0 %v92
    %160 = vmatpush.bf16.msra.mxu0 %v91
    %161 = vmatmul.bf16.gmra.mxu0 %v152
    %v162 = vpop.f32.mrf.mxu0
    %v163 = vadd.f32 %v57, %v162
    %v164 = vpop.f32.mrf.mxu0
    %165 = vdwg.mxu0
    %v166 = vtanh.pop %v163
    %v167 = vmul.f32 %v166, %v122
    %v168 = vsel %vm125, %v167, 0.0
    %169 = vadd.xlane.f32.xlu0 %v168
    %v170 = vpop.xlane.xlu0 %169
    %s171 = scalar_lea.vmem %s0, 6
    %v172 = vld [vmem:[%s171] sm:$0x3]
    %v173 = vpack.c.bf16 %v172, %v172
    %174 = vmatpush.bf16.msra.mxu0 %v98
    %175 = vmatpush.bf16.msra.mxu0 %v97
    %176 = vmatpush.bf16.msra.mxu0 %v96
    %177 = vmatpush.bf16.msra.mxu0 %v95
    %178 = vmatpush.bf16.msra.mxu0 %v94
    %179 = vmatpush.bf16.msra.mxu0 %v93
    %180 = vmatpush.bf16.msra.mxu0 %v92
    %181 = vmatpush.bf16.msra.mxu0 %v91
    %182 = vmatmul.bf16.gmra.mxu0 %v173
    %v183 = vpop.f32.mrf.mxu0
    %v184 = vadd.f32 %v57, %v183
    %v185 = vpop.f32.mrf.mxu0
    %186 = vdwg.mxu0
    %v187 = vtanh.pop %v184
    %v188 = vmul.f32 %v187, %v122
    %v189 = vsel %vm125, %v188, 0.0
    %190 = vadd.xlane.f32.xlu0 %v189
    %v191 = vpop.xlane.xlu0 %190
    %vm192 = vcmask 7168
    %v193 = vsel %vm192, %v128, %v149
    %vm194 = vcmask 15360
    %v195 = vsel %vm194, %v193, %v170
    %vm196 = vcmask 23552
    %v197 = vsel %vm196, %v195, %v191
    %vm198 = vcmask 25600
    %v199 = vsel %vm198, %v197, -inf
    %200 = vmax.xlane.f32.xlu0 %v199
    %v201 = vpop.xlane.xlu0 %200
    %v202 = vsub.f32 %v197, %v201
    %v203 = vmul.f32 %v202, 1.442695
    %v204 = vpow.pop %v203
    %v205 = vsel %vm198, %v204, 0.0
    %206 = vadd.xlane.f32.xlu0 %v205
    %v207 = vpop.xlane.xlu0 %206
    %v208 = vrcp.pop %v207
    %v209 = vmul.f32 %v207, %v208
    %v210 = vsub.f32 1.0, %v209
    %v211 = vmul.f32 %v208, %v210
    %v212 = vadd.f32 %v208, %v211
    %vm213 = vweird.f32 %v207
    %vm214 = vweird.f32 %v208
    %vm215 = vmor %vm213, %vm214
    %v216 = vsel %vm215, %v208, %v212
    %v217 = vand.u32 2147483647, %v207
    %vm218 = vcmp.eq.f32.partialorder %v217, 8.507059e+37
    %v219 = vand.u32 %v207, 2147483648
    %v220 = vor.u32 1.1754944e-38, %v219
    %v221 = vsel %vm218, %v220, %v216
    %v222 = vmul.f32 %v204, %v221
    %223 = vst.msk [vmem:[#allocation5] sm:$0x3] %vm198, %v222
    %v224 = vld [vmem:[%s0] sm:$0x3]
    %226 = vset.pattern.permute.xlu0 0
    %227 = vperm.xlu0 %226, %v222
    %v228 = vpop.permute.xlu0 %227
    %v230 = vmul.f32 %v228, %v224
    %v231 = vld [vmem:[%s129] sm:$0x3]
    %232 = vset.pattern.permute.xlu0 1
    %233 = vperm.xlu0 %232, %v222
    %v234 = vpop.permute.xlu0 %233
    %v236 = vmul.f32 %v234, %v231
    %v237 = vadd.f32 %v230, %v236
    %v238 = vld [vmem:[%s150] sm:$0x3]
    %239 = vset.pattern.permute.xlu0 2
    %240 = vperm.xlu0 %239, %v222
    %v241 = vpop.permute.xlu0 %240
    %v243 = vmul.f32 %v241, %v238
    %v244 = vadd.f32 %v237, %v243
    %v245 = vld [vmem:[%s171] sm:$0x3]
    %246 = vset.pattern.permute.xlu0 3
    %247 = vperm.xlu0 %246, %v222
    %v248 = vpop.permute.xlu0 %247
    %v250 = vmul.f32 %v248, %v245
    %v251 = vadd.f32 %v244, %v250
    %252 = vst [vmem:[%s4] sm:$0x3] %v251
    // Predicated region
    $region22: #{hcapsnet_forward.13} parent=1 // pred_check
      _
    $region23: #{hcapsnet_forward.13} parent=1 // pred_check_branch
      %254 = sbr.rel (0) target = $region25
    $region24: #{hcapsnet_forward.13} parent=1 // pred_region
      _
    $region25: #{hcapsnet_forward.13} parent=1 // pred_fallthru
      _
    // Predicated region
    $region26: #{hcapsnet_forward.13} parent=1 // pred_check
      _
    $region27: #{hcapsnet_forward.13} parent=1 // pred_check_branch
      %256 = sbr.rel (0) target = $region29
    $region28: #{hcapsnet_forward.13} parent=1 // pred_region
      %258 = vsyncadd [#allocation4], 0
      %s260 = sshll.u32 [#allocation5], 4
      %s261 = int_to_ptr.vmem [resolvable:$true] %s260
      %s262 = sshll.u32 %s5, 4
      %s263 = int_to_ptr.hbm [resolvable:$true] %s262
      %265 = dma.vmem_to_hbm [thread:$0]  %s261, 32, %s263, [#allocation4]
    $region29: #{hcapsnet_forward.13} parent=1 // pred_fallthru
      _
    // Predicated region
    $region30: #{hcapsnet_forward.13} parent=1 // pred_check
      _
    $region31: #{hcapsnet_forward.13} parent=1 // pred_check_branch
      %267 = sbr.rel (0) target = $region33
    $region32: #{hcapsnet_forward.13} parent=1 // pred_region
      _
    $region33: #{hcapsnet_forward.13} parent=1 // pred_fallthru
      _
    // Predicated region
    $region34: #{hcapsnet_forward.13} parent=1 // pred_check
      _
    $region35: #{hcapsnet_forward.13} parent=1 // pred_check_branch
      %269 = sbr.rel (0) target = $region37
    $region36: #{hcapsnet_forward.13} parent=1 // pred_region
      %271 = dma.done [#allocation4], 32
    $region37: #{hcapsnet_forward.13} parent=1 // pred_fallthru
      _
    %272 = vsyncpa [#allocation3], 1
    %273 = vsyncpa [#allocation4], 1

// kernel: hcapsnet_forward.12
$region0: #{hcapsnet_forward.12}
  #allocation0 [shape = 'u32[]', space=smem, size = 0x4, offset = 0x4, fixed_abs, tag = 'smem constant byte address 0x4 - core index']
  #allocation1 [shape = 'u32[72,128]{1,0:T(1,128)}', space=vmem, size = 0x9000, scoped, tag = 'internal scratch']
  %s0 = inlined_call_operand.vmem [shape: bf16[4,2,384], index: 0, kind: input, shape index: {}]
  %s1 = inlined_call_operand.hbm [shape: bf16[128,384], index: 1, kind: input, shape index: {}]
  %s2 = inlined_call_operand.vmem [shape: f32[1,384], index: 2, kind: input, shape index: {}]
  %s3 = inlined_call_operand.vmem [shape: f32[4,2,128], index: 3, kind: output, shape index: {}]
  %s4 = sld [smem:[#allocation0]]
  $region33: #{hcapsnet_forward.12} parent=0
    _
  %s6 = ssub.s32 1, %s4
  %s7 = scalar_select 0, %s6, %s4
  $region1: #{hcapsnet_forward.12} parent=0
    #allocation2 [shape = 'u8[98304]{0}', space=vmem, size = 0x18000, scoped, tag = 'input window, operand 1, single buffered']
    #allocation3 [shape = 's32[1]{0}', space=sflag, size = 0x4, scoped, tag = 'scoped memory for hcapsnet_forward.12']
    %8 = vsyncpa [#allocation3], 0
    // Predicated region
    $region2: #{hcapsnet_forward.12} parent=1 // pred_check
      _
    $region3: #{hcapsnet_forward.12} parent=1 // pred_check_branch
      %10 = sbr.rel (0) target = $region5
    $region4: #{hcapsnet_forward.12} parent=1 // pred_region
      _
    $region5: #{hcapsnet_forward.12} parent=1 // pred_fallthru
      _
    // Predicated region
    $region6: #{hcapsnet_forward.12} parent=1 // pred_check
      _
    $region7: #{hcapsnet_forward.12} parent=1 // pred_check_branch
      %12 = sbr.rel (0) target = $region9
    $region8: #{hcapsnet_forward.12} parent=1 // pred_region
      %14 = vsyncadd [#allocation3], 0
      %s15 = sshll.u32 %s1, 4
      %s16 = int_to_ptr.hbm [resolvable:$true] %s15
      %s17 = sshll.u32 [#allocation2], 4
      %s18 = int_to_ptr.vmem [resolvable:$true] %s17
      %23 = dma.hbm_to_vmem [thread:$0]  %s16, 3072, %s18, [#allocation3], 192, 192, 12
    $region9: #{hcapsnet_forward.12} parent=1 // pred_fallthru
      _
    // Predicated region
    $region10: #{hcapsnet_forward.12} parent=1 // pred_check
      _
    $region11: #{hcapsnet_forward.12} parent=1 // pred_check_branch
      %25 = sbr.rel (0) target = $region13
    $region12: #{hcapsnet_forward.12} parent=1 // pred_region
      _
    $region13: #{hcapsnet_forward.12} parent=1 // pred_fallthru
      _
    // Predicated region
    $region14: #{hcapsnet_forward.12} parent=1 // pred_check
      _
    $region15: #{hcapsnet_forward.12} parent=1 // pred_check_branch
      %27 = sbr.rel (0) target = $region17
    $region16: #{hcapsnet_forward.12} parent=1 // pred_region
      %29 = dma.done [#allocation3], 3072
    $region17: #{hcapsnet_forward.12} parent=1 // pred_fallthru
      _
    %v30 = vld [vmem:[#allocation2] sm:$0xff]
    %v31 = vld [vmem:[#allocation2 + $0x8] sm:$0xf]
    %v32 = vld [vmem:[#allocation2 + $0xc] sm:$0xff]
    %v33 = vld [vmem:[#allocation2 + $0x14] sm:$0xf]
    %v34 = vld [vmem:[#allocation2 + $0x18] sm:$0xff]
    %v35 = vld [vmem:[#allocation2 + $0x20] sm:$0xf]
    %v36 = vld [vmem:[#allocation2 + $0x24] sm:$0xff]
    %v37 = vld [vmem:[#allocation2 + $0x2c] sm:$0xf]
    %v38 = vld [vmem:[#allocation2 + $0x30] sm:$0xff]
    %v39 = vld [vmem:[#allocation2 + $0x38] sm:$0xf]
    %v40 = vld [vmem:[#allocation2 + $0x3c] sm:$0xff]
    %v41 = vld [vmem:[#allocation2 + $0x44] sm:$0xf]
    %v42 = vld [vmem:[#allocation2 + $0x48] sm:$0xff]
    %v43 = vld [vmem:[#allocation2 + $0x50] sm:$0xf]
    %v44 = vld [vmem:[#allocation2 + $0x54] sm:$0xff]
    %v45 = vld [vmem:[#allocation2 + $0x5c] sm:$0xf]
    %v46 = vld [vmem:[#allocation2 + $0x60] sm:$0xff]
    %v47 = vld [vmem:[#allocation2 + $0x68] sm:$0xf]
    %v48 = vld [vmem:[#allocation2 + $0x6c] sm:$0xff]
    %v49 = vld [vmem:[#allocation2 + $0x74] sm:$0xf]
    %v50 = vld [vmem:[#allocation2 + $0x78] sm:$0xff]
    %v51 = vld [vmem:[#allocation2 + $0x80] sm:$0xf]
    %v52 = vld [vmem:[#allocation2 + $0x84] sm:$0xff]
    %v53 = vld [vmem:[#allocation2 + $0x8c] sm:$0xf]
    %v54 = vld [vmem:[#allocation2 + $0x90] sm:$0xff]
    %v55 = vld [vmem:[#allocation2 + $0x98] sm:$0xf]
    %v56 = vld [vmem:[#allocation2 + $0x9c] sm:$0xff]
    %v57 = vld [vmem:[#allocation2 + $0xa4] sm:$0xf]
    %v58 = vld [vmem:[#allocation2 + $0xa8] sm:$0xff]
    %v59 = vld [vmem:[#allocation2 + $0xb0] sm:$0xf]
    %v60 = vld [vmem:[#allocation2 + $0xb4] sm:$0xff]
    %v61 = vld [vmem:[#allocation2 + $0xbc] sm:$0xf]
    %v62 = vld [vmem:[%s2] sm:$0x7]
    loop: start=0, step=1, limit=4
    $region18: #{hcapsnet_forward.12} parent=1 // loop_pre_header
      _
    $region19: #{hcapsnet_forward.12} parent=1 // loop_header
      %s64 = sphi 0, %s68
      %p65 = scmp.ge.s32.totalorder %s64, 4
      %v69 = vphi 0.0, %v382
    $region20: #{hcapsnet_forward.12} parent=1 // loop_header_branch
      %67 = sbr.rel (%p65) target = $region24
    $region21: #{hcapsnet_forward.12} parent=1 // loop_body
      %s70 = ssub.s32 3, %s64
      %v71 = vpack.c.bf16 %v69, %v69
      %v73 = vperm.slane %v62, 0
      %v74 = vperm.slane %v62, 1
      %v75 = vperm.slane %v62, 2
      %v111 = vunpack.c.l.b16 %v30
      %v112 = vunpack.c.h.b16 %v30
      %v113 = vunpack.c.l.b16 %v31
      %v114 = vunpack.c.l.b16 %v32
      %v115 = vunpack.c.h.b16 %v32
      %v116 = vunpack.c.l.b16 %v33
      %v117 = vunpack.c.l.b16 %v34
      %v118 = vunpack.c.h.b16 %v34
      %v119 = vunpack.c.l.b16 %v35
      %v120 = vunpack.c.l.b16 %v36
      %v121 = vunpack.c.h.b16 %v36
      %v122 = vunpack.c.l.b16 %v37
      %v123 = vunpack.c.l.b16 %v38
      %v124 = vunpack.c.h.b16 %v38
      %v125 = vunpack.c.l.b16 %v39
      %v126 = vunpack.c.l.b16 %v40
      %v127 = vunpack.c.h.b16 %v40
      %v128 = vunpack.c.l.b16 %v41
      %v129 = vunpack.c.l.b16 %v42
      %v130 = vunpack.c.h.b16 %v42
      %v131 = vunpack.c.l.b16 %v43
      %v132 = vunpack.c.l.b16 %v44
      %v133 = vunpack.c.h.b16 %v44
      %v134 = vunpack.c.l.b16 %v45
      %v135 = vunpack.c.l.b16 %v46
      %v136 = vunpack.c.h.b16 %v46
      %v137 = vunpack.c.l.b16 %v47
      %v138 = vunpack.c.l.b16 %v48
      %v139 = vunpack.c.h.b16 %v48
      %v140 = vunpack.c.l.b16 %v49
      %v141 = vunpack.c.l.b16 %v50
      %v142 = vunpack.c.h.b16 %v50
      %v143 = vunpack.c.l.b16 %v51
      %v144 = vunpack.c.l.b16 %v52
      %v145 = vunpack.c.h.b16 %v52
      %v146 = vunpack.c.l.b16 %v53
      %v147 = vunpack.c.l.b16 %v54
      %v148 = vunpack.c.h.b16 %v54
      %v149 = vunpack.c.l.b16 %v55
      %v150 = vunpack.c.l.b16 %v56
      %v151 = vunpack.c.h.b16 %v56
      %v152 = vunpack.c.l.b16 %v57
      %v153 = vunpack.c.l.b16 %v58
      %v154 = vunpack.c.h.b16 %v58
      %v155 = vunpack.c.l.b16 %v59
      %v156 = vunpack.c.l.b16 %v60
      %v157 = vunpack.c.h.b16 %v60
      %v158 = vunpack.c.l.b16 %v61
      %v159 = vpack.c.b16 %v114, %v111
      %v160 = vpack.c.b16 %v115, %v112
      %v161 = vpack.c.b16 %v116, %v113
      %v162 = vpack.c.b16 %v120, %v117
      %v163 = vpack.c.b16 %v121, %v118
      %v164 = vpack.c.b16 %v122, %v119
      %v165 = vpack.c.b16 %v126, %v123
      %v166 = vpack.c.b16 %v127, %v124
      %v167 = vpack.c.b16 %v128, %v125
      %v168 = vpack.c.b16 %v132, %v129
      %v169 = vpack.c.b16 %v133, %v130
      %v170 = vpack.c.b16 %v134, %v131
      %v171 = vpack.c.b16 %v138, %v135
      %v172 = vpack.c.b16 %v139, %v136
      %v173 = vpack.c.b16 %v140, %v137
      %v174 = vpack.c.b16 %v144, %v141
      %v175 = vpack.c.b16 %v145, %v142
      %v176 = vpack.c.b16 %v146, %v143
      %v177 = vpack.c.b16 %v150, %v147
      %v178 = vpack.c.b16 %v151, %v148
      %v179 = vpack.c.b16 %v152, %v149
      %v180 = vpack.c.b16 %v156, %v153
      %v181 = vpack.c.b16 %v157, %v154
      %v182 = vpack.c.b16 %v158, %v155
      %207 = vmatpush.bf16.msra.mxu0 %v180
      %208 = vmatpush.bf16.msra.mxu0 %v177
      %209 = vmatpush.bf16.msra.mxu0 %v174
      %210 = vmatpush.bf16.msra.mxu0 %v171
      %211 = vmatpush.bf16.msra.mxu0 %v168
      %212 = vmatpush.bf16.msra.mxu0 %v165
      %213 = vmatpush.bf16.msra.mxu0 %v162
      %214 = vmatpush.bf16.msra.mxu0 %v159
      %215 = vmatmul.bf16.gmra.mxu0 %v71
      %v216 = vpop.f32.mrf.mxu0
      %v217 = vadd.f32 %v73, %v216
      %v218 = vpop.f32.mrf.mxu0
      %219 = vdwg.mxu0
      %220 = vmatpush.bf16.msra.mxu0 %v181
      %221 = vmatpush.bf16.msra.mxu0 %v178
      %222 = vmatpush.bf16.msra.mxu0 %v175
      %223 = vmatpush.bf16.msra.mxu0 %v172
      %224 = vmatpush.bf16.msra.mxu0 %v169
      %225 = vmatpush.bf16.msra.mxu0 %v166
      %226 = vmatpush.bf16.msra.mxu0 %v163
      %227 = vmatpush.bf16.msra.mxu0 %v160
      %228 = vmatmul.bf16.gmra.mxu0 %v71
      %v229 = vpop.f32.mrf.mxu0
      %v230 = vadd.f32 %v74, %v229
      %v231 = vpop.f32.mrf.mxu0
      %232 = vdwg.mxu0
      %233 = vmatpush.bf16.msra.mxu0 %v182
      %234 = vmatpush.bf16.msra.mxu0 %v179
      %235 = vmatpush.bf16.msra.mxu0 %v176
      %236 = vmatpush.bf16.msra.mxu0 %v173
      %237 = vmatpush.bf16.msra.mxu0 %v170
      %238 = vmatpush.bf16.msra.mxu0 %v167
      %239 = vmatpush.bf16.msra.mxu0 %v164
      %240 = vmatpush.bf16.msra.mxu0 %v161
      %241 = vmatmul.bf16.gmra.mxu0 %v71
      %v242 = vpop.f32.mrf.mxu0
      %v243 = vadd.f32 %v75, %v242
      %v244 = vpop.f32.mrf.mxu0
      %245 = vdwg.mxu0
      %s246 = smul.u32 %s64, 3
      %s247 = scalar_lea.vmem %s0, %s246
      %v248 = vld [vmem:[%s247] sm:$0x7]
      %v249 = vunpack.c.l.bf16 %v248
      %s250 = smul.u32 %s70, 3
      %s251 = scalar_lea.vmem %s0, %s250
      %v252 = vld [vmem:[%s251] sm:$0x7]
      %254 = vrot.lane.b32.xlu0 %v252, 64
      %v255 = vpop.permute.xlu0 %254
      %v256 = vrot.slane %v255, 1
      %v257 = vrot.slane %v255, 2
      %vm258 = vcmask 523264
      %v259 = vsel %vm258, %v256, %v257
      %v261 = vunpack.c.l.bf16 %v259
      %v262 = vadd.f32 %v249, %v217
      %v263 = vxor.u32 %v262, 2147483648
      %v264 = vmul.f32 %v263, 1.442695
      %v265 = vpow.pop %v264
      %v266 = vadd.f32 %v265, 1.0
      %v267 = vrcp.pop %v266
      %v268 = vmul.f32 %v266, %v267
      %v269 = vsub.f32 1.0, %v268
      %v270 = vmul.f32 %v267, %v269
      %v271 = vadd.f32 %v267, %v270
      %vm272 = vweird.f32 %v266
      %vm273 = vweird.f32 %v267
      %vm274 = vmor %vm272, %vm273
      %v275 = vsel %vm274, %v267, %v271
      %v276 = vand.u32 2147483647, %v266
      %vm277 = vcmp.eq.f32.partialorder %v276, 8.507059e+37
      %v278 = vand.u32 %v266, 2147483648
      %v279 = vor.u32 1.1754944e-38, %v278
      %v280 = vsel %vm277, %v279, %v275
      %v281 = vmul.f32 1.0, %v280
      %v282 = vmul.f32 %v281, %v230
      %v284 = vrot.slane %v249, 2
      %v286 = vadd.f32 %v284, %v282
      %v287 = vtanh.pop %v286
      %v288 = vsub.f32 1.0, %v281
      %290 = vrot.lane.b32.xlu0 %v287, 64
      %v291 = vpop.permute.xlu0 %290
      %v293 = vmul.f32 %v288, %v291
      %295 = vrot.lane.b32.xlu0 %v69, 64
      %v296 = vpop.permute.xlu0 %295
      %v298 = vmul.f32 %v281, %v296
      %v299 = vadd.f32 %v293, %v298
      %301 = vrot.lane.b32.xlu0 %v230, 64
      %v302 = vpop.permute.xlu0 %301
      %v304 = vadd.f32 %v261, %v302
      %v305 = vxor.u32 %v304, 2147483648
      %v306 = vmul.f32 %v305, 1.442695
      %v307 = vpow.pop %v306
      %v308 = vadd.f32 %v307, 1.0
      %v309 = vrcp.pop %v308
      %v310 = vmul.f32 %v308, %v309
      %v311 = vsub.f32 1.0, %v310
      %v312 = vmul.f32 %v309, %v311
      %v313 = vadd.f32 %v309, %v312
      %vm314 = vweird.f32 %v308
      %vm315 = vweird.f32 %v309
      %vm316 = vmor %vm314, %vm315
      %v317 = vsel %vm316, %v309, %v313
      %v318 = vand.u32 2147483647, %v308
      %vm319 = vcmp.eq.f32.partialorder %v318, 8.507059e+37
      %v320 = vand.u32 %v308, 2147483648
      %v321 = vor.u32 1.1754944e-38, %v320
      %v322 = vsel %vm319, %v321, %v317
      %v323 = vmul.f32 1.0, %v322
      %325 = vrot.lane.b32.xlu0 %v243, 64
      %v326 = vpop.permute.xlu0 %325
      %v328 = vadd.f32 %v261, %v326
      %v329 = vxor.u32 %v328, 2147483648
      %v330 = vmul.f32 %v329, 1.442695
      %v331 = vpow.pop %v330
      %v332 = vadd.f32 %v331, 1.0
      %v333 = vrcp.pop %v332
      %v334 = vmul.f32 %v332, %v333
      %v335 = vsub.f32 1.0, %v334
      %v336 = vmul.f32 %v333, %v335
      %v337 = vadd.f32 %v333, %v336
      %vm338 = vweird.f32 %v332
      %vm339 = vweird.f32 %v333
      %vm340 = vmor %vm338, %vm339
      %v341 = vsel %vm340, %v333, %v337
      %v342 = vand.u32 2147483647, %v332
      %vm343 = vcmp.eq.f32.partialorder %v342, 8.507059e+37
      %v344 = vand.u32 %v332, 2147483648
      %v345 = vor.u32 1.1754944e-38, %v344
      %v346 = vsel %vm343, %v345, %v341
      %v347 = vmul.f32 1.0, %v346
      %v348 = vmul.f32 %v323, %v326
      %v350 = vrot.slane %v261, 2
      %v352 = vadd.f32 %v350, %v348
      %v353 = vtanh.pop %v352
      %v354 = vsub.f32 1.0, %v347
      %356 = vrot.lane.b32.xlu0 %v353, 64
      %v357 = vpop.permute.xlu0 %356
      %v359 = vmul.f32 %v354, %v357
      %v360 = vmul.f32 %v347, %v69
      %v361 = vadd.f32 %v359, %v360
      %363 = vst [vmem:[#allocation1] ss:$4 sm:$0xff] %v299
      %v364 = vld.sshfl [vmem:[#allocation1] sm:$0xff pattern:$0x73625140]
      %365 = vrot.lane.b32.xlu0 %v364, 64
      %v366 = vpop.permute.xlu0 %365
      %s368 = smul.u32 %s64, 2
      %s369 = scalar_lea.vmem %s3, %s368
      %vm370 = vcmask 517120
      %371 = vst.msk [vmem:[%s369] sm:$0x3] %vm370, %v366
      %s372 = smul.u32 %s70, 2
      %s373 = scalar_lea.vmem %s3, %s372
      %vm374 = vcmask 1041920
      %375 = vst.msk [vmem:[%s373] sm:$0x3] %vm374, %v361
      %376 = vst [vmem:[#allocation1] ss:$4 sm:$0xff] %v299
      %v377 = vld.sshfl [vmem:[#allocation1] sm:$0xff pattern:$0x73625140]
      %378 = vrot.lane.b32.xlu0 %v377, 64
      %v379 = vpop.permute.xlu0 %378
      %vm381 = vcmask 523264
      %v382 = vsel %vm381, %v379, %v361
    $region22: #{hcapsnet_forward.12} parent=1 // loop_footer
      %s68 = sadd.s32 1, %s64
    $region23: #{hcapsnet_forward.12} parent=1 // loop_footer_branch
      %63 = sbr.rel target = $region19
    $region24: #{hcapsnet_forward.12} parent=1 // loop_exit
      _
    // Predicated region
    $region25: #{hcapsnet_forward.12} parent=1 // pred_check
      _
    $region26: #{hcapsnet_forward.12} parent=1 // pred_check_branch
      %384 = sbr.rel (0) target = $region28
    $region27: #{hcapsnet_forward.12} parent=1 // pred_region
      _
    $region28: #{hcapsnet_forward.12} parent=1 // pred_fallthru
      _
    // Predicated region
    $region29: #{hcapsnet_forward.12} parent=1 // pred_check
      _
    $region30: #{hcapsnet_forward.12} parent=1 // pred_check_branch
      %386 = sbr.rel (0) target = $region32
    $region31: #{hcapsnet_forward.12} parent=1 // pred_region
      _
    $region32: #{hcapsnet_forward.12} parent=1 // pred_fallthru
      _
    %387 = vsyncpa [#allocation3], 1

// kernel: hcapsnet_forward.15
$region0: #{hcapsnet_forward.15}
  #allocation0 [shape = 'u32[]', space=smem, size = 0x4, offset = 0x4, fixed_abs, tag = 'smem constant byte address 0x4 - core index']
  #allocation1 [shape = 'u32[72,128]{1,0:T(1,128)}', space=vmem, size = 0x9000, scoped, tag = 'internal scratch']
  %s0 = inlined_call_operand.vmem [shape: f32[2,8,16], index: 0, kind: input, shape index: {}]
  %s1 = inlined_call_operand.vmem [shape: f32[16,8], index: 1, kind: input, shape index: {}]
  %s2 = inlined_call_operand.vmem [shape: f32[16,16,128], index: 2, kind: input, shape index: {}]
  %s3 = inlined_call_operand.vmem [shape: f32[8,128], index: 3, kind: input, shape index: {}]
  %s4 = inlined_call_operand.vmem [shape: f32[128,8], index: 4, kind: input, shape index: {}]
  %s5 = inlined_call_operand.hbm [shape: f32[2,1,8], index: 5, kind: output, shape index: {}]
  %s6 = sld [smem:[#allocation0]]
  $region37: #{hcapsnet_forward.15} parent=0
    _
  %s8 = ssub.s32 1, %s6
  %s9 = scalar_select 0, %s8, %s6
  $region1: #{hcapsnet_forward.15} parent=0
    #allocation2 [shape = 'u8[1024]{0}', space=vmem, size = 0x400, scoped, tag = 'output window, operand 0, single buffered']
    #allocation3 [shape = 's32[1]{0}', space=sflag, size = 0x4, scoped, tag = 'scoped memory for hcapsnet_forward.15']
    %10 = vsyncpa [#allocation3], 0
    // Predicated region
    $region2: #{hcapsnet_forward.15} parent=1 // pred_check
      _
    $region3: #{hcapsnet_forward.15} parent=1 // pred_check_branch
      %12 = sbr.rel (0) target = $region5
    $region4: #{hcapsnet_forward.15} parent=1 // pred_region
      _
    $region5: #{hcapsnet_forward.15} parent=1 // pred_fallthru
      _
    // Predicated region
    $region6: #{hcapsnet_forward.15} parent=1 // pred_check
      _
    $region7: #{hcapsnet_forward.15} parent=1 // pred_check_branch
      %14 = sbr.rel (0) target = $region9
    $region8: #{hcapsnet_forward.15} parent=1 // pred_region
      _
    $region9: #{hcapsnet_forward.15} parent=1 // pred_fallthru
      _
    // Predicated region
    $region10: #{hcapsnet_forward.15} parent=1 // pred_check
      _
    $region11: #{hcapsnet_forward.15} parent=1 // pred_check_branch
      %16 = sbr.rel (0) target = $region13
    $region12: #{hcapsnet_forward.15} parent=1 // pred_region
      _
    $region13: #{hcapsnet_forward.15} parent=1 // pred_fallthru
      _
    // Predicated region
    $region14: #{hcapsnet_forward.15} parent=1 // pred_check
      _
    $region15: #{hcapsnet_forward.15} parent=1 // pred_check_branch
      %18 = sbr.rel (0) target = $region17
    $region16: #{hcapsnet_forward.15} parent=1 // pred_region
      _
    $region17: #{hcapsnet_forward.15} parent=1 // pred_fallthru
      _
    // Predicated region
    $region18: #{hcapsnet_forward.15} parent=1 // pred_check
      _
    $region19: #{hcapsnet_forward.15} parent=1 // pred_check_branch
      %20 = sbr.rel (0) target = $region21
    $region20: #{hcapsnet_forward.15} parent=1 // pred_region
      _
    $region21: #{hcapsnet_forward.15} parent=1 // pred_fallthru
      _
    %v21 = vld [vmem:[%s1] sm:$0xff]
    %v22 = vld [vmem:[%s1 + $0x8] sm:$0xff]
    %v23 = vld [vmem:[%s2] sm:$0xff]
    %v24 = vld [vmem:[%s2 + $0x8] sm:$0xff]
    %v25 = vld [vmem:[%s2 + $0x10] sm:$0xff]
    %v26 = vld [vmem:[%s2 + $0x18] sm:$0xff]
    %v27 = vld [vmem:[%s2 + $0x20] sm:$0xff]
    %v28 = vld [vmem:[%s2 + $0x28] sm:$0xff]
    %v29 = vld [vmem:[%s2 + $0x30] sm:$0xff]
    %v30 = vld [vmem:[%s2 + $0x38] sm:$0xff]
    %v31 = vld [vmem:[%s2 + $0x40] sm:$0xff]
    %v32 = vld [vmem:[%s2 + $0x48] sm:$0xff]
    %v33 = vld [vmem:[%s2 + $0x50] sm:$0xff]
    %v34 = vld [vmem:[%s2 + $0x58] sm:$0xff]
    %v35 = vld [vmem:[%s2 + $0x60] sm:$0xff]
    %v36 = vld [vmem:[%s2 + $0x68] sm:$0xff]
    %v37 = vld [vmem:[%s2 + $0x70] sm:$0xff]
    %v38 = vld [vmem:[%s2 + $0x78] sm:$0xff]
    %v39 = vld [vmem:[%s2 + $0x80] sm:$0xff]
    %v40 = vld [vmem:[%s2 + $0x88] sm:$0xff]
    %v41 = vld [vmem:[%s2 + $0x90] sm:$0xff]
    %v42 = vld [vmem:[%s2 + $0x98] sm:$0xff]
    %v43 = vld [vmem:[%s2 + $0xa0] sm:$0xff]
    %v44 = vld [vmem:[%s2 + $0xa8] sm:$0xff]
    %v45 = vld [vmem:[%s2 + $0xb0] sm:$0xff]
    %v46 = vld [vmem:[%s2 + $0xb8] sm:$0xff]
    %v47 = vld [vmem:[%s2 + $0xc0] sm:$0xff]
    %v48 = vld [vmem:[%s2 + $0xc8] sm:$0xff]
    %v49 = vld [vmem:[%s2 + $0xd0] sm:$0xff]
    %v50 = vld [vmem:[%s2 + $0xd8] sm:$0xff]
    %v51 = vld [vmem:[%s2 + $0xe0] sm:$0xff]
    %v52 = vld [vmem:[%s2 + $0xe8] sm:$0xff]
    %v53 = vld [vmem:[%s2 + $0xf0] sm:$0xff]
    %v54 = vld [vmem:[%s2 + $0xf8] sm:$0xff]
    %v55 = vld [vmem:[%s3] sm:$0xff]
    %v56 = vld [vmem:[%s4] sm:$0xff]
    %v57 = vld [vmem:[%s4 + $0x8] sm:$0xff]
    %v58 = vld [vmem:[%s4 + $0x10] sm:$0xff]
    %v59 = vld [vmem:[%s4 + $0x18] sm:$0xff]
    %v60 = vld [vmem:[%s4 + $0x20] sm:$0xff]
    %v61 = vld [vmem:[%s4 + $0x28] sm:$0xff]
    %v62 = vld [vmem:[%s4 + $0x30] sm:$0xff]
    %v63 = vld [vmem:[%s4 + $0x38] sm:$0xff]
    %v64 = vld [vmem:[%s4 + $0x40] sm:$0xff]
    %v65 = vld [vmem:[%s4 + $0x48] sm:$0xff]
    %v66 = vld [vmem:[%s4 + $0x50] sm:$0xff]
    %v67 = vld [vmem:[%s4 + $0x58] sm:$0xff]
    %v68 = vld [vmem:[%s4 + $0x60] sm:$0xff]
    %v69 = vld [vmem:[%s4 + $0x68] sm:$0xff]
    %v70 = vld [vmem:[%s4 + $0x70] sm:$0xff]
    %v71 = vld [vmem:[%s4 + $0x78] sm:$0xff]
    loop: start=0, step=1, limit=2
    $region22: #{hcapsnet_forward.15} parent=1 // loop_pre_header
      _
    $region23: #{hcapsnet_forward.15} parent=1 // loop_header
      %s73 = sphi 0, %s77
      %p74 = scmp.ge.s32.totalorder %s73, 2
    $region24: #{hcapsnet_forward.15} parent=1 // loop_header_branch
      %76 = sbr.rel (%p74) target = $region28
    $region25: #{hcapsnet_forward.15} parent=1 // loop_body
      %s78 = smul.u32 %s73, 8
      %s79 = scalar_lea.vmem %s0, %s78
      %v80 = vld [vmem:[%s79] sm:$0xff]
      %v81 = vmul.f32 %v80, %v80
      %vm82 = vcmask 130048
      %v83 = vsel %vm82, %v81, 0.0
      %84 = vadd.xlane.f32.xlu0 %v83
      %v85 = vpop.xlane.xlu0 %84
      %v86 = vadd.f32 %v85, 1.0
      %v87 = vrcp.pop %v86
      %v88 = vmul.f32 %v86, %v87
      %v89 = vsub.f32 1.0, %v88
      %v90 = vmul.f32 %v87, %v89
      %v91 = vadd.f32 %v87, %v90
      %vm92 = vweird.f32 %v86
      %vm93 = vweird.f32 %v87
      %vm94 = vmor %vm92, %vm93
      %v95 = vsel %vm94, %v87, %v91
      %v96 = vand.u32 2147483647, %v86
      %vm97 = vcmp.eq.f32.partialorder %v96, 8.507059e+37
      %v98 = vand.u32 %v86, 2147483648
      %v99 = vor.u32 1.1754944e-38, %v98
      %v100 = vsel %vm97, %v99, %v95
      %v101 = vmul.f32 %v85, %v100
      %v102 = vmul.f32 %v80, %v101
      %v103 = vadd.f32 %v85, 1e-08
      %v104 = vrsqrt.pop %v103
      %v105 = vmul.f32 %v104, %v103
      %v106 = vmul.f32 %v105, %v104
      %v107 = vmul.f32 0.5, %v106
      %v108 = vsub.f32 1.5, %v107
      %v109 = vmul.f32 %v104, %v108
      %vm110 = vweird.f32 %v103
      %vm111 = vweird.f32 %v104
      %vm112 = vmor %vm110, %vm111
      %v113 = vsel %vm112, %v104, %v109
      %v114 = vmul.f32 %v102, %v113
      %vm115 = vcmask 64512
      %v117 = vsel %vm115, %v21, 0
      %v120 = vsel %vm115, %v22, 0
      %122 = vmatpush.msra.mxu0 0.0
      %123 = vmatpush.msra.mxu0 0.0
      %124 = vmatpush.msra.mxu0 0.0
      %125 = vmatpush.msra.mxu0 0.0
      %126 = vmatpush.msra.mxu0 0.0
      %127 = vmatpush.msra.mxu0 0.0
      %128 = vmatpush.msra.mxu0 0.0
      %129 = vmatpush.msra.mxu0 0.0
      %130 = vmatpush.msra.mxu0 0.0
      %131 = vmatpush.msra.mxu0 0.0
      %132 = vmatpush.msra.mxu0 0.0
      %133 = vmatpush.msra.mxu0 0.0
      %134 = vmatpush.msra.mxu0 0.0
      %135 = vmatpush.msra.mxu0 0.0
      %136 = vmatpush.msra.mxu0 0.0
      %137 = vmatpush.msra.mxu0 %v114
      %138 = vmatmul.f32.gmra.mxu0 %v117
      %v139 = vpop.f32.mrf.mxu0
      %v140 = vadd.f32 0.0, %v139
      %141 = vmatmul.f32.gmra.mxu0 %v120
      %v142 = vpop.f32.mrf.mxu0
      %v143 = vadd.f32 0.0, %v142
      %144 = vdwg.mxu0
      %v145 = vmul.f32 %v140, %v140
      %v146 = vmul.f32 %v143, %v143
      %v147 = vsel %vm82, %v145, 0.0
      %148 = vadd.xlane.f32.xlu0 %v147
      %v149 = vpop.xlane.xlu0 %148
      %v150 = vsel %vm82, %v146, 0.0
      %151 = vadd.xlane.f32.xlu0 %v150
      %v152 = vpop.xlane.xlu0 %151
      %v153 = vadd.f32 %v149, 1.0
      %v154 = vadd.f32 %v152, 1.0
      %v155 = vrcp.pop %v153
      %v156 = vmul.f32 %v153, %v155
      %v157 = vsub.f32 1.0, %v156
      %v158 = vmul.f32 %v155, %v157
      %v159 = vadd.f32 %v155, %v158
      %vm160 = vweird.f32 %v153
      %vm161 = vweird.f32 %v155
      %vm162 = vmor %vm160, %vm161
      %v163 = vsel %vm162, %v155, %v159
      %v164 = vand.u32 2147483647, %v153
      %vm165 = vcmp.eq.f32.partialorder %v164, 8.507059e+37
      %v166 = vand.u32 %v153, 2147483648
      %v167 = vor.u32 1.1754944e-38, %v166
      %v168 = vsel %vm165, %v167, %v163
      %v169 = vmul.f32 %v149, %v168
      %v170 = vrcp.pop %v154
      %v171 = vmul.f32 %v154, %v170
      %v172 = vsub.f32 1.0, %v171
      %v173 = vmul.f32 %v170, %v172
      %v174 = vadd.f32 %v170, %v173
      %vm175 = vweird.f32 %v154
      %vm176 = vweird.f32 %v170
      %vm177 = vmor %vm175, %vm176
      %v178 = vsel %vm177, %v170, %v174
      %v179 = vand.u32 2147483647, %v154
      %vm180 = vcmp.eq.f32.partialorder %v179, 8.507059e+37
      %v181 = vand.u32 %v154, 2147483648
      %v182 = vor.u32 1.1754944e-38, %v181
      %v183 = vsel %vm180, %v182, %v178
      %v184 = vmul.f32 %v152, %v183
      %v185 = vmul.f32 %v140, %v169
      %v186 = vmul.f32 %v143, %v184
      %v187 = vadd.f32 %v149, 1e-08
      %v188 = vadd.f32 %v152, 1e-08
      %v189 = vrsqrt.pop %v187
      %v190 = vmul.f32 %v189, %v187
      %v191 = vmul.f32 %v190, %v189
      %v192 = vmul.f32 0.5, %v191
      %v193 = vsub.f32 1.5, %v192
      %v194 = vmul.f32 %v189, %v193
      %vm195 = vweird.f32 %v187
      %vm196 = vweird.f32 %v189
      %vm197 = vmor %vm195, %vm196
      %v198 = vsel %vm197, %v189, %v194
      %v199 = vrsqrt.pop %v188
      %v200 = vmul.f32 %v199, %v188
      %v201 = vmul.f32 %v200, %v199
      %v202 = vmul.f32 0.5, %v201
      %v203 = vsub.f32 1.5, %v202
      %v204 = vmul.f32 %v199, %v203
      %vm205 = vweird.f32 %v188
      %vm206 = vweird.f32 %v199
      %vm207 = vmor %vm205, %vm206
      %v208 = vsel %vm207, %v199, %v204
      %v209 = vmul.f32 %v185, %v198
      %v210 = vmul.f32 %v186, %v208
      %v211 = vperm.slane %v209, 0
      %v212 = vlaneseq
      %v213 = vshrl.u32 %v212, 7
      %215 = vset.pattern.permute.xlu0 %v213
      %216 = vperm.xlu0 %215, %v211
      %v217 = vpop.permute.xlu0 %216
      %v218 = vlaneseq
      %v219 = vshrl.u32 %v218, 7
      %v220 = vadd.s32 %v219, 8
      %221 = vset.pattern.permute.xlu0 %v220
      %222 = vperm.xlu0 %221, %v211
      %v223 = vpop.permute.xlu0 %222
      %v224 = vperm.slane %v209, 1
      %v225 = vlaneseq
      %v226 = vshrl.u32 %v225, 7
      %228 = vset.pattern.permute.xlu0 %v226
      %229 = vperm.xlu0 %228, %v224
      %v230 = vpop.permute.xlu0 %229
      %v231 = vlaneseq
      %v232 = vshrl.u32 %v231, 7
      %v233 = vadd.s32 %v232, 8
      %234 = vset.pattern.permute.xlu0 %v233
      %235 = vperm.xlu0 %234, %v224
      %v236 = vpop.permute.xlu0 %235
      %v237 = vperm.slane %v209, 2
      %v238 = vlaneseq
      %v239 = vshrl.u32 %v238, 7
      %241 = vset.pattern.permute.xlu0 %v239
      %242 = vperm.xlu0 %241, %v237
      %v243 = vpop.permute.xlu0 %242
      %v244 = vlaneseq
      %v245 = vshrl.u32 %v244, 7
      %v246 = vadd.s32 %v245, 8
      %247 = vset.pattern.permute.xlu0 %v246
      %248 = vperm.xlu0 %247, %v237
      %v249 = vpop.permute.xlu0 %248
      %v250 = vperm.slane %v209, 3
      %v251 = vlaneseq
      %v252 = vshrl.u32 %v251, 7
      %254 = vset.pattern.permute.xlu0 %v252
      %255 = vperm.xlu0 %254, %v250
      %v256 = vpop.permute.xlu0 %255
      %v257 = vlaneseq
      %v258 = vshrl.u32 %v257, 7
      %v259 = vadd.s32 %v258, 8
      %260 = vset.pattern.permute.xlu0 %v259
      %261 = vperm.xlu0 %260, %v250
      %v262 = vpop.permute.xlu0 %261
      %v263 = vperm.slane %v209, 4
      %v264 = vlaneseq
      %v265 = vshrl.u32 %v264, 7
      %267 = vset.pattern.permute.xlu0 %v265
      %268 = vperm.xlu0 %267, %v263
      %v269 = vpop.permute.xlu0 %268
      %v270 = vlaneseq
      %v271 = vshrl.u32 %v270, 7
      %v272 = vadd.s32 %v271, 8
      %273 = vset.pattern.permute.xlu0 %v272
      %274 = vperm.xlu0 %273, %v263
      %v275 = vpop.permute.xlu0 %274
      %v276 = vperm.slane %v209, 5
      %v277 = vlaneseq
      %v278 = vshrl.u32 %v277, 7
      %280 = vset.pattern.permute.xlu0 %v278
      %281 = vperm.xlu0 %280, %v276
      %v282 = vpop.permute.xlu0 %281
      %v283 = vlaneseq
      %v284 = vshrl.u32 %v283, 7
      %v285 = vadd.s32 %v284, 8
      %286 = vset.pattern.permute.xlu0 %v285
      %287 = vperm.xlu0 %286, %v276
      %v288 = vpop.permute.xlu0 %287
      %v289 = vperm.slane %v209, 6
      %v290 = vlaneseq
      %v291 = vshrl.u32 %v290, 7
      %293 = vset.pattern.permute.xlu0 %v291
      %294 = vperm.xlu0 %293, %v289
      %v295 = vpop.permute.xlu0 %294
      %v296 = vlaneseq
      %v297 = vshrl.u32 %v296, 7
      %v298 = vadd.s32 %v297, 8
      %299 = vset.pattern.permute.xlu0 %v298
      %300 = vperm.xlu0 %299, %v289
      %v301 = vpop.permute.xlu0 %300
      %v302 = vperm.slane %v209, 7
      %v303 = vlaneseq
      %v304 = vshrl.u32 %v303, 7
      %306 = vset.pattern.permute.xlu0 %v304
      %307 = vperm.xlu0 %306, %v302
      %v308 = vpop.permute.xlu0 %307
      %v309 = vlaneseq
      %v310 = vshrl.u32 %v309, 7
      %v311 = vadd.s32 %v310, 8
      %312 = vset.pattern.permute.xlu0 %v311
      %313 = vperm.xlu0 %312, %v302
      %v314 = vpop.permute.xlu0 %313
      %v315 = vperm.slane %v210, 0
      %v316 = vlaneseq
      %v317 = vshrl.u32 %v316, 7
      %319 = vset.pattern.permute.xlu0 %v317
      %320 = vperm.xlu0 %319, %v315
      %v321 = vpop.permute.xlu0 %320
      %v322 = vlaneseq
      %v323 = vshrl.u32 %v322, 7
      %v324 = vadd.s32 %v323, 8
      %325 = vset.pattern.permute.xlu0 %v324
      %326 = vperm.xlu0 %325, %v315
      %v327 = vpop.permute.xlu0 %326
      %v328 = vperm.slane %v210, 1
      %v329 = vlaneseq
      %v330 = vshrl.u32 %v329, 7
      %332 = vset.pattern.permute.xlu0 %v330
      %333 = vperm.xlu0 %332, %v328
      %v334 = vpop.permute.xlu0 %333
      %v335 = vlaneseq
      %v336 = vshrl.u32 %v335, 7
      %v337 = vadd.s32 %v336, 8
      %338 = vset.pattern.permute.xlu0 %v337
      %339 = vperm.xlu0 %338, %v328
      %v340 = vpop.permute.xlu0 %339
      %v341 = vperm.slane %v210, 2
      %v342 = vlaneseq
      %v343 = vshrl.u32 %v342, 7
      %345 = vset.pattern.permute.xlu0 %v343
      %346 = vperm.xlu0 %345, %v341
      %v347 = vpop.permute.xlu0 %346
      %v348 = vlaneseq
      %v349 = vshrl.u32 %v348, 7
      %v350 = vadd.s32 %v349, 8
      %351 = vset.pattern.permute.xlu0 %v350
      %352 = vperm.xlu0 %351, %v341
      %v353 = vpop.permute.xlu0 %352
      %v354 = vperm.slane %v210, 3
      %v355 = vlaneseq
      %v356 = vshrl.u32 %v355, 7
      %358 = vset.pattern.permute.xlu0 %v356
      %359 = vperm.xlu0 %358, %v354
      %v360 = vpop.permute.xlu0 %359
      %v361 = vlaneseq
      %v362 = vshrl.u32 %v361, 7
      %v363 = vadd.s32 %v362, 8
      %364 = vset.pattern.permute.xlu0 %v363
      %365 = vperm.xlu0 %364, %v354
      %v366 = vpop.permute.xlu0 %365
      %v367 = vperm.slane %v210, 4
      %v368 = vlaneseq
      %v369 = vshrl.u32 %v368, 7
      %371 = vset.pattern.permute.xlu0 %v369
      %372 = vperm.xlu0 %371, %v367
      %v373 = vpop.permute.xlu0 %372
      %v374 = vlaneseq
      %v375 = vshrl.u32 %v374, 7
      %v376 = vadd.s32 %v375, 8
      %377 = vset.pattern.permute.xlu0 %v376
      %378 = vperm.xlu0 %377, %v367
      %v379 = vpop.permute.xlu0 %378
      %v380 = vperm.slane %v210, 5
      %v381 = vlaneseq
      %v382 = vshrl.u32 %v381, 7
      %384 = vset.pattern.permute.xlu0 %v382
      %385 = vperm.xlu0 %384, %v380
      %v386 = vpop.permute.xlu0 %385
      %v387 = vlaneseq
      %v388 = vshrl.u32 %v387, 7
      %v389 = vadd.s32 %v388, 8
      %390 = vset.pattern.permute.xlu0 %v389
      %391 = vperm.xlu0 %390, %v380
      %v392 = vpop.permute.xlu0 %391
      %v393 = vperm.slane %v210, 6
      %v394 = vlaneseq
      %v395 = vshrl.u32 %v394, 7
      %397 = vset.pattern.permute.xlu0 %v395
      %398 = vperm.xlu0 %397, %v393
      %v399 = vpop.permute.xlu0 %398
      %v400 = vlaneseq
      %v401 = vshrl.u32 %v400, 7
      %v402 = vadd.s32 %v401, 8
      %403 = vset.pattern.permute.xlu0 %v402
      %404 = vperm.xlu0 %403, %v393
      %v405 = vpop.permute.xlu0 %404
      %v406 = vperm.slane %v210, 7
      %v407 = vlaneseq
      %v408 = vshrl.u32 %v407, 7
      %410 = vset.pattern.permute.xlu0 %v408
      %411 = vperm.xlu0 %410, %v406
      %v412 = vpop.permute.xlu0 %411
      %v413 = vlaneseq
      %v414 = vshrl.u32 %v413, 7
      %v415 = vadd.s32 %v414, 8
      %416 = vset.pattern.permute.xlu0 %v415
      %417 = vperm.xlu0 %416, %v406
      %v418 = vpop.permute.xlu0 %417
      %v419 = vmul.f32 %v217, %v23
      %v420 = vmul.f32 %v223, %v24
      %v421 = vmul.f32 %v230, %v25
      %v422 = vmul.f32 %v236, %v26
      %v423 = vmul.f32 %v243, %v27
      %v424 = vmul.f32 %v249, %v28
      %v425 = vmul.f32 %v256, %v29
      %v426 = vmul.f32 %v262, %v30
      %v427 = vmul.f32 %v269, %v31
      %v428 = vmul.f32 %v275, %v32
      %v429 = vmul.f32 %v282, %v33
      %v430 = vmul.f32 %v288, %v34
      %v431 = vmul.f32 %v295, %v35
      %v432 = vmul.f32 %v301, %v36
      %v433 = vmul.f32 %v308, %v37
      %v434 = vmul.f32 %v314, %v38
      %v435 = vmul.f32 %v321, %v39
      %v436 = vmul.f32 %v327, %v40
      %v437 = vmul.f32 %v334, %v41
      %v438 = vmul.f32 %v340, %v42
      %v439 = vmul.f32 %v347, %v43
      %v440 = vmul.f32 %v353, %v44
      %v441 = vmul.f32 %v360, %v45
      %v442 = vmul.f32 %v366, %v46
      %v443 = vmul.f32 %v373, %v47
      %v444 = vmul.f32 %v379, %v48
      %v445 = vmul.f32 %v386, %v49
      %v446 = vmul.f32 %v392, %v50
      %v447 = vmul.f32 %v399, %v51
      %v448 = vmul.f32 %v405, %v52
      %v449 = vmul.f32 %v412, %v53
      %v450 = vmul.f32 %v418, %v54
      %v451 = vadd.f32 %v419, %v420
      %v452 = vrot.slane %v451, 4
      %v453 = vadd.f32 %v451, %v452
      %v454 = vrot.slane %v453, 2
      %v455 = vadd.f32 %v453, %v454
      %v456 = vrot.slane %v455, 1
      %v457 = vadd.f32 %v455, %v456
      %v458 = vadd.f32 %v421, %v422
      %v459 = vrot.slane %v458, 4
      %v460 = vadd.f32 %v458, %v459
      %v461 = vrot.slane %v460, 2
      %v462 = vadd.f32 %v460, %v461
      %v463 = vrot.slane %v462, 1
      %v464 = vadd.f32 %v462, %v463
      %v465 = vadd.f32 %v423, %v424
      %v466 = vrot.slane %v465, 4
      %v467 = vadd.f32 %v465, %v466
      %v468 = vrot.slane %v467, 2
      %v469 = vadd.f32 %v467, %v468
      %v470 = vrot.slane %v469, 1
      %v471 = vadd.f32 %v469, %v470
      %v472 = vadd.f32 %v425, %v426
      %v473 = vrot.slane %v472, 4
      %v474 = vadd.f32 %v472, %v473
      %v475 = vrot.slane %v474, 2
      %v476 = vadd.f32 %v474, %v475
      %v477 = vrot.slane %v476, 1
      %v478 = vadd.f32 %v476, %v477
      %v479 = vadd.f32 %v427, %v428
      %v480 = vrot.slane %v479, 4
      %v481 = vadd.f32 %v479, %v480
      %v482 = vrot.slane %v481, 2
      %v483 = vadd.f32 %v481, %v482
      %v484 = vrot.slane %v483, 1
      %v485 = vadd.f32 %v483, %v484
      %v486 = vadd.f32 %v429, %v430
      %v487 = vrot.slane %v486, 4
      %v488 = vadd.f32 %v486, %v487
      %v489 = vrot.slane %v488, 2
      %v490 = vadd.f32 %v488, %v489
      %v491 = vrot.slane %v490, 1
      %v492 = vadd.f32 %v490, %v491
      %v493 = vadd.f32 %v431, %v432
      %v494 = vrot.slane %v493, 4
      %v495 = vadd.f32 %v493, %v494
      %v496 = vrot.slane %v495, 2
      %v497 = vadd.f32 %v495, %v496
      %v498 = vrot.slane %v497, 1
      %v499 = vadd.f32 %v497, %v498
      %v500 = vadd.f32 %v433, %v434
      %v501 = vrot.slane %v500, 4
      %v502 = vadd.f32 %v500, %v501
      %v503 = vrot.slane %v502, 2
      %v504 = vadd.f32 %v502, %v503
      %v505 = vrot.slane %v504, 1
      %v506 = vadd.f32 %v504, %v505
      %v507 = vadd.f32 %v435, %v436
      %v508 = vrot.slane %v507, 4
      %v509 = vadd.f32 %v507, %v508
      %v510 = vrot.slane %v509, 2
      %v511 = vadd.f32 %v509, %v510
      %v512 = vrot.slane %v511, 1
      %v513 = vadd.f32 %v511, %v512
      %v514 = vadd.f32 %v437, %v438
      %v515 = vrot.slane %v514, 4
      %v516 = vadd.f32 %v514, %v515
      %v517 = vrot.slane %v516, 2
      %v518 = vadd.f32 %v516, %v517
      %v519 = vrot.slane %v518, 1
      %v520 = vadd.f32 %v518, %v519
      %v521 = vadd.f32 %v439, %v440
      %v522 = vrot.slane %v521, 4
      %v523 = vadd.f32 %v521, %v522
      %v524 = vrot.slane %v523, 2
      %v525 = vadd.f32 %v523, %v524
      %v526 = vrot.slane %v525, 1
      %v527 = vadd.f32 %v525, %v526
      %v528 = vadd.f32 %v441, %v442
      %v529 = vrot.slane %v528, 4
      %v530 = vadd.f32 %v528, %v529
      %v531 = vrot.slane %v530, 2
      %v532 = vadd.f32 %v530, %v531
      %v533 = vrot.slane %v532, 1
      %v534 = vadd.f32 %v532, %v533
      %v535 = vadd.f32 %v443, %v444
      %v536 = vrot.slane %v535, 4
      %v537 = vadd.f32 %v535, %v536
      %v538 = vrot.slane %v537, 2
      %v539 = vadd.f32 %v537, %v538
      %v540 = vrot.slane %v539, 1
      %v541 = vadd.f32 %v539, %v540
      %v542 = vadd.f32 %v445, %v446
      %v543 = vrot.slane %v542, 4
      %v544 = vadd.f32 %v542, %v543
      %v545 = vrot.slane %v544, 2
      %v546 = vadd.f32 %v544, %v545
      %v547 = vrot.slane %v546, 1
      %v548 = vadd.f32 %v546, %v547
      %v549 = vadd.f32 %v447, %v448
      %v550 = vrot.slane %v549, 4
      %v551 = vadd.f32 %v549, %v550
      %v552 = vrot.slane %v551, 2
      %v553 = vadd.f32 %v551, %v552
      %v554 = vrot.slane %v553, 1
      %v555 = vadd.f32 %v553, %v554
      %v556 = vadd.f32 %v449, %v450
      %v557 = vrot.slane %v556, 4
      %v558 = vadd.f32 %v556, %v557
      %v559 = vrot.slane %v558, 2
      %v560 = vadd.f32 %v558, %v559
      %v561 = vrot.slane %v560, 1
      %v562 = vadd.f32 %v560, %v561
      %v563 = vsel %vm115, 1.0, 0.0
      %564 = vadd.xlane.f32.xlu0 %v563
      %v565 = vpop.xlane.xlu0 %564
      %v566 = vrcp.pop %v565
      %v567 = vmul.f32 %v565, %v566
      %v568 = vsub.f32 1.0, %v567
      %v569 = vmul.f32 %v566, %v568
      %v570 = vadd.f32 %v566, %v569
      %vm571 = vweird.f32 %v565
      %vm572 = vweird.f32 %v566
      %vm573 = vmor %vm571, %vm572
      %v574 = vsel %vm573, %v566, %v570
      %v575 = vand.u32 2147483647, %v565
      %vm576 = vcmp.eq.f32.partialorder %v575, 8.507059e+37
      %v577 = vand.u32 %v565, 2147483648
      %v578 = vor.u32 1.1754944e-38, %v577
      %v579 = vsel %vm576, %v578, %v574
      %v580 = vmul.f32 1.0, %v579
      %v582 = vsel %vm115, %v580, 0
      %584 = vmatpush.msra.mxu0 0.0
      %585 = vmatpush.msra.mxu0 0.0
      %586 = vmatpush.msra.mxu0 0.0
      %587 = vmatpush.msra.mxu0 0.0
      %588 = vmatpush.msra.mxu0 0.0
      %589 = vmatpush.msra.mxu0 0.0
      %590 = vmatpush.msra.mxu0 0.0
      %591 = vmatpush.msra.mxu0 0.0
      %592 = vmatpush.msra.mxu0 0.0
      %593 = vmatpush.msra.mxu0 0.0
      %594 = vmatpush.msra.mxu0 0.0
      %595 = vmatpush.msra.mxu0 0.0
      %596 = vmatpush.msra.mxu0 0.0
      %597 = vmatpush.msra.mxu0 0.0
      %598 = vmatpush.msra.mxu0 0.0
      %599 = vmatpush.msra.mxu0 %v55
      %600 = vmatmul.f32.gmra.mxu0 %v582
      %v601 = vpop.f32.mrf.mxu0
      %v602 = vadd.f32 0.0, %v601
      %603 = vmatmul.f32.gmra.mxu0 %v582
      %v604 = vpop.f32.mrf.mxu0
      %v605 = vadd.f32 0.0, %v604
      %606 = vdwg.mxu0
      %vm623 = vcmask 1041409
      %v624 = vsel %vm623, %v464, %v457
      %vm625 = vcmask 1042434
      %v626 = vsel %vm625, %v471, %v624
      %vm627 = vcmask 1043459
      %v628 = vsel %vm627, %v478, %v626
      %vm629 = vcmask 1044484
      %v630 = vsel %vm629, %v485, %v628
      %vm631 = vcmask 1045509
      %v632 = vsel %vm631, %v492, %v630
      %vm633 = vcmask 1046534
      %v634 = vsel %vm633, %v499, %v632
      %vm635 = vcmask 1047559
      %v636 = vsel %vm635, %v506, %v634
      %v637 = vsel %vm623, %v520, %v513
      %v638 = vsel %vm625, %v527, %v637
      %v639 = vsel %vm627, %v534, %v638
      %v640 = vsel %vm629, %v541, %v639
      %v641 = vsel %vm631, %v548, %v640
      %v642 = vsel %vm633, %v555, %v641
      %v643 = vsel %vm635, %v562, %v642
      %v646 = vmul.f32 %v602, %v636
      %v647 = vmul.f32 %v605, %v643
      %v648 = vadd.f32 %v646, %v647
      %v649 = vrot.slane %v648, 4
      %v650 = vadd.f32 %v648, %v649
      %v651 = vrot.slane %v650, 2
      %v652 = vadd.f32 %v650, %v651
      %v653 = vrot.slane %v652, 1
      %v654 = vadd.f32 %v652, %v653
      %v655 = vmul.f32 %v654, %v654
      %656 = vmatpush.msra.mxu0 %v71
      %657 = vmatpush.msra.mxu0 %v70
      %658 = vmatpush.msra.mxu0 %v69
      %659 = vmatpush.msra.mxu0 %v68
      %660 = vmatpush.msra.mxu0 %v67
      %661 = vmatpush.msra.mxu0 %v66
      %662 = vmatpush.msra.mxu0 %v65
      %663 = vmatpush.msra.mxu0 %v64
      %664 = vmatpush.msra.mxu0 %v63
      %665 = vmatpush.msra.mxu0 %v62
      %666 = vmatpush.msra.mxu0 %v61
      %667 = vmatpush.msra.mxu0 %v60
      %668 = vmatpush.msra.mxu0 %v59
      %669 = vmatpush.msra.mxu0 %v58
      %670 = vmatpush.msra.mxu0 %v57
      %671 = vmatpush.msra.mxu0 %v56
      %672 = vmatmul.f32.gmra.mxu0 %v655
      %v673 = vpop.f32.mrf.mxu0
      %v674 = vadd.f32 0.0, %v673
      %675 = vdwg.mxu0
      %v676 = vadd.f32 %v674, 1.0
      %v677 = vrcp.pop %v676
      %v678 = vmul.f32 %v676, %v677
      %v679 = vsub.f32 1.0, %v678
      %v680 = vmul.f32 %v677, %v679
      %v681 = vadd.f32 %v677, %v680
      %vm682 = vweird.f32 %v676
      %vm683 = vweird.f32 %v677
      %vm684 = vmor %vm682, %vm683
      %v685 = vsel %vm684, %v677, %v681
      %v686 = vand.u32 2147483647, %v676
      %vm687 = vcmp.eq.f32.partialorder %v686, 8.507059e+37
      %v688 = vand.u32 %v676, 2147483648
      %v689 = vor.u32 1.1754944e-38, %v688
      %v690 = vsel %vm687, %v689, %v685
      %v691 = vmul.f32 %v674, %v690
      %v692 = vadd.f32 %v674, 1e-08
      %v693 = vrsqrt.pop %v692
      %v694 = vmul.f32 %v693, %v692
      %v695 = vmul.f32 %v694, %v693
      %v696 = vmul.f32 0.5, %v695
      %v697 = vsub.f32 1.5, %v696
      %v698 = vmul.f32 %v693, %v697
      %vm699 = vweird.f32 %v692
      %vm700 = vweird.f32 %v693
      %vm701 = vmor %vm699, %vm700
      %v702 = vsel %vm701, %v693, %v698
      %v703 = vmul.f32 %v691, %v702
      %v705 = vsel %vm115, %v703, 0
      %707 = vmatpush.msra.mxu0 0.0
      %708 = vmatpush.msra.mxu0 0.0
      %709 = vmatpush.msra.mxu0 0.0
      %710 = vmatpush.msra.mxu0 0.0
      %711 = vmatpush.msra.mxu0 0.0
      %712 = vmatpush.msra.mxu0 0.0
      %713 = vmatpush.msra.mxu0 0.0
      %714 = vmatpush.msra.mxu0 0.0
      %715 = vmatpush.msra.mxu0 0.0
      %716 = vmatpush.msra.mxu0 0.0
      %717 = vmatpush.msra.mxu0 0.0
      %718 = vmatpush.msra.mxu0 0.0
      %719 = vmatpush.msra.mxu0 0.0
      %720 = vmatpush.msra.mxu0 0.0
      %721 = vmatpush.msra.mxu0 0.0
      %722 = vmatpush.msra.mxu0 %v55
      %723 = vmatmul.f32.gmra.mxu0 %v705
      %v724 = vpop.f32.mrf.mxu0
      %v725 = vadd.f32 0.0, %v724
      %726 = vdwg.mxu0
      %v727 = vmul.f32 %v654, %v725
      %v728 = vperm.slane %v727, 0
      %v729 = vmul.f32 %v457, %v728
      %v730 = vmul.f32 %v464, %v728
      %v731 = vmul.f32 %v471, %v728
      %v732 = vmul.f32 %v478, %v728
      %v733 = vmul.f32 %v485, %v728
      %v734 = vmul.f32 %v492, %v728
      %v735 = vmul.f32 %v499, %v728
      %v736 = vmul.f32 %v506, %v728
      %v737 = vmul.f32 %v513, %v728
      %v738 = vmul.f32 %v520, %v728
      %v739 = vmul.f32 %v527, %v728
      %v740 = vmul.f32 %v534, %v728
      %v741 = vmul.f32 %v541, %v728
      %v742 = vmul.f32 %v548, %v728
      %v743 = vmul.f32 %v555, %v728
      %v744 = vmul.f32 %v562, %v728
      %v761 = vrot.slane %v730, 7
      %v762 = vsel %vm623, %v761, %v729
      %v763 = vrot.slane %v731, 6
      %v764 = vsel %vm625, %v763, %v762
      %v765 = vrot.slane %v732, 5
      %v766 = vsel %vm627, %v765, %v764
      %v767 = vrot.slane %v733, 4
      %v768 = vsel %vm629, %v767, %v766
      %v769 = vrot.slane %v734, 3
      %v770 = vsel %vm631, %v769, %v768
      %v771 = vrot.slane %v735, 2
      %v772 = vsel %vm633, %v771, %v770
      %v773 = vrot.slane %v736, 1
      %v774 = vsel %vm635, %v773, %v772
      %v775 = vrot.slane %v738, 7
      %v776 = vsel %vm623, %v775, %v737
      %v777 = vrot.slane %v739, 6
      %v778 = vsel %vm625, %v777, %v776
      %v779 = vrot.slane %v740, 5
      %v780 = vsel %vm627, %v779, %v778
      %v781 = vrot.slane %v741, 4
      %v782 = vsel %vm629, %v781, %v780
      %v783 = vrot.slane %v742, 3
      %v784 = vsel %vm631, %v783, %v782
      %v785 = vrot.slane %v743, 2
      %v786 = vsel %vm633, %v785, %v784
      %v787 = vrot.slane %v744, 1
      %v788 = vsel %vm635, %v787, %v786
      %791 = vmatpush.msra.mxu0 %v71
      %792 = vmatpush.msra.mxu0 %v70
      %793 = vmatpush.msra.mxu0 %v69
      %794 = vmatpush.msra.mxu0 %v68
      %795 = vmatpush.msra.mxu0 %v67
      %796 = vmatpush.msra.mxu0 %v66
      %797 = vmatpush.msra.mxu0 %v65
      %798 = vmatpush.msra.mxu0 %v64
      %799 = vmatpush.msra.mxu0 %v63
      %800 = vmatpush.msra.mxu0 %v62
      %801 = vmatpush.msra.mxu0 %v61
      %802 = vmatpush.msra.mxu0 %v60
      %803 = vmatpush.msra.mxu0 %v59
      %804 = vmatpush.msra.mxu0 %v58
      %805 = vmatpush.msra.mxu0 %v57
      %806 = vmatpush.msra.mxu0 %v56
      %807 = vmatmul.f32.gmra.mxu0 %v774
      %v808 = vpop.f32.mrf.mxu0
      %v809 = vadd.f32 0.0, %v808
      %810 = vmatmul.f32.gmra.mxu0 %v788
      %v811 = vpop.f32.mrf.mxu0
      %v812 = vadd.f32 0.0, %v811
      %813 = vdwg.mxu0
      %v814 = vsel %vm115, %v809, -inf
      %815 = vmax.xlane.f32.xlu0 %v814
      %v816 = vpop.xlane.xlu0 %815
      %v817 = vsel %vm115, %v812, -inf
      %818 = vmax.xlane.f32.xlu0 %v817
      %v819 = vpop.xlane.xlu0 %818
      %v820 = vsub.f32 %v809, %v816
      %v821 = vsub.f32 %v812, %v819
      %v822 = vmul.f32 %v820, 1.442695
      %v823 = vpow.pop %v822
      %v824 = vmul.f32 %v821, 1.442695
      %v825 = vpow.pop %v824
      %v826 = vsel %vm115, %v823, 0.0
      %827 = vadd.xlane.f32.xlu0 %v826
      %v828 = vpop.xlane.xlu0 %827
      %v829 = vsel %vm115, %v825, 0.0
      %830 = vadd.xlane.f32.xlu0 %v829
      %v831 = vpop.xlane.xlu0 %830
      %v832 = vrcp.pop %v828
      %v833 = vmul.f32 %v828, %v832
      %v834 = vsub.f32 1.0, %v833
      %v835 = vmul.f32 %v832, %v834
      %v836 = vadd.f32 %v832, %v835
      %vm837 = vweird.f32 %v828
      %vm838 = vweird.f32 %v832
      %vm839 = vmor %vm837, %vm838
      %v840 = vsel %vm839, %v832, %v836
      %v841 = vand.u32 2147483647, %v828
      %vm842 = vcmp.eq.f32.partialorder %v841, 8.507059e+37
      %v843 = vand.u32 %v828, 2147483648
      %v844 = vor.u32 1.1754944e-38, %v843
      %v845 = vsel %vm842, %v844, %v840
      %v846 = vmul.f32 %v823, %v845
      %v847 = vrcp.pop %v831
      %v848 = vmul.f32 %v831, %v847
      %v849 = vsub.f32 1.0, %v848
      %v850 = vmul.f32 %v847, %v849
      %v851 = vadd.f32 %v847, %v850
      %vm852 = vweird.f32 %v831
      %vm853 = vweird.f32 %v847
      %vm854 = vmor %vm852, %vm853
      %v855 = vsel %vm854, %v847, %v851
      %v856 = vand.u32 2147483647, %v831
      %vm857 = vcmp.eq.f32.partialorder %v856, 8.507059e+37
      %v858 = vand.u32 %v831, 2147483648
      %v859 = vor.u32 1.1754944e-38, %v858
      %v860 = vsel %vm857, %v859, %v855
      %v861 = vmul.f32 %v825, %v860
      %v863 = vsel %vm115, %v846, 0
      %v866 = vsel %vm115, %v861, 0
      %868 = vmatpush.msra.mxu0 0.0
      %869 = vmatpush.msra.mxu0 0.0
      %870 = vmatpush.msra.mxu0 0.0
      %871 = vmatpush.msra.mxu0 0.0
      %872 = vmatpush.msra.mxu0 0.0
      %873 = vmatpush.msra.mxu0 0.0
      %874 = vmatpush.msra.mxu0 0.0
      %875 = vmatpush.msra.mxu0 0.0
      %876 = vmatpush.msra.mxu0 0.0
      %877 = vmatpush.msra.mxu0 0.0
      %878 = vmatpush.msra.mxu0 0.0
      %879 = vmatpush.msra.mxu0 0.0
      %880 = vmatpush.msra.mxu0 0.0
      %881 = vmatpush.msra.mxu0 0.0
      %882 = vmatpush.msra.mxu0 0.0
      %883 = vmatpush.msra.mxu0 %v55
      %884 = vmatmul.f32.gmra.mxu0 %v863
      %v885 = vpop.f32.mrf.mxu0
      %v886 = vadd.f32 0.0, %v885
      %887 = vmatmul.f32.gmra.mxu0 %v866
      %v888 = vpop.f32.mrf.mxu0
      %v889 = vadd.f32 0.0, %v888
      %890 = vdwg.mxu0
      %v891 = vmul.f32 %v886, %v636
      %v892 = vmul.f32 %v889, %v643
      %v893 = vadd.f32 %v891, %v892
      %v894 = vrot.slane %v893, 4
      %v895 = vadd.f32 %v893, %v894
      %v896 = vrot.slane %v895, 2
      %v897 = vadd.f32 %v895, %v896
      %v898 = vrot.slane %v897, 1
      %v899 = vadd.f32 %v897, %v898
      %v900 = vmul.f32 %v899, %v899
      %901 = vmatpush.msra.mxu0 %v71
      %902 = vmatpush.msra.mxu0 %v70
      %903 = vmatpush.msra.mxu0 %v69
      %904 = vmatpush.msra.mxu0 %v68
      %905 = vmatpush.msra.mxu0 %v67
      %906 = vmatpush.msra.mxu0 %v66
      %907 = vmatpush.msra.mxu0 %v65
      %908 = vmatpush.msra.mxu0 %v64
      %909 = vmatpush.msra.mxu0 %v63
      %910 = vmatpush.msra.mxu0 %v62
      %911 = vmatpush.msra.mxu0 %v61
      %912 = vmatpush.msra.mxu0 %v60
      %913 = vmatpush.msra.mxu0 %v59
      %914 = vmatpush.msra.mxu0 %v58
      %915 = vmatpush.msra.mxu0 %v57
      %916 = vmatpush.msra.mxu0 %v56
      %917 = vmatmul.f32.gmra.mxu0 %v900
      %v918 = vpop.f32.mrf.mxu0
      %v919 = vadd.f32 0.0, %v918
      %920 = vdwg.mxu0
      %v921 = vadd.f32 %v919, 1.0
      %v922 = vrcp.pop %v921
      %v923 = vmul.f32 %v921, %v922
      %v924 = vsub.f32 1.0, %v923
      %v925 = vmul.f32 %v922, %v924
      %v926 = vadd.f32 %v922, %v925
      %vm927 = vweird.f32 %v921
      %vm928 = vweird.f32 %v922
      %vm929 = vmor %vm927, %vm928
      %v930 = vsel %vm929, %v922, %v926
      %v931 = vand.u32 2147483647, %v921
      %vm932 = vcmp.eq.f32.partialorder %v931, 8.507059e+37
      %v933 = vand.u32 %v921, 2147483648
      %v934 = vor.u32 1.1754944e-38, %v933
      %v935 = vsel %vm932, %v934, %v930
      %v936 = vmul.f32 %v919, %v935
      %v937 = vadd.f32 %v919, 1e-08
      %v938 = vrsqrt.pop %v937
      %v939 = vmul.f32 %v938, %v937
      %v940 = vmul.f32 %v939, %v938
      %v941 = vmul.f32 0.5, %v940
      %v942 = vsub.f32 1.5, %v941
      %v943 = vmul.f32 %v938, %v942
      %vm944 = vweird.f32 %v937
      %vm945 = vweird.f32 %v938
      %vm946 = vmor %vm944, %vm945
      %v947 = vsel %vm946, %v938, %v943
      %v948 = vmul.f32 %v936, %v947
      %v950 = vsel %vm115, %v948, 0
      %952 = vmatpush.msra.mxu0 0.0
      %953 = vmatpush.msra.mxu0 0.0
      %954 = vmatpush.msra.mxu0 0.0
      %955 = vmatpush.msra.mxu0 0.0
      %956 = vmatpush.msra.mxu0 0.0
      %957 = vmatpush.msra.mxu0 0.0
      %958 = vmatpush.msra.mxu0 0.0
      %959 = vmatpush.msra.mxu0 0.0
      %960 = vmatpush.msra.mxu0 0.0
      %961 = vmatpush.msra.mxu0 0.0
      %962 = vmatpush.msra.mxu0 0.0
      %963 = vmatpush.msra.mxu0 0.0
      %964 = vmatpush.msra.mxu0 0.0
      %965 = vmatpush.msra.mxu0 0.0
      %966 = vmatpush.msra.mxu0 0.0
      %967 = vmatpush.msra.mxu0 %v55
      %968 = vmatmul.f32.gmra.mxu0 %v950
      %v969 = vpop.f32.mrf.mxu0
      %v970 = vadd.f32 0.0, %v969
      %971 = vdwg.mxu0
      %v972 = vmul.f32 %v899, %v970
      %v973 = vperm.slane %v972, 0
      %v974 = vmul.f32 %v457, %v973
      %v975 = vmul.f32 %v464, %v973
      %v976 = vmul.f32 %v471, %v973
      %v977 = vmul.f32 %v478, %v973
      %v978 = vmul.f32 %v485, %v973
      %v979 = vmul.f32 %v492, %v973
      %v980 = vmul.f32 %v499, %v973
      %v981 = vmul.f32 %v506, %v973
      %v982 = vmul.f32 %v513, %v973
      %v983 = vmul.f32 %v520, %v973
      %v984 = vmul.f32 %v527, %v973
      %v985 = vmul.f32 %v534, %v973
      %v986 = vmul.f32 %v541, %v973
      %v987 = vmul.f32 %v548, %v973
      %v988 = vmul.f32 %v555, %v973
      %v989 = vmul.f32 %v562, %v973
      %v1006 = vrot.slane %v975, 7
      %v1007 = vsel %vm623, %v1006, %v974
      %v1008 = vrot.slane %v976, 6
      %v1009 = vsel %vm625, %v1008, %v1007
      %v1010 = vrot.slane %v977, 5
      %v1011 = vsel %vm627, %v1010, %v1009
      %v1012 = vrot.slane %v978, 4
      %v1013 = vsel %vm629, %v1012, %v1011
      %v1014 = vrot.slane %v979, 3
      %v1015 = vsel %vm631, %v1014, %v1013
      %v1016 = vrot.slane %v980, 2
      %v1017 = vsel %vm633, %v1016, %v1015
      %v1018 = vrot.slane %v981, 1
      %v1019 = vsel %vm635, %v1018, %v1017
      %v1020 = vrot.slane %v983, 7
      %v1021 = vsel %vm623, %v1020, %v982
      %v1022 = vrot.slane %v984, 6
      %v1023 = vsel %vm625, %v1022, %v1021
      %v1024 = vrot.slane %v985, 5
      %v1025 = vsel %vm627, %v1024, %v1023
      %v1026 = vrot.slane %v986, 4
      %v1027 = vsel %vm629, %v1026, %v1025
      %v1028 = vrot.slane %v987, 3
      %v1029 = vsel %vm631, %v1028, %v1027
      %v1030 = vrot.slane %v988, 2
      %v1031 = vsel %vm633, %v1030, %v1029
      %v1032 = vrot.slane %v989, 1
      %v1033 = vsel %vm635, %v1032, %v1031
      %1036 = vmatpush.msra.mxu0 %v71
      %1037 = vmatpush.msra.mxu0 %v70
      %1038 = vmatpush.msra.mxu0 %v69
      %1039 = vmatpush.msra.mxu0 %v68
      %1040 = vmatpush.msra.mxu0 %v67
      %1041 = vmatpush.msra.mxu0 %v66
      %1042 = vmatpush.msra.mxu0 %v65
      %1043 = vmatpush.msra.mxu0 %v64
      %1044 = vmatpush.msra.mxu0 %v63
      %1045 = vmatpush.msra.mxu0 %v62
      %1046 = vmatpush.msra.mxu0 %v61
      %1047 = vmatpush.msra.mxu0 %v60
      %1048 = vmatpush.msra.mxu0 %v59
      %1049 = vmatpush.msra.mxu0 %v58
      %1050 = vmatpush.msra.mxu0 %v57
      %1051 = vmatpush.msra.mxu0 %v56
      %1052 = vmatmul.f32.gmra.mxu0 %v1019
      %v1053 = vpop.f32.mrf.mxu0
      %v1054 = vadd.f32 0.0, %v1053
      %1055 = vmatmul.f32.gmra.mxu0 %v1033
      %v1056 = vpop.f32.mrf.mxu0
      %v1057 = vadd.f32 0.0, %v1056
      %1058 = vdwg.mxu0
      %v1059 = vadd.f32 %v809, %v1054
      %v1060 = vadd.f32 %v812, %v1057
      %v1061 = vsel %vm115, %v1059, -inf
      %1062 = vmax.xlane.f32.xlu0 %v1061
      %v1063 = vpop.xlane.xlu0 %1062
      %v1064 = vsel %vm115, %v1060, -inf
      %1065 = vmax.xlane.f32.xlu0 %v1064
      %v1066 = vpop.xlane.xlu0 %1065
      %v1067 = vsub.f32 %v1059, %v1063
      %v1068 = vsub.f32 %v1060, %v1066
      %v1069 = vmul.f32 %v1067, 1.442695
      %v1070 = vpow.pop %v1069
      %v1071 = vmul.f32 %v1068, 1.442695
      %v1072 = vpow.pop %v1071
      %v1073 = vsel %vm115, %v1070, 0.0
      %1074 = vadd.xlane.f32.xlu0 %v1073
      %v1075 = vpop.xlane.xlu0 %1074
      %v1076 = vsel %vm115, %v1072, 0.0
      %1077 = vadd.xlane.f32.xlu0 %v1076
      %v1078 = vpop.xlane.xlu0 %1077
      %v1079 = vrcp.pop %v1075
      %v1080 = vmul.f32 %v1075, %v1079
      %v1081 = vsub.f32 1.0, %v1080
      %v1082 = vmul.f32 %v1079, %v1081
      %v1083 = vadd.f32 %v1079, %v1082
      %vm1084 = vweird.f32 %v1075
      %vm1085 = vweird.f32 %v1079
      %vm1086 = vmor %vm1084, %vm1085
      %v1087 = vsel %vm1086, %v1079, %v1083
      %v1088 = vand.u32 2147483647, %v1075
      %vm1089 = vcmp.eq.f32.partialorder %v1088, 8.507059e+37
      %v1090 = vand.u32 %v1075, 2147483648
      %v1091 = vor.u32 1.1754944e-38, %v1090
      %v1092 = vsel %vm1089, %v1091, %v1087
      %v1093 = vmul.f32 %v1070, %v1092
      %v1094 = vrcp.pop %v1078
      %v1095 = vmul.f32 %v1078, %v1094
      %v1096 = vsub.f32 1.0, %v1095
      %v1097 = vmul.f32 %v1094, %v1096
      %v1098 = vadd.f32 %v1094, %v1097
      %vm1099 = vweird.f32 %v1078
      %vm1100 = vweird.f32 %v1094
      %vm1101 = vmor %vm1099, %vm1100
      %v1102 = vsel %vm1101, %v1094, %v1098
      %v1103 = vand.u32 2147483647, %v1078
      %vm1104 = vcmp.eq.f32.partialorder %v1103, 8.507059e+37
      %v1105 = vand.u32 %v1078, 2147483648
      %v1106 = vor.u32 1.1754944e-38, %v1105
      %v1107 = vsel %vm1104, %v1106, %v1102
      %v1108 = vmul.f32 %v1072, %v1107
      %v1110 = vsel %vm115, %v1093, 0
      %v1113 = vsel %vm115, %v1108, 0
      %1115 = vmatpush.msra.mxu0 0.0
      %1116 = vmatpush.msra.mxu0 0.0
      %1117 = vmatpush.msra.mxu0 0.0
      %1118 = vmatpush.msra.mxu0 0.0
      %1119 = vmatpush.msra.mxu0 0.0
      %1120 = vmatpush.msra.mxu0 0.0
      %1121 = vmatpush.msra.mxu0 0.0
      %1122 = vmatpush.msra.mxu0 0.0
      %1123 = vmatpush.msra.mxu0 0.0
      %1124 = vmatpush.msra.mxu0 0.0
      %1125 = vmatpush.msra.mxu0 0.0
      %1126 = vmatpush.msra.mxu0 0.0
      %1127 = vmatpush.msra.mxu0 0.0
      %1128 = vmatpush.msra.mxu0 0.0
      %1129 = vmatpush.msra.mxu0 0.0
      %1130 = vmatpush.msra.mxu0 %v55
      %1131 = vmatmul.f32.gmra.mxu0 %v1110
      %v1132 = vpop.f32.mrf.mxu0
      %v1133 = vadd.f32 0.0, %v1132
      %1134 = vmatmul.f32.gmra.mxu0 %v1113
      %v1135 = vpop.f32.mrf.mxu0
      %v1136 = vadd.f32 0.0, %v1135
      %1137 = vdwg.mxu0
      %v1138 = vmul.f32 %v1133, %v636
      %v1139 = vmul.f32 %v1136, %v643
      %v1140 = vadd.f32 %v1138, %v1139
      %v1141 = vrot.slane %v1140, 4
      %v1142 = vadd.f32 %v1140, %v1141
      %v1143 = vrot.slane %v1142, 2
      %v1144 = vadd.f32 %v1142, %v1143
      %v1145 = vrot.slane %v1144, 1
      %v1146 = vadd.f32 %v1144, %v1145
      %v1147 = vmul.f32 %v1146, %v1146
      %1148 = vmatpush.msra.mxu0 %v71
      %1149 = vmatpush.msra.mxu0 %v70
      %1150 = vmatpush.msra.mxu0 %v69
      %1151 = vmatpush.msra.mxu0 %v68
      %1152 = vmatpush.msra.mxu0 %v67
      %1153 = vmatpush.msra.mxu0 %v66
      %1154 = vmatpush.msra.mxu0 %v65
      %1155 = vmatpush.msra.mxu0 %v64
      %1156 = vmatpush.msra.mxu0 %v63
      %1157 = vmatpush.msra.mxu0 %v62
      %1158 = vmatpush.msra.mxu0 %v61
      %1159 = vmatpush.msra.mxu0 %v60
      %1160 = vmatpush.msra.mxu0 %v59
      %1161 = vmatpush.msra.mxu0 %v58
      %1162 = vmatpush.msra.mxu0 %v57
      %1163 = vmatpush.msra.mxu0 %v56
      %1164 = vmatmul.f32.gmra.mxu0 %v1147
      %v1165 = vpop.f32.mrf.mxu0
      %v1166 = vadd.f32 0.0, %v1165
      %1167 = vdwg.mxu0
      %v1168 = vadd.f32 %v1166, 1.0
      %v1169 = vrcp.pop %v1168
      %v1170 = vmul.f32 %v1168, %v1169
      %v1171 = vsub.f32 1.0, %v1170
      %v1172 = vmul.f32 %v1169, %v1171
      %v1173 = vadd.f32 %v1169, %v1172
      %vm1174 = vweird.f32 %v1168
      %vm1175 = vweird.f32 %v1169
      %vm1176 = vmor %vm1174, %vm1175
      %v1177 = vsel %vm1176, %v1169, %v1173
      %v1178 = vand.u32 2147483647, %v1168
      %vm1179 = vcmp.eq.f32.partialorder %v1178, 8.507059e+37
      %v1180 = vand.u32 %v1168, 2147483648
      %v1181 = vor.u32 1.1754944e-38, %v1180
      %v1182 = vsel %vm1179, %v1181, %v1177
      %v1183 = vmul.f32 %v1166, %v1182
      %s1184 = scalar_lea.vmem [#allocation2], %s73
      %vm1185 = vcmask 57344
      %1186 = vst.msk [vmem:[%s1184] sm:$0x1] %vm1185, %v1183
    $region26: #{hcapsnet_forward.15} parent=1 // loop_footer
      %s77 = sadd.s32 1, %s73
    $region27: #{hcapsnet_forward.15} parent=1 // loop_footer_branch
      %72 = sbr.rel target = $region23
    $region28: #{hcapsnet_forward.15} parent=1 // loop_exit
      _
    // Predicated region
    $region29: #{hcapsnet_forward.15} parent=1 // pred_check
      _
    $region30: #{hcapsnet_forward.15} parent=1 // pred_check_branch
      %1188 = sbr.rel (0) target = $region32
    $region31: #{hcapsnet_forward.15} parent=1 // pred_region
      %1190 = vsyncadd [#allocation3], 0
      %s1191 = sshll.u32 [#allocation2], 4
      %s1192 = int_to_ptr.vmem [resolvable:$true] %s1191
      %s1193 = sshll.u32 %s5, 4
      %s1194 = int_to_ptr.hbm [resolvable:$true] %s1193
      %1199 = dma.vmem_to_hbm [thread:$0]  %s1192, 32, %s1194, [#allocation3], 16, 16, 1
    $region32: #{hcapsnet_forward.15} parent=1 // pred_fallthru
      _
    // Predicated region
    $region33: #{hcapsnet_forward.15} parent=1 // pred_check
      _
    $region34: #{hcapsnet_forward.15} parent=1 // pred_check_branch
      %1201 = sbr.rel (0) target = $region36
    $region35: #{hcapsnet_forward.15} parent=1 // pred_region
      %1203 = dma.done [#allocation3], 32
    $region36: #{hcapsnet_forward.15} parent=1 // pred_fallthru
      _
    %1204 = vsyncpa [#allocation3], 1

</llo_original>
